<compile_context>
chip_gen: v5e
topology: v5e:2x2
jax: 0.10.0
libtpu: 0.0.40
codegen_flags: <defaults>
</compile_context>

<pallas_src>
import functools

import jax
import jax.numpy as jnp
import numpy as np
from jax.experimental import pallas as pl
from jax.experimental.pallas import tpu as pltpu


# ----------------------------- fused kernel --------------------------------

def _net_kernel(bt,
                x_ref,                       # (bt, 28, 28)  input images (C=1)
                b1e_ref, b1o_ref, c1b_ref,   # (5,28,120) x2, (1,120)
                b2e_ref, b2o_ref, c2b_ref,   # (5,120,80) x2, (1,80)
                fw1_ref, fb1_ref,            # (4,80,50), (1,50)
                fw2_ref, fb2_ref,            # (50,10),  (1,10)
                o_ref,                       # (bt, 10)
                c1_ref, h1_ref, c2_ref, h2_ref):
    f32 = jnp.float32

    # ---- conv1 (1->10, k=5): 5 banded MXU matmuls per output-column parity.
    # rows = (b, oh) ; lanes of the accumulator = (pooled_ow, c_out) = 12*10.
    acc_e = jnp.zeros((bt * 24, 120), f32)
    acc_o = jnp.zeros((bt * 24, 120), f32)
    for kh in range(5):
        xs = x_ref[:, kh:kh + 24, :].reshape(bt * 24, 28)
        acc_e = acc_e + jnp.dot(xs, b1e_ref[kh], preferred_element_type=f32)
        acc_o = acc_o + jnp.dot(xs, b1o_ref[kh], preferred_element_type=f32)
    # 2x2 max-pool: W direction = parity max, H direction = stride-2 row max.
    c1_ref[...] = jnp.maximum(acc_e, acc_o)                      # (bt*24, 120)
    pooled1 = jnp.maximum(c1_ref[pl.ds(0, bt * 12, 2), :],
                          c1_ref[pl.ds(1, bt * 12, 2), :])       # (bt*12, 120)
    h1 = jnp.maximum(pooled1 + c1b_ref[...], 0.0)                # relu(pool+bias)
    for b in range(bt):                                          # -> (bt, 12, 120)
        h1_ref[b] = h1[b * 12:(b + 1) * 12, :]

    # ---- conv2 (10->20, k=5), same banded-matmul + fused-pool trick.
    # TODO(synk): nn.Dropout2d / F.dropout are identity in eval mode; training-mode
    #             random masks are not modeled.
    acc2_e = jnp.zeros((bt * 8, 80), f32)
    acc2_o = jnp.zeros((bt * 8, 80), f32)
    for kh in range(5):
        hs = h1_ref[:, kh:kh + 8, :].reshape(bt * 8, 120)        # rows = (b, oh2)
        acc2_e = acc2_e + jnp.dot(hs, b2e_ref[kh], preferred_element_type=f32)
        acc2_o = acc2_o + jnp.dot(hs, b2o_ref[kh], preferred_element_type=f32)
    c2_ref[...] = jnp.maximum(acc2_e, acc2_o)                    # (bt*8, 80)
    pooled2 = jnp.maximum(c2_ref[pl.ds(0, bt * 4, 2), :],
                          c2_ref[pl.ds(1, bt * 4, 2), :])        # (bt*4, 80)
    h2_ref[...] = jnp.maximum(pooled2 + c2b_ref[...], 0.0)       # rows = (b, ph2)

    # ---- fc1(320->50) + relu + fc2(50->10); the flatten is handled by the
    # 4 pooled-row slabs (weight rows were pre-permuted to this layout).
    acc_fc = jnp.zeros((bt, 50), f32) + fb1_ref[...]
    for p in range(4):
        acc_fc = acc_fc + jnp.dot(h2_ref[pl.ds(p, bt, 4), :], fw1_ref[p],
                                  preferred_element_type=f32)
    hfc = jnp.maximum(acc_fc, 0.0)
    o_ref[...] = jnp.dot(hfc, fw2_ref[...], preferred_element_type=f32) + fb2_ref[...]


# ------------------------------ wrapper -------------------------------------

def _resident_spec(arr):
    # Full-array block whose block index never changes -> fetched once, stays in VMEM.
    if arr.ndim == 2:
        return pl.BlockSpec(arr.shape, lambda i: (0, 0))
    return pl.BlockSpec(arr.shape, lambda i: (0, 0, 0))


def _pick_bt(n):
    for bt in (32, 16, 8):
        if n % bt == 0:
            return bt
    return 8


def net_forward(x, prep):
    """Eval-mode forward of `Net`. x: (N, 1, 28, 28) f32 NCHW -> (N, 10) logits."""
    n = x.shape[0]
    assert x.shape[1:] == (1, 28, 28), x.shape
    bt = _pick_bt(n)
    n_pad = ((n + bt - 1) // bt) * bt
    xs = x.reshape(n, 28, 28)
    if n_pad != n:
        xs = jnp.pad(xs, ((0, n_pad - n), (0, 0), (0, 0)))

    in_specs = [pl.BlockSpec((bt, 28, 28), lambda i: (i, 0, 0))]
    in_specs += [_resident_spec(w) for w in prep]

    out = pl.pallas_call(
        functools.partial(_net_kernel, bt),
        out_shape=jax.ShapeDtypeStruct((n_pad, 10), jnp.float32),
        grid=(n_pad // bt,),
        in_specs=in_specs,
        out_specs=pl.BlockSpec((bt, 10), lambda i: (i, 0)),
        scratch_shapes=[
            pltpu.VMEM((bt * 24, 120), jnp.float32),   # conv1, pre H-pool
            pltpu.VMEM((bt, 12, 120), jnp.float32),    # pooled conv1, lanes=(pw, ci)
            pltpu.VMEM((bt * 8, 80), jnp.float32),     # conv2, pre H-pool
            pltpu.VMEM((bt * 4, 80), jnp.float32),     # pooled conv2, lanes=(pw2, co)
        ],
        compiler_params=pltpu.CompilerParams(
            dimension_semantics=("parallel",),
        ),
    )(xs, *prep)
    return out[:n]


# -------------------------- parameter preparation ---------------------------

def init_params(key):
    """PyTorch-layout params, uniform(+-1/sqrt(fan_in)) like torch defaults."""
    ks = jax.random.split(key, 8)

    def u(k, shape, fan_in):
        b = 1.0 / np.sqrt(fan_in)
        return jax.random.uniform(k, shape, jnp.float32, -b, b)

    w1 = u(ks[0], (10, 1, 5, 5), 25)      # conv1 (out, in, kh, kw)
    b1 = u(ks[1], (10,), 25)
    w2 = u(ks[2], (20, 10, 5, 5), 250)    # conv2
    b2 = u(ks[3], (20,), 250)
    fw1 = u(ks[4], (50, 320), 320)        # fc1 (out, in)
    fb1 = u(ks[5], (50,), 320)
    fw2 = u(ks[6], (10, 50), 50)          # fc2
    fb2 = u(ks[7], (10,), 50)
    return (w1, b1, w2, b2, fw1, fb1, fw2, fb2)


def prepare_params(params):
    """Precompute band matrices / permuted FC weights for the fused kernel (host, once)."""
    w1, b1, w2, b2, fw1, fb1, fw2, fb2 = [np.asarray(p) for p in params]

    # conv1 band matrices: B[kh, w_in, pw*10 + co] = w1[co, 0, kh, w_in - ow], ow = 2*pw(+1)
    B1e = np.zeros((5, 28, 120), np.float32)
    B1o = np.zeros((5, 28, 120), np.float32)
    for kh in range(5):
        for pw in range(12):
            for kw in range(5):
                B1e[kh, 2 * pw + kw, pw * 10:(pw + 1) * 10] = w1[:, 0, kh, kw]
                B1o[kh, 2 * pw + 1 + kw, pw * 10:(pw + 1) * 10] = w1[:, 0, kh, kw]
    c1b = np.tile(b1, 12)[None, :].astype(np.float32)             # (1, 120)

    # conv2 band matrices: input lanes = (pw, ci) = 120, output lanes = (pw2, co) = 80
    B2e = np.zeros((5, 120, 80), np.float32)
    B2o = np.zeros((5, 120, 80), np.float32)
    for kh in range(5):
        for pw2 in range(4):
            for kw in range(5):
                for ci in range(10):
                    B2e[kh, (2 * pw2 + kw) * 10 + ci, pw2 * 20:(pw2 + 1) * 20] = w2[:, ci, kh, kw]
                    B2o[kh, (2 * pw2 + 1 + kw) * 10 + ci, pw2 * 20:(pw2 + 1) * 20] = w2[:, ci, kh, kw]
    c2b = np.tile(b2, 4)[None, :].astype(np.float32)              # (1, 80)

    # fc1 weight permuted to the kernel's (ph2, pw2*20+co) flatten order
    # (torch flatten order of NCHW (20,4,4) is co*16 + ph2*4 + pw2).
    FW1 = np.zeros((4, 80, 50), np.float32)
    for p in range(4):
        for pw2 in range(4):
            for co in range(20):
                FW1[p, pw2 * 20 + co, :] = fw1[:, co * 16 + p * 4 + pw2]
    FB1 = fb1[None, :].astype(np.float32)                          # (1, 50)
    FW2 = np.ascontiguousarray(fw2.T).astype(np.float32)           # (50, 10)
    FB2 = fb2[None, :].astype(np.float32)                          # (1, 10)

    return tuple(jnp.asarray(a) for a in
                 (B1e, B1o, c1b, B2e, B2o, c2b, FW1, FB1, FW2, FB2))


# ------------------------------ reference -----------------------------------

def _reference(x, params):
    """Pure-JAX eval-mode reference of the PyTorch module (for validation only)."""
    w1, b1, w2, b2, fw1, fb1, fw2, fb2 = params
    hi = jax.lax.Precision.HIGHEST

    def conv(inp, w):
        return jax.lax.conv_general_dilated(
            inp, w, window_strides=(1, 1), padding="VALID",
            dimension_numbers=("NCHW", "OIHW", "NCHW"), precision=hi)

    def pool2(t):
        n_, c_, h_, w_ = t.shape
        return t.reshape(n_, c_, h_ // 2, 2, w_ // 2, 2).max(axis=(3, 5))

    y = jnp.maximum(pool2(conv(x, w1) + b1[None, :, None, None]), 0.0)
    y = jnp.maximum(pool2(conv(y, w2) + b2[None, :, None, None]), 0.0)
    y = y.reshape(y.shape[0], 320)
    y = jnp.maximum(jnp.dot(y, fw1.T, precision=hi) + fb1, 0.0)
    return jnp.dot(y, fw2.T, precision=hi) + fb2


# -------------------------------- main ---------------------------------------

if __name__ == "__main__":
    key = jax.random.PRNGKey(0)
    kp, kx = jax.random.split(key)
    params = init_params(kp)
    prep = prepare_params(params)
    x = jax.random.normal(kx, (2, 1, 28, 28), jnp.float32)

    fwd = jax.jit(net_forward)
    out = jax.block_until_ready(fwd(x, prep))
    assert out.shape == (2, 10), out.shape

    ref = jax.block_until_ready(_reference(x, params))
    max_err = float(jnp.max(jnp.abs(out - ref)))
    assert max_err < 2e-2, f"kernel/reference mismatch: max_err={max_err}"

    print("KERNEL_OK")
</pallas_src>

<mosaic_0001>
module attributes {stable_mosaic.version = 11 : i64} {
  func.func @_net_kernel(%arg0: i32, %arg1: memref<8x28x28xf32, #tpu.memory_space<vmem>>, %arg2: memref<5x28x120xf32, #tpu.memory_space<vmem>>, %arg3: memref<5x28x120xf32, #tpu.memory_space<vmem>>, %arg4: memref<1x120xf32, #tpu.memory_space<vmem>>, %arg5: memref<5x120x80xf32, #tpu.memory_space<vmem>>, %arg6: memref<5x120x80xf32, #tpu.memory_space<vmem>>, %arg7: memref<1x80xf32, #tpu.memory_space<vmem>>, %arg8: memref<4x80x50xf32, #tpu.memory_space<vmem>>, %arg9: memref<1x50xf32, #tpu.memory_space<vmem>>, %arg10: memref<50x10xf32, #tpu.memory_space<vmem>>, %arg11: memref<1x10xf32, #tpu.memory_space<vmem>>, %arg12: memref<8x10xf32, #tpu.memory_space<vmem>>, %arg13: memref<192x120xf32, #tpu.memory_space<vmem>>, %arg14: memref<8x12x120xf32, #tpu.memory_space<vmem>>, %arg15: memref<64x80xf32, #tpu.memory_space<vmem>>, %arg16: memref<32x80xf32, #tpu.memory_space<vmem>>) attributes {dimension_semantics = [#tpu.dimension_semantics<parallel>], iteration_bounds = array<i64: 1>, scalar_prefetch = 0 : i64, scratch_operands = 4 : i64, tpu.core_type = #tpu.core_type<tc>, window_params = [{transform_indices = @transform_0, window_bounds = array<i64: 8, 28, 28>}, {pipeline_mode = #tpu.pipeline_mode<synchronous>, transform_indices = @transform_1, window_bounds = array<i64: 5, 28, 120>}, {pipeline_mode = #tpu.pipeline_mode<synchronous>, transform_indices = @transform_2, window_bounds = array<i64: 5, 28, 120>}, {pipeline_mode = #tpu.pipeline_mode<synchronous>, transform_indices = @transform_3, window_bounds = array<i64: 1, 120>}, {pipeline_mode = #tpu.pipeline_mode<synchronous>, transform_indices = @transform_4, window_bounds = array<i64: 5, 120, 80>}, {pipeline_mode = #tpu.pipeline_mode<synchronous>, transform_indices = @transform_5, window_bounds = array<i64: 5, 120, 80>}, {pipeline_mode = #tpu.pipeline_mode<synchronous>, transform_indices = @transform_6, window_bounds = array<i64: 1, 80>}, {pipeline_mode = #tpu.pipeline_mode<synchronous>, transform_indices = @transform_7, window_bounds = array<i64: 4, 80, 50>}, {pipeline_mode = #tpu.pipeline_mode<synchronous>, transform_indices = @transform_8, window_bounds = array<i64: 1, 50>}, {pipeline_mode = #tpu.pipeline_mode<synchronous>, transform_indices = @transform_9, window_bounds = array<i64: 50, 10>}, {pipeline_mode = #tpu.pipeline_mode<synchronous>, transform_indices = @transform_10, window_bounds = array<i64: 1, 10>}, {transform_indices = @transform_11, window_bounds = array<i64: 8, 10>}]} {
    %cst = arith.constant 0.000000e+00 : f32
    %0 = vector.broadcast %cst : f32 to vector<192x120xf32>
    %cst_0 = arith.constant 0.000000e+00 : f32
    %1 = vector.broadcast %cst_0 : f32 to vector<192x120xf32>
    %c0 = arith.constant 0 : index
    %c0_1 = arith.constant 0 : index
    %c0_2 = arith.constant 0 : index
    %2 = vector.load %arg1[%c0, %c0_1, %c0_2] : memref<8x28x28xf32, #tpu.memory_space<vmem>>, vector<8x24x28xf32>
    %3 = vector.shape_cast %2 : vector<8x24x28xf32> to vector<192x28xf32>
    %c0_3 = arith.constant 0 : index
    %c0_4 = arith.constant 0 : index
    %c0_5 = arith.constant 0 : index
    %4 = vector.load %arg2[%c0_3, %c0_4, %c0_5] : memref<5x28x120xf32, #tpu.memory_space<vmem>>, vector<1x28x120xf32>
    %5 = vector.shape_cast %4 : vector<1x28x120xf32> to vector<28x120xf32>
    %cst_6 = arith.constant dense<0.000000e+00> : vector<192x120xf32>
    %6 = tpu.matmul %3, %5, %cst_6 {dimension_numbers = #tpu.dot_dimension_numbers<[1], [0], [0], [1], [0, 0, 1, 1], [], []>} : vector<192x28xf32>, vector<28x120xf32>, vector<192x120xf32> -> vector<192x120xf32>
    %7 = arith.addf %0, %6 : vector<192x120xf32>
    %c0_7 = arith.constant 0 : index
    %c0_8 = arith.constant 0 : index
    %c0_9 = arith.constant 0 : index
    %8 = vector.load %arg3[%c0_7, %c0_8, %c0_9] : memref<5x28x120xf32, #tpu.memory_space<vmem>>, vector<1x28x120xf32>
    %9 = vector.shape_cast %8 : vector<1x28x120xf32> to vector<28x120xf32>
    %cst_10 = arith.constant dense<0.000000e+00> : vector<192x120xf32>
    %10 = tpu.matmul %3, %9, %cst_10 {dimension_numbers = #tpu.dot_dimension_numbers<[1], [0], [0], [1], [0, 0, 1, 1], [], []>} : vector<192x28xf32>, vector<28x120xf32>, vector<192x120xf32> -> vector<192x120xf32>
    %11 = arith.addf %1, %10 : vector<192x120xf32>
    %c0_11 = arith.constant 0 : index
    %c1 = arith.constant 1 : index
    %c0_12 = arith.constant 0 : index
    %12 = vector.load %arg1[%c0_11, %c1, %c0_12] : memref<8x28x28xf32, #tpu.memory_space<vmem>>, vector<8x24x28xf32>
    %13 = vector.shape_cast %12 : vector<8x24x28xf32> to vector<192x28xf32>
    %c1_13 = arith.constant 1 : index
    %c0_14 = arith.constant 0 : index
    %c0_15 = arith.constant 0 : index
    %14 = vector.load %arg2[%c1_13, %c0_14, %c0_15] : memref<5x28x120xf32, #tpu.memory_space<vmem>>, vector<1x28x120xf32>
    %15 = vector.shape_cast %14 : vector<1x28x120xf32> to vector<28x120xf32>
    %cst_16 = arith.constant dense<0.000000e+00> : vector<192x120xf32>
    %16 = tpu.matmul %13, %15, %cst_16 {dimension_numbers = #tpu.dot_dimension_numbers<[1], [0], [0], [1], [0, 0, 1, 1], [], []>} : vector<192x28xf32>, vector<28x120xf32>, vector<192x120xf32> -> vector<192x120xf32>
    %17 = arith.addf %7, %16 : vector<192x120xf32>
    %c1_17 = arith.constant 1 : index
    %c0_18 = arith.constant 0 : index
    %c0_19 = arith.constant 0 : index
    %18 = vector.load %arg3[%c1_17, %c0_18, %c0_19] : memref<5x28x120xf32, #tpu.memory_space<vmem>>, vector<1x28x120xf32>
    %19 = vector.shape_cast %18 : vector<1x28x120xf32> to vector<28x120xf32>
    %cst_20 = arith.constant dense<0.000000e+00> : vector<192x120xf32>
    %20 = tpu.matmul %13, %19, %cst_20 {dimension_numbers = #tpu.dot_dimension_numbers<[1], [0], [0], [1], [0, 0, 1, 1], [], []>} : vector<192x28xf32>, vector<28x120xf32>, vector<192x120xf32> -> vector<192x120xf32>
    %21 = arith.addf %11, %20 : vector<192x120xf32>
    %c0_21 = arith.constant 0 : index
    %c2 = arith.constant 2 : index
    %c0_22 = arith.constant 0 : index
    %22 = vector.load %arg1[%c0_21, %c2, %c0_22] : memref<8x28x28xf32, #tpu.memory_space<vmem>>, vector<8x24x28xf32>
    %23 = vector.shape_cast %22 : vector<8x24x28xf32> to vector<192x28xf32>
    %c2_23 = arith.constant 2 : index
    %c0_24 = arith.constant 0 : index
    %c0_25 = arith.constant 0 : index
    %24 = vector.load %arg2[%c2_23, %c0_24, %c0_25] : memref<5x28x120xf32, #tpu.memory_space<vmem>>, vector<1x28x120xf32>
    %25 = vector.shape_cast %24 : vector<1x28x120xf32> to vector<28x120xf32>
    %cst_26 = arith.constant dense<0.000000e+00> : vector<192x120xf32>
    %26 = tpu.matmul %23, %25, %cst_26 {dimension_numbers = #tpu.dot_dimension_numbers<[1], [0], [0], [1], [0, 0, 1, 1], [], []>} : vector<192x28xf32>, vector<28x120xf32>, vector<192x120xf32> -> vector<192x120xf32>
    %27 = arith.addf %17, %26 : vector<192x120xf32>
    %c2_27 = arith.constant 2 : index
    %c0_28 = arith.constant 0 : index
    %c0_29 = arith.constant 0 : index
    %28 = vector.load %arg3[%c2_27, %c0_28, %c0_29] : memref<5x28x120xf32, #tpu.memory_space<vmem>>, vector<1x28x120xf32>
    %29 = vector.shape_cast %28 : vector<1x28x120xf32> to vector<28x120xf32>
    %cst_30 = arith.constant dense<0.000000e+00> : vector<192x120xf32>
    %30 = tpu.matmul %23, %29, %cst_30 {dimension_numbers = #tpu.dot_dimension_numbers<[1], [0], [0], [1], [0, 0, 1, 1], [], []>} : vector<192x28xf32>, vector<28x120xf32>, vector<192x120xf32> -> vector<192x120xf32>
    %31 = arith.addf %21, %30 : vector<192x120xf32>
    %c0_31 = arith.constant 0 : index
    %c3 = arith.constant 3 : index
    %c0_32 = arith.constant 0 : index
    %32 = vector.load %arg1[%c0_31, %c3, %c0_32] : memref<8x28x28xf32, #tpu.memory_space<vmem>>, vector<8x24x28xf32>
    %33 = vector.shape_cast %32 : vector<8x24x28xf32> to vector<192x28xf32>
    %c3_33 = arith.constant 3 : index
    %c0_34 = arith.constant 0 : index
    %c0_35 = arith.constant 0 : index
    %34 = vector.load %arg2[%c3_33, %c0_34, %c0_35] : memref<5x28x120xf32, #tpu.memory_space<vmem>>, vector<1x28x120xf32>
    %35 = vector.shape_cast %34 : vector<1x28x120xf32> to vector<28x120xf32>
    %cst_36 = arith.constant dense<0.000000e+00> : vector<192x120xf32>
    %36 = tpu.matmul %33, %35, %cst_36 {dimension_numbers = #tpu.dot_dimension_numbers<[1], [0], [0], [1], [0, 0, 1, 1], [], []>} : vector<192x28xf32>, vector<28x120xf32>, vector<192x120xf32> -> vector<192x120xf32>
    %37 = arith.addf %27, %36 : vector<192x120xf32>
    %c3_37 = arith.constant 3 : index
    %c0_38 = arith.constant 0 : index
    %c0_39 = arith.constant 0 : index
    %38 = vector.load %arg3[%c3_37, %c0_38, %c0_39] : memref<5x28x120xf32, #tpu.memory_space<vmem>>, vector<1x28x120xf32>
    %39 = vector.shape_cast %38 : vector<1x28x120xf32> to vector<28x120xf32>
    %cst_40 = arith.constant dense<0.000000e+00> : vector<192x120xf32>
    %40 = tpu.matmul %33, %39, %cst_40 {dimension_numbers = #tpu.dot_dimension_numbers<[1], [0], [0], [1], [0, 0, 1, 1], [], []>} : vector<192x28xf32>, vector<28x120xf32>, vector<192x120xf32> -> vector<192x120xf32>
    %41 = arith.addf %31, %40 : vector<192x120xf32>
    %c0_41 = arith.constant 0 : index
    %c4 = arith.constant 4 : index
    %c0_42 = arith.constant 0 : index
    %42 = vector.load %arg1[%c0_41, %c4, %c0_42] : memref<8x28x28xf32, #tpu.memory_space<vmem>>, vector<8x24x28xf32>
    %43 = vector.shape_cast %42 : vector<8x24x28xf32> to vector<192x28xf32>
    %c4_43 = arith.constant 4 : index
    %c0_44 = arith.constant 0 : index
    %c0_45 = arith.constant 0 : index
    %44 = vector.load %arg2[%c4_43, %c0_44, %c0_45] : memref<5x28x120xf32, #tpu.memory_space<vmem>>, vector<1x28x120xf32>
    %45 = vector.shape_cast %44 : vector<1x28x120xf32> to vector<28x120xf32>
    %cst_46 = arith.constant dense<0.000000e+00> : vector<192x120xf32>
    %46 = tpu.matmul %43, %45, %cst_46 {dimension_numbers = #tpu.dot_dimension_numbers<[1], [0], [0], [1], [0, 0, 1, 1], [], []>} : vector<192x28xf32>, vector<28x120xf32>, vector<192x120xf32> -> vector<192x120xf32>
    %47 = arith.addf %37, %46 : vector<192x120xf32>
    %c4_47 = arith.constant 4 : index
    %c0_48 = arith.constant 0 : index
    %c0_49 = arith.constant 0 : index
    %48 = vector.load %arg3[%c4_47, %c0_48, %c0_49] : memref<5x28x120xf32, #tpu.memory_space<vmem>>, vector<1x28x120xf32>
    %49 = vector.shape_cast %48 : vector<1x28x120xf32> to vector<28x120xf32>
    %cst_50 = arith.constant dense<0.000000e+00> : vector<192x120xf32>
    %50 = tpu.matmul %43, %49, %cst_50 {dimension_numbers = #tpu.dot_dimension_numbers<[1], [0], [0], [1], [0, 0, 1, 1], [], []>} : vector<192x28xf32>, vector<28x120xf32>, vector<192x120xf32> -> vector<192x120xf32>
    %51 = arith.addf %41, %50 : vector<192x120xf32>
    %52 = arith.maximumf %47, %51 : vector<192x120xf32>
    %c0_51 = arith.constant 0 : index
    %c0_52 = arith.constant 0 : index
    %53 = vector.load %arg13[%c0_51, %c0_52] : memref<192x120xf32, #tpu.memory_space<vmem>>, vector<192x120xf32>
    tpu.vector_store %arg13[%c0_51, %c0_52], %52 {strides = array<i32>} : memref<192x120xf32, #tpu.memory_space<vmem>>, vector<192x120xf32>,
    %c0_53 = arith.constant 0 : index
    %c0_54 = arith.constant 0 : index
    %54 = tpu.strided_load %arg13[%c0_53, %c0_54] {strides = array<i32: 2, 1>} : memref<192x120xf32, #tpu.memory_space<vmem>>, vector<96x120xf32>
    %c1_55 = arith.constant 1 : index
    %c0_56 = arith.constant 0 : index
    %55 = tpu.strided_load %arg13[%c1_55, %c0_56] {strides = array<i32: 2, 1>} : memref<192x120xf32, #tpu.memory_space<vmem>>, vector<96x120xf32>
    %56 = arith.maximumf %54, %55 : vector<96x120xf32>
    %c0_57 = arith.constant 0 : index
    %c0_58 = arith.constant 0 : index
    %57 = vector.load %arg4[%c0_57, %c0_58] : memref<1x120xf32, #tpu.memory_space<vmem>>, vector<1x120xf32>
    %58 = vector.broadcast %57 : vector<1x120xf32> to vector<96x120xf32>
    %59 = arith.addf %56, %58 : vector<96x120xf32>
    %cst_59 = arith.constant 0.000000e+00 : f32
    %60 = vector.broadcast %cst_59 : f32 to vector<96x120xf32>
    %61 = arith.maximumf %59, %60 : vector<96x120xf32>
    %62 = vector.extract_strided_slice %61 {offsets = [0, 0], sizes = [12, 120], strides = [1, 1]} : vector<96x120xf32> to vector<12x120xf32>
    %c0_60 = arith.constant 0 : index
    %c0_61 = arith.constant 0 : index
    %c0_62 = arith.constant 0 : index
    %63 = vector.load %arg14[%c0_60, %c0_61, %c0_62] : memref<8x12x120xf32, #tpu.memory_space<vmem>>, vector<1x12x120xf32>
    %64 = vector.shape_cast %63 : vector<1x12x120xf32> to vector<12x120xf32>
    %65 = vector.shape_cast %62 : vector<12x120xf32> to vector<1x12x120xf32>
    tpu.vector_store %arg14[%c0_60, %c0_61, %c0_62], %65 {strides = array<i32>} : memref<8x12x120xf32, #tpu.memory_space<vmem>>, vector<1x12x120xf32>,
    %66 = vector.extract_strided_slice %61 {offsets = [12, 0], sizes = [12, 120], strides = [1, 1]} : vector<96x120xf32> to vector<12x120xf32>
    %c1_63 = arith.constant 1 : index
    %c0_64 = arith.constant 0 : index
    %c0_65 = arith.constant 0 : index
    %67 = vector.load %arg14[%c1_63, %c0_64, %c0_65] : memref<8x12x120xf32, #tpu.memory_space<vmem>>, vector<1x12x120xf32>
    %68 = vector.shape_cast %67 : vector<1x12x120xf32> to vector<12x120xf32>
    %69 = vector.shape_cast %66 : vector<12x120xf32> to vector<1x12x120xf32>
    tpu.vector_store %arg14[%c1_63, %c0_64, %c0_65], %69 {strides = array<i32>} : memref<8x12x120xf32, #tpu.memory_space<vmem>>, vector<1x12x120xf32>,
    %70 = vector.extract_strided_slice %61 {offsets = [24, 0], sizes = [12, 120], strides = [1, 1]} : vector<96x120xf32> to vector<12x120xf32>
    %c2_66 = arith.constant 2 : index
    %c0_67 = arith.constant 0 : index
    %c0_68 = arith.constant 0 : index
    %71 = vector.load %arg14[%c2_66, %c0_67, %c0_68] : memref<8x12x120xf32, #tpu.memory_space<vmem>>, vector<1x12x120xf32>
    %72 = vector.shape_cast %71 : vector<1x12x120xf32> to vector<12x120xf32>
    %73 = vector.shape_cast %70 : vector<12x120xf32> to vector<1x12x120xf32>
    tpu.vector_store %arg14[%c2_66, %c0_67, %c0_68], %73 {strides = array<i32>} : memref<8x12x120xf32, #tpu.memory_space<vmem>>, vector<1x12x120xf32>,
    %74 = vector.extract_strided_slice %61 {offsets = [36, 0], sizes = [12, 120], strides = [1, 1]} : vector<96x120xf32> to vector<12x120xf32>
    %c3_69 = arith.constant 3 : index
    %c0_70 = arith.constant 0 : index
    %c0_71 = arith.constant 0 : index
    %75 = vector.load %arg14[%c3_69, %c0_70, %c0_71] : memref<8x12x120xf32, #tpu.memory_space<vmem>>, vector<1x12x120xf32>
    %76 = vector.shape_cast %75 : vector<1x12x120xf32> to vector<12x120xf32>
    %77 = vector.shape_cast %74 : vector<12x120xf32> to vector<1x12x120xf32>
    tpu.vector_store %arg14[%c3_69, %c0_70, %c0_71], %77 {strides = array<i32>} : memref<8x12x120xf32, #tpu.memory_space<vmem>>, vector<1x12x120xf32>,
    %78 = vector.extract_strided_slice %61 {offsets = [48, 0], sizes = [12, 120], strides = [1, 1]} : vector<96x120xf32> to vector<12x120xf32>
    %c4_72 = arith.constant 4 : index
    %c0_73 = arith.constant 0 : index
    %c0_74 = arith.constant 0 : index
    %79 = vector.load %arg14[%c4_72, %c0_73, %c0_74] : memref<8x12x120xf32, #tpu.memory_space<vmem>>, vector<1x12x120xf32>
    %80 = vector.shape_cast %79 : vector<1x12x120xf32> to vector<12x120xf32>
    %81 = vector.shape_cast %78 : vector<12x120xf32> to vector<1x12x120xf32>
    tpu.vector_store %arg14[%c4_72, %c0_73, %c0_74], %81 {strides = array<i32>} : memref<8x12x120xf32, #tpu.memory_space<vmem>>, vector<1x12x120xf32>,
    %82 = vector.extract_strided_slice %61 {offsets = [60, 0], sizes = [12, 120], strides = [1, 1]} : vector<96x120xf32> to vector<12x120xf32>
    %c5 = arith.constant 5 : index
    %c0_75 = arith.constant 0 : index
    %c0_76 = arith.constant 0 : index
    %83 = vector.load %arg14[%c5, %c0_75, %c0_76] : memref<8x12x120xf32, #tpu.memory_space<vmem>>, vector<1x12x120xf32>
    %84 = vector.shape_cast %83 : vector<1x12x120xf32> to vector<12x120xf32>
    %85 = vector.shape_cast %82 : vector<12x120xf32> to vector<1x12x120xf32>
    tpu.vector_store %arg14[%c5, %c0_75, %c0_76], %85 {strides = array<i32>} : memref<8x12x120xf32, #tpu.memory_space<vmem>>, vector<1x12x120xf32>,
    %86 = vector.extract_strided_slice %61 {offsets = [72, 0], sizes = [12, 120], strides = [1, 1]} : vector<96x120xf32> to vector<12x120xf32>
    %c6 = arith.constant 6 : index
    %c0_77 = arith.constant 0 : index
    %c0_78 = arith.constant 0 : index
    %87 = vector.load %arg14[%c6, %c0_77, %c0_78] : memref<8x12x120xf32, #tpu.memory_space<vmem>>, vector<1x12x120xf32>
    %88 = vector.shape_cast %87 : vector<1x12x120xf32> to vector<12x120xf32>
    %89 = vector.shape_cast %86 : vector<12x120xf32> to vector<1x12x120xf32>
    tpu.vector_store %arg14[%c6, %c0_77, %c0_78], %89 {strides = array<i32>} : memref<8x12x120xf32, #tpu.memory_space<vmem>>, vector<1x12x120xf32>,
    %90 = vector.extract_strided_slice %61 {offsets = [84, 0], sizes = [12, 120], strides = [1, 1]} : vector<96x120xf32> to vector<12x120xf32>
    %c7 = arith.constant 7 : index
    %c0_79 = arith.constant 0 : index
    %c0_80 = arith.constant 0 : index
    %91 = vector.load %arg14[%c7, %c0_79, %c0_80] : memref<8x12x120xf32, #tpu.memory_space<vmem>>, vector<1x12x120xf32>
    %92 = vector.shape_cast %91 : vector<1x12x120xf32> to vector<12x120xf32>
    %93 = vector.shape_cast %90 : vector<12x120xf32> to vector<1x12x120xf32>
    tpu.vector_store %arg14[%c7, %c0_79, %c0_80], %93 {strides = array<i32>} : memref<8x12x120xf32, #tpu.memory_space<vmem>>, vector<1x12x120xf32>,
    %cst_81 = arith.constant 0.000000e+00 : f32
    %94 = vector.broadcast %cst_81 : f32 to vector<64x80xf32>
    %cst_82 = arith.constant 0.000000e+00 : f32
    %95 = vector.broadcast %cst_82 : f32 to vector<64x80xf32>
    %c0_83 = arith.constant 0 : index
    %c0_84 = arith.constant 0 : index
    %c0_85 = arith.constant 0 : index
    %96 = vector.load %arg14[%c0_83, %c0_84, %c0_85] : memref<8x12x120xf32, #tpu.memory_space<vmem>>, vector<8x8x120xf32>
    %97 = vector.shape_cast %96 : vector<8x8x120xf32> to vector<64x120xf32>
    %c0_86 = arith.constant 0 : index
    %c0_87 = arith.constant 0 : index
    %c0_88 = arith.constant 0 : index
    %98 = vector.load %arg5[%c0_86, %c0_87, %c0_88] : memref<5x120x80xf32, #tpu.memory_space<vmem>>, vector<1x120x80xf32>
    %99 = vector.shape_cast %98 : vector<1x120x80xf32> to vector<120x80xf32>
    %cst_89 = arith.constant dense<0.000000e+00> : vector<64x80xf32>
    %100 = tpu.matmul %97, %99, %cst_89 {dimension_numbers = #tpu.dot_dimension_numbers<[1], [0], [0], [1], [0, 0, 1, 1], [], []>} : vector<64x120xf32>, vector<120x80xf32>, vector<64x80xf32> -> vector<64x80xf32>
    %101 = arith.addf %94, %100 : vector<64x80xf32>
    %c0_90 = arith.constant 0 : index
    %c0_91 = arith.constant 0 : index
    %c0_92 = arith.constant 0 : index
    %102 = vector.load %arg6[%c0_90, %c0_91, %c0_92] : memref<5x120x80xf32, #tpu.memory_space<vmem>>, vector<1x120x80xf32>
    %103 = vector.shape_cast %102 : vector<1x120x80xf32> to vector<120x80xf32>
    %cst_93 = arith.constant dense<0.000000e+00> : vector<64x80xf32>
    %104 = tpu.matmul %97, %103, %cst_93 {dimension_numbers = #tpu.dot_dimension_numbers<[1], [0], [0], [1], [0, 0, 1, 1], [], []>} : vector<64x120xf32>, vector<120x80xf32>, vector<64x80xf32> -> vector<64x80xf32>
    %105 = arith.addf %95, %104 : vector<64x80xf32>
    %c0_94 = arith.constant 0 : index
    %c1_95 = arith.constant 1 : index
    %c0_96 = arith.constant 0 : index
    %106 = vector.load %arg14[%c0_94, %c1_95, %c0_96] : memref<8x12x120xf32, #tpu.memory_space<vmem>>, vector<8x8x120xf32>
    %107 = vector.shape_cast %106 : vector<8x8x120xf32> to vector<64x120xf32>
    %c1_97 = arith.constant 1 : index
    %c0_98 = arith.constant 0 : index
    %c0_99 = arith.constant 0 : index
    %108 = vector.load %arg5[%c1_97, %c0_98, %c0_99] : memref<5x120x80xf32, #tpu.memory_space<vmem>>, vector<1x120x80xf32>
    %109 = vector.shape_cast %108 : vector<1x120x80xf32> to vector<120x80xf32>
    %cst_100 = arith.constant dense<0.000000e+00> : vector<64x80xf32>
    %110 = tpu.matmul %107, %109, %cst_100 {dimension_numbers = #tpu.dot_dimension_numbers<[1], [0], [0], [1], [0, 0, 1, 1], [], []>} : vector<64x120xf32>, vector<120x80xf32>, vector<64x80xf32> -> vector<64x80xf32>
    %111 = arith.addf %101, %110 : vector<64x80xf32>
    %c1_101 = arith.constant 1 : index
    %c0_102 = arith.constant 0 : index
    %c0_103 = arith.constant 0 : index
    %112 = vector.load %arg6[%c1_101, %c0_102, %c0_103] : memref<5x120x80xf32, #tpu.memory_space<vmem>>, vector<1x120x80xf32>
    %113 = vector.shape_cast %112 : vector<1x120x80xf32> to vector<120x80xf32>
    %cst_104 = arith.constant dense<0.000000e+00> : vector<64x80xf32>
    %114 = tpu.matmul %107, %113, %cst_104 {dimension_numbers = #tpu.dot_dimension_numbers<[1], [0], [0], [1], [0, 0, 1, 1], [], []>} : vector<64x120xf32>, vector<120x80xf32>, vector<64x80xf32> -> vector<64x80xf32>
    %115 = arith.addf %105, %114 : vector<64x80xf32>
    %c0_105 = arith.constant 0 : index
    %c2_106 = arith.constant 2 : index
    %c0_107 = arith.constant 0 : index
    %116 = vector.load %arg14[%c0_105, %c2_106, %c0_107] : memref<8x12x120xf32, #tpu.memory_space<vmem>>, vector<8x8x120xf32>
    %117 = vector.shape_cast %116 : vector<8x8x120xf32> to vector<64x120xf32>
    %c2_108 = arith.constant 2 : index
    %c0_109 = arith.constant 0 : index
    %c0_110 = arith.constant 0 : index
    %118 = vector.load %arg5[%c2_108, %c0_109, %c0_110] : memref<5x120x80xf32, #tpu.memory_space<vmem>>, vector<1x120x80xf32>
    %119 = vector.shape_cast %118 : vector<1x120x80xf32> to vector<120x80xf32>
    %cst_111 = arith.constant dense<0.000000e+00> : vector<64x80xf32>
    %120 = tpu.matmul %117, %119, %cst_111 {dimension_numbers = #tpu.dot_dimension_numbers<[1], [0], [0], [1], [0, 0, 1, 1], [], []>} : vector<64x120xf32>, vector<120x80xf32>, vector<64x80xf32> -> vector<64x80xf32>
    %121 = arith.addf %111, %120 : vector<64x80xf32>
    %c2_112 = arith.constant 2 : index
    %c0_113 = arith.constant 0 : index
    %c0_114 = arith.constant 0 : index
    %122 = vector.load %arg6[%c2_112, %c0_113, %c0_114] : memref<5x120x80xf32, #tpu.memory_space<vmem>>, vector<1x120x80xf32>
    %123 = vector.shape_cast %122 : vector<1x120x80xf32> to vector<120x80xf32>
    %cst_115 = arith.constant dense<0.000000e+00> : vector<64x80xf32>
    %124 = tpu.matmul %117, %123, %cst_115 {dimension_numbers = #tpu.dot_dimension_numbers<[1], [0], [0], [1], [0, 0, 1, 1], [], []>} : vector<64x120xf32>, vector<120x80xf32>, vector<64x80xf32> -> vector<64x80xf32>
    %125 = arith.addf %115, %124 : vector<64x80xf32>
    %c0_116 = arith.constant 0 : index
    %c3_117 = arith.constant 3 : index
    %c0_118 = arith.constant 0 : index
    %126 = vector.load %arg14[%c0_116, %c3_117, %c0_118] : memref<8x12x120xf32, #tpu.memory_space<vmem>>, vector<8x8x120xf32>
    %127 = vector.shape_cast %126 : vector<8x8x120xf32> to vector<64x120xf32>
    %c3_119 = arith.constant 3 : index
    %c0_120 = arith.constant 0 : index
    %c0_121 = arith.constant 0 : index
    %128 = vector.load %arg5[%c3_119, %c0_120, %c0_121] : memref<5x120x80xf32, #tpu.memory_space<vmem>>, vector<1x120x80xf32>
    %129 = vector.shape_cast %128 : vector<1x120x80xf32> to vector<120x80xf32>
    %cst_122 = arith.constant dense<0.000000e+00> : vector<64x80xf32>
    %130 = tpu.matmul %127, %129, %cst_122 {dimension_numbers = #tpu.dot_dimension_numbers<[1], [0], [0], [1], [0, 0, 1, 1], [], []>} : vector<64x120xf32>, vector<120x80xf32>, vector<64x80xf32> -> vector<64x80xf32>
    %131 = arith.addf %121, %130 : vector<64x80xf32>
    %c3_123 = arith.constant 3 : index
    %c0_124 = arith.constant 0 : index
    %c0_125 = arith.constant 0 : index
    %132 = vector.load %arg6[%c3_123, %c0_124, %c0_125] : memref<5x120x80xf32, #tpu.memory_space<vmem>>, vector<1x120x80xf32>
    %133 = vector.shape_cast %132 : vector<1x120x80xf32> to vector<120x80xf32>
    %cst_126 = arith.constant dense<0.000000e+00> : vector<64x80xf32>
    %134 = tpu.matmul %127, %133, %cst_126 {dimension_numbers = #tpu.dot_dimension_numbers<[1], [0], [0], [1], [0, 0, 1, 1], [], []>} : vector<64x120xf32>, vector<120x80xf32>, vector<64x80xf32> -> vector<64x80xf32>
    %135 = arith.addf %125, %134 : vector<64x80xf32>
    %c0_127 = arith.constant 0 : index
    %c4_128 = arith.constant 4 : index
    %c0_129 = arith.constant 0 : index
    %136 = vector.load %arg14[%c0_127, %c4_128, %c0_129] : memref<8x12x120xf32, #tpu.memory_space<vmem>>, vector<8x8x120xf32>
    %137 = vector.shape_cast %136 : vector<8x8x120xf32> to vector<64x120xf32>
    %c4_130 = arith.constant 4 : index
    %c0_131 = arith.constant 0 : index
    %c0_132 = arith.constant 0 : index
    %138 = vector.load %arg5[%c4_130, %c0_131, %c0_132] : memref<5x120x80xf32, #tpu.memory_space<vmem>>, vector<1x120x80xf32>
    %139 = vector.shape_cast %138 : vector<1x120x80xf32> to vector<120x80xf32>
    %cst_133 = arith.constant dense<0.000000e+00> : vector<64x80xf32>
    %140 = tpu.matmul %137, %139, %cst_133 {dimension_numbers = #tpu.dot_dimension_numbers<[1], [0], [0], [1], [0, 0, 1, 1], [], []>} : vector<64x120xf32>, vector<120x80xf32>, vector<64x80xf32> -> vector<64x80xf32>
    %141 = arith.addf %131, %140 : vector<64x80xf32>
    %c4_134 = arith.constant 4 : index
    %c0_135 = arith.constant 0 : index
    %c0_136 = arith.constant 0 : index
    %142 = vector.load %arg6[%c4_134, %c0_135, %c0_136] : memref<5x120x80xf32, #tpu.memory_space<vmem>>, vector<1x120x80xf32>
    %143 = vector.shape_cast %142 : vector<1x120x80xf32> to vector<120x80xf32>
    %cst_137 = arith.constant dense<0.000000e+00> : vector<64x80xf32>
    %144 = tpu.matmul %137, %143, %cst_137 {dimension_numbers = #tpu.dot_dimension_numbers<[1], [0], [0], [1], [0, 0, 1, 1], [], []>} : vector<64x120xf32>, vector<120x80xf32>, vector<64x80xf32> -> vector<64x80xf32>
    %145 = arith.addf %135, %144 : vector<64x80xf32>
    %146 = arith.maximumf %141, %145 : vector<64x80xf32>
    %c0_138 = arith.constant 0 : index
    %c0_139 = arith.constant 0 : index
    %147 = vector.load %arg15[%c0_138, %c0_139] : memref<64x80xf32, #tpu.memory_space<vmem>>, vector<64x80xf32>
    tpu.vector_store %arg15[%c0_138, %c0_139], %146 {strides = array<i32>} : memref<64x80xf32, #tpu.memory_space<vmem>>, vector<64x80xf32>,
    %c0_140 = arith.constant 0 : index
    %c0_141 = arith.constant 0 : index
    %148 = tpu.strided_load %arg15[%c0_140, %c0_141] {strides = array<i32: 2, 1>} : memref<64x80xf32, #tpu.memory_space<vmem>>, vector<32x80xf32>
    %c1_142 = arith.constant 1 : index
    %c0_143 = arith.constant 0 : index
    %149 = tpu.strided_load %arg15[%c1_142, %c0_143] {strides = array<i32: 2, 1>} : memref<64x80xf32, #tpu.memory_space<vmem>>, vector<32x80xf32>
    %150 = arith.maximumf %148, %149 : vector<32x80xf32>
    %c0_144 = arith.constant 0 : index
    %c0_145 = arith.constant 0 : index
    %151 = vector.load %arg7[%c0_144, %c0_145] : memref<1x80xf32, #tpu.memory_space<vmem>>, vector<1x80xf32>
    %152 = vector.broadcast %151 : vector<1x80xf32> to vector<32x80xf32>
    %153 = arith.addf %150, %152 : vector<32x80xf32>
    %cst_146 = arith.constant 0.000000e+00 : f32
    %154 = vector.broadcast %cst_146 : f32 to vector<32x80xf32>
    %155 = arith.maximumf %153, %154 : vector<32x80xf32>
    %c0_147 = arith.constant 0 : index
    %c0_148 = arith.constant 0 : index
    %156 = vector.load %arg16[%c0_147, %c0_148] : memref<32x80xf32, #tpu.memory_space<vmem>>, vector<32x80xf32>
    tpu.vector_store %arg16[%c0_147, %c0_148], %155 {strides = array<i32>} : memref<32x80xf32, #tpu.memory_space<vmem>>, vector<32x80xf32>,
    %cst_149 = arith.constant 0.000000e+00 : f32
    %157 = vector.broadcast %cst_149 : f32 to vector<8x50xf32>
    %c0_150 = arith.constant 0 : index
    %c0_151 = arith.constant 0 : index
    %158 = vector.load %arg9[%c0_150, %c0_151] : memref<1x50xf32, #tpu.memory_space<vmem>>, vector<1x50xf32>
    %159 = vector.broadcast %158 : vector<1x50xf32> to vector<8x50xf32>
    %160 = arith.addf %157, %159 : vector<8x50xf32>
    %c0_152 = arith.constant 0 : index
    %c0_153 = arith.constant 0 : index
    %161 = tpu.strided_load %arg16[%c0_152, %c0_153] {strides = array<i32: 4, 1>} : memref<32x80xf32, #tpu.memory_space<vmem>>, vector<8x80xf32>
    %c0_154 = arith.constant 0 : index
    %c0_155 = arith.constant 0 : index
    %c0_156 = arith.constant 0 : index
    %162 = vector.load %arg8[%c0_154, %c0_155, %c0_156] : memref<4x80x50xf32, #tpu.memory_space<vmem>>, vector<1x80x50xf32>
    %163 = vector.shape_cast %162 : vector<1x80x50xf32> to vector<80x50xf32>
    %cst_157 = arith.constant dense<0.000000e+00> : vector<8x50xf32>
    %164 = tpu.matmul %161, %163, %cst_157 {dimension_numbers = #tpu.dot_dimension_numbers<[1], [0], [0], [1], [0, 0, 1, 1], [], []>} : vector<8x80xf32>, vector<80x50xf32>, vector<8x50xf32> -> vector<8x50xf32>
    %165 = arith.addf %160, %164 : vector<8x50xf32>
    %c1_158 = arith.constant 1 : index
    %c0_159 = arith.constant 0 : index
    %166 = tpu.strided_load %arg16[%c1_158, %c0_159] {strides = array<i32: 4, 1>} : memref<32x80xf32, #tpu.memory_space<vmem>>, vector<8x80xf32>
    %c1_160 = arith.constant 1 : index
    %c0_161 = arith.constant 0 : index
    %c0_162 = arith.constant 0 : index
    %167 = vector.load %arg8[%c1_160, %c0_161, %c0_162] : memref<4x80x50xf32, #tpu.memory_space<vmem>>, vector<1x80x50xf32>
    %168 = vector.shape_cast %167 : vector<1x80x50xf32> to vector<80x50xf32>
    %cst_163 = arith.constant dense<0.000000e+00> : vector<8x50xf32>
    %169 = tpu.matmul %166, %168, %cst_163 {dimension_numbers = #tpu.dot_dimension_numbers<[1], [0], [0], [1], [0, 0, 1, 1], [], []>} : vector<8x80xf32>, vector<80x50xf32>, vector<8x50xf32> -> vector<8x50xf32>
    %170 = arith.addf %165, %169 : vector<8x50xf32>
    %c2_164 = arith.constant 2 : index
    %c0_165 = arith.constant 0 : index
    %171 = tpu.strided_load %arg16[%c2_164, %c0_165] {strides = array<i32: 4, 1>} : memref<32x80xf32, #tpu.memory_space<vmem>>, vector<8x80xf32>
    %c2_166 = arith.constant 2 : index
    %c0_167 = arith.constant 0 : index
    %c0_168 = arith.constant 0 : index
    %172 = vector.load %arg8[%c2_166, %c0_167, %c0_168] : memref<4x80x50xf32, #tpu.memory_space<vmem>>, vector<1x80x50xf32>
    %173 = vector.shape_cast %172 : vector<1x80x50xf32> to vector<80x50xf32>
    %cst_169 = arith.constant dense<0.000000e+00> : vector<8x50xf32>
    %174 = tpu.matmul %171, %173, %cst_169 {dimension_numbers = #tpu.dot_dimension_numbers<[1], [0], [0], [1], [0, 0, 1, 1], [], []>} : vector<8x80xf32>, vector<80x50xf32>, vector<8x50xf32> -> vector<8x50xf32>
    %175 = arith.addf %170, %174 : vector<8x50xf32>
    %c3_170 = arith.constant 3 : index
    %c0_171 = arith.constant 0 : index
    %176 = tpu.strided_load %arg16[%c3_170, %c0_171] {strides = array<i32: 4, 1>} : memref<32x80xf32, #tpu.memory_space<vmem>>, vector<8x80xf32>
    %c3_172 = arith.constant 3 : index
    %c0_173 = arith.constant 0 : index
    %c0_174 = arith.constant 0 : index
    %177 = vector.load %arg8[%c3_172, %c0_173, %c0_174] : memref<4x80x50xf32, #tpu.memory_space<vmem>>, vector<1x80x50xf32>
    %178 = vector.shape_cast %177 : vector<1x80x50xf32> to vector<80x50xf32>
    %cst_175 = arith.constant dense<0.000000e+00> : vector<8x50xf32>
    %179 = tpu.matmul %176, %178, %cst_175 {dimension_numbers = #tpu.dot_dimension_numbers<[1], [0], [0], [1], [0, 0, 1, 1], [], []>} : vector<8x80xf32>, vector<80x50xf32>, vector<8x50xf32> -> vector<8x50xf32>
    %180 = arith.addf %175, %179 : vector<8x50xf32>
    %cst_176 = arith.constant 0.000000e+00 : f32
    %181 = vector.broadcast %cst_176 : f32 to vector<8x50xf32>
    %182 = arith.maximumf %180, %181 : vector<8x50xf32>
    %c0_177 = arith.constant 0 : index
    %c0_178 = arith.constant 0 : index
    %183 = vector.load %arg10[%c0_177, %c0_178] : memref<50x10xf32, #tpu.memory_space<vmem>>, vector<50x10xf32>
    %cst_179 = arith.constant dense<0.000000e+00> : vector<8x10xf32>
    %184 = tpu.matmul %182, %183, %cst_179 {dimension_numbers = #tpu.dot_dimension_numbers<[1], [0], [0], [1], [0, 0, 1, 1], [], []>} : vector<8x50xf32>, vector<50x10xf32>, vector<8x10xf32> -> vector<8x10xf32>
    %c0_180 = arith.constant 0 : index
    %c0_181 = arith.constant 0 : index
    %185 = vector.load %arg11[%c0_180, %c0_181] : memref<1x10xf32, #tpu.memory_space<vmem>>, vector<1x10xf32>
    %186 = vector.broadcast %185 : vector<1x10xf32> to vector<8x10xf32>
    %187 = arith.addf %184, %186 : vector<8x10xf32>
    %c0_182 = arith.constant 0 : index
    %c0_183 = arith.constant 0 : index
    %188 = vector.load %arg12[%c0_182, %c0_183] : memref<8x10xf32, #tpu.memory_space<vmem>>, vector<8x10xf32>
    tpu.vector_store %arg12[%c0_182, %c0_183], %187 {strides = array<i32>} : memref<8x10xf32, #tpu.memory_space<vmem>>, vector<8x10xf32>,
    return
  }
  func.func @transform_0(%arg0: i32) -> (i32, i32, i32) {
    %c0_i32 = arith.constant 0 : i32
    %c0_i32_0 = arith.constant 0 : i32
    %c0_i32_1 = arith.constant 0 : i32
    return %arg0, %c0_i32, %c0_i32_0 : i32, i32, i32
  }
  func.func @transform_1(%arg0: i32) -> (i32, i32, i32) {
    %c0_i32 = arith.constant 0 : i32
    %c0_i32_0 = arith.constant 0 : i32
    %c0_i32_1 = arith.constant 0 : i32
    %c0_i32_2 = arith.constant 0 : i32
    return %c0_i32, %c0_i32_0, %c0_i32_1 : i32, i32, i32
  }
  func.func @transform_2(%arg0: i32) -> (i32, i32, i32) {
    %c0_i32 = arith.constant 0 : i32
    %c0_i32_0 = arith.constant 0 : i32
    %c0_i32_1 = arith.constant 0 : i32
    %c0_i32_2 = arith.constant 0 : i32
    return %c0_i32, %c0_i32_0, %c0_i32_1 : i32, i32, i32
  }
  func.func @transform_3(%arg0: i32) -> (i32, i32) {
    %c0_i32 = arith.constant 0 : i32
    %c0_i32_0 = arith.constant 0 : i32
    %c0_i32_1 = arith.constant 0 : i32
    return %c0_i32, %c0_i32_0 : i32, i32
  }
  func.func @transform_4(%arg0: i32) -> (i32, i32, i32) {
    %c0_i32 = arith.constant 0 : i32
    %c0_i32_0 = arith.constant 0 : i32
    %c0_i32_1 = arith.constant 0 : i32
    %c0_i32_2 = arith.constant 0 : i32
    return %c0_i32, %c0_i32_0, %c0_i32_1 : i32, i32, i32
  }
  func.func @transform_5(%arg0: i32) -> (i32, i32, i32) {
    %c0_i32 = arith.constant 0 : i32
    %c0_i32_0 = arith.constant 0 : i32
    %c0_i32_1 = arith.constant 0 : i32
    %c0_i32_2 = arith.constant 0 : i32
    return %c0_i32, %c0_i32_0, %c0_i32_1 : i32, i32, i32
  }
  func.func @transform_6(%arg0: i32) -> (i32, i32) {
    %c0_i32 = arith.constant 0 : i32
    %c0_i32_0 = arith.constant 0 : i32
    %c0_i32_1 = arith.constant 0 : i32
    return %c0_i32, %c0_i32_0 : i32, i32
  }
  func.func @transform_7(%arg0: i32) -> (i32, i32, i32) {
    %c0_i32 = arith.constant 0 : i32
    %c0_i32_0 = arith.constant 0 : i32
    %c0_i32_1 = arith.constant 0 : i32
    %c0_i32_2 = arith.constant 0 : i32
    return %c0_i32, %c0_i32_0, %c0_i32_1 : i32, i32, i32
  }
  func.func @transform_8(%arg0: i32) -> (i32, i32) {
    %c0_i32 = arith.constant 0 : i32
    %c0_i32_0 = arith.constant 0 : i32
    %c0_i32_1 = arith.constant 0 : i32
    return %c0_i32, %c0_i32_0 : i32, i32
  }
  func.func @transform_9(%arg0: i32) -> (i32, i32) {
    %c0_i32 = arith.constant 0 : i32
    %c0_i32_0 = arith.constant 0 : i32
    %c0_i32_1 = arith.constant 0 : i32
    return %c0_i32, %c0_i32_0 : i32, i32
  }
  func.func @transform_10(%arg0: i32) -> (i32, i32) {
    %c0_i32 = arith.constant 0 : i32
    %c0_i32_0 = arith.constant 0 : i32
    %c0_i32_1 = arith.constant 0 : i32
    return %c0_i32, %c0_i32_0 : i32, i32
  }
  func.func @transform_11(%arg0: i32) -> (i32, i32) {
    %c0_i32 = arith.constant 0 : i32
    %c0_i32_0 = arith.constant 0 : i32
    return %arg0, %c0_i32 : i32, i32
  }
}

</mosaic_0001>

<llo_original>
// kernel: net_forward.1
$region0: #{net_forward.1}
  #allocation0 [shape = 'u32[]', space=smem, size = 0x4, offset = 0x4, fixed_abs, tag = 'smem constant byte address 0x4 - core index']
  #allocation1 [shape = 'u32[72,128]{1,0:T(1,128)}', space=vmem, size = 0x9000, scoped, tag = 'internal scratch']
  #allocation2 [shape = 'f32[192,120]{1,0:T(8,128)}', space=vmem, size = 0x18000, scoped, tag = 'scratch operand']
  #allocation3 [shape = 'f32[8,12,120]{2,1,0:T(8,128)}', space=vmem, size = 0x10000, scoped, tag = 'scratch operand']
  #allocation4 [shape = 'f32[64,80]{1,0:T(8,128)}', space=vmem, size = 0x8000, scoped, tag = 'scratch operand']
  #allocation5 [shape = 'f32[32,80]{1,0:T(8,128)}', space=vmem, size = 0x4000, scoped, tag = 'scratch operand']
  %s0 = inlined_call_operand.vmem [shape: f32[8,28,28], index: 0, kind: input, shape index: {}]
  %s1 = inlined_call_operand.vmem [shape: f32[5,28,120], index: 1, kind: input, shape index: {}]
  %s2 = inlined_call_operand.vmem [shape: f32[5,28,120], index: 2, kind: input, shape index: {}]
  %s3 = inlined_call_operand.vmem [shape: f32[1,120], index: 3, kind: input, shape index: {}]
  %s4 = inlined_call_operand.vmem [shape: f32[5,120,80], index: 4, kind: input, shape index: {}]
  %s5 = inlined_call_operand.vmem [shape: f32[5,120,80], index: 5, kind: input, shape index: {}]
  %s6 = inlined_call_operand.vmem [shape: f32[1,80], index: 6, kind: input, shape index: {}]
  %s7 = inlined_call_operand.vmem [shape: f32[4,80,50], index: 7, kind: input, shape index: {}]
  %s8 = inlined_call_operand.vmem [shape: f32[1,50], index: 8, kind: input, shape index: {}]
  %s9 = inlined_call_operand.vmem [shape: f32[50,10], index: 9, kind: input, shape index: {}]
  %s10 = inlined_call_operand.vmem [shape: f32[1,10], index: 10, kind: input, shape index: {}]
  %s11 = inlined_call_operand.vmem [shape: f32[8,10], index: 11, kind: output, shape index: {}]
  %s12 = sld [smem:[#allocation0]]
  $region54: #{net_forward.1} parent=0
    _
  %s14 = ssub.s32 1, %s12
  %s15 = scalar_select 0, %s14, %s12
  // Predicated region
  $region2: #{net_forward.1} parent=0 // pred_check
    _
  $region3: #{net_forward.1} parent=0 // pred_check_branch
    %17 = sbr.rel (0) target = $region5
  $region4: #{net_forward.1} parent=0 // pred_region
    _
  $region5: #{net_forward.1} parent=0 // pred_fallthru
    _
  // Predicated region
  $region6: #{net_forward.1} parent=0 // pred_check
    _
  $region7: #{net_forward.1} parent=0 // pred_check_branch
    %19 = sbr.rel (0) target = $region9
  $region8: #{net_forward.1} parent=0 // pred_region
    _
  $region9: #{net_forward.1} parent=0 // pred_fallthru
    _
  // Predicated region
  $region10: #{net_forward.1} parent=0 // pred_check
    _
  $region11: #{net_forward.1} parent=0 // pred_check_branch
    %21 = sbr.rel (0) target = $region13
  $region12: #{net_forward.1} parent=0 // pred_region
    _
  $region13: #{net_forward.1} parent=0 // pred_fallthru
    _
  // Predicated region
  $region14: #{net_forward.1} parent=0 // pred_check
    _
  $region15: #{net_forward.1} parent=0 // pred_check_branch
    %23 = sbr.rel (0) target = $region17
  $region16: #{net_forward.1} parent=0 // pred_region
    _
  $region17: #{net_forward.1} parent=0 // pred_fallthru
    _
  // Predicated region
  $region18: #{net_forward.1} parent=0 // pred_check
    _
  $region19: #{net_forward.1} parent=0 // pred_check_branch
    %25 = sbr.rel (0) target = $region21
  $region20: #{net_forward.1} parent=0 // pred_region
    _
  $region21: #{net_forward.1} parent=0 // pred_fallthru
    _
  // Predicated region
  $region22: #{net_forward.1} parent=0 // pred_check
    _
  $region23: #{net_forward.1} parent=0 // pred_check_branch
    %27 = sbr.rel (0) target = $region25
  $region24: #{net_forward.1} parent=0 // pred_region
    _
  $region25: #{net_forward.1} parent=0 // pred_fallthru
    _
  // Predicated region
  $region26: #{net_forward.1} parent=0 // pred_check
    _
  $region27: #{net_forward.1} parent=0 // pred_check_branch
    %29 = sbr.rel (0) target = $region29
  $region28: #{net_forward.1} parent=0 // pred_region
    _
  $region29: #{net_forward.1} parent=0 // pred_fallthru
    _
  // Predicated region
  $region30: #{net_forward.1} parent=0 // pred_check
    _
  $region31: #{net_forward.1} parent=0 // pred_check_branch
    %31 = sbr.rel (0) target = $region33
  $region32: #{net_forward.1} parent=0 // pred_region
    _
  $region33: #{net_forward.1} parent=0 // pred_fallthru
    _
  // Predicated region
  $region34: #{net_forward.1} parent=0 // pred_check
    _
  $region35: #{net_forward.1} parent=0 // pred_check_branch
    %33 = sbr.rel (0) target = $region37
  $region36: #{net_forward.1} parent=0 // pred_region
    _
  $region37: #{net_forward.1} parent=0 // pred_fallthru
    _
  // Predicated region
  $region38: #{net_forward.1} parent=0 // pred_check
    _
  $region39: #{net_forward.1} parent=0 // pred_check_branch
    %35 = sbr.rel (0) target = $region41
  $region40: #{net_forward.1} parent=0 // pred_region
    _
  $region41: #{net_forward.1} parent=0 // pred_fallthru
    _
  // Predicated region
  $region42: #{net_forward.1} parent=0 // pred_check
    _
  $region43: #{net_forward.1} parent=0 // pred_check_branch
    %37 = sbr.rel (0) target = $region45
  $region44: #{net_forward.1} parent=0 // pred_region
    _
  $region45: #{net_forward.1} parent=0 // pred_fallthru
    _
  %v38 = vld [vmem:[%s0] sm:$0xff]
  %v39 = vld [vmem:[%s0 + $0x8] sm:$0xff]
  %v40 = vld [vmem:[%s0 + $0x10] sm:$0xff]
  %v41 = vld [vmem:[%s0 + $0x20] sm:$0xff]
  %v42 = vld [vmem:[%s0 + $0x28] sm:$0xff]
  %v43 = vld [vmem:[%s0 + $0x30] sm:$0xff]
  %v44 = vld [vmem:[%s0 + $0x40] sm:$0xff]
  %v45 = vld [vmem:[%s0 + $0x48] sm:$0xff]
  %v46 = vld [vmem:[%s0 + $0x50] sm:$0xff]
  %v47 = vld [vmem:[%s0 + $0x60] sm:$0xff]
  %v48 = vld [vmem:[%s0 + $0x68] sm:$0xff]
  %v49 = vld [vmem:[%s0 + $0x70] sm:$0xff]
  %v50 = vld [vmem:[%s0 + $0x80] sm:$0xff]
  %v51 = vld [vmem:[%s0 + $0x88] sm:$0xff]
  %v52 = vld [vmem:[%s0 + $0x90] sm:$0xff]
  %v53 = vld [vmem:[%s0 + $0xa0] sm:$0xff]
  %v54 = vld [vmem:[%s0 + $0xa8] sm:$0xff]
  %v55 = vld [vmem:[%s0 + $0xb0] sm:$0xff]
  %v56 = vld [vmem:[%s0 + $0xc0] sm:$0xff]
  %v57 = vld [vmem:[%s0 + $0xc8] sm:$0xff]
  %v58 = vld [vmem:[%s0 + $0xd0] sm:$0xff]
  %v59 = vld [vmem:[%s0 + $0xe0] sm:$0xff]
  %v60 = vld [vmem:[%s0 + $0xe8] sm:$0xff]
  %v61 = vld [vmem:[%s0 + $0xf0] sm:$0xff]
  %v62 = vld [vmem:[%s1] sm:$0xff]
  %v63 = vld [vmem:[%s1 + $0x8] sm:$0xff]
  %v64 = vld [vmem:[%s1 + $0x10] sm:$0xff]
  %v65 = vld [vmem:[%s1 + $0x18] sm:$0xf]
  %v66 = vld [vmem:[%s2] sm:$0xff]
  %v67 = vld [vmem:[%s2 + $0x8] sm:$0xff]
  %v68 = vld [vmem:[%s2 + $0x10] sm:$0xff]
  %v69 = vld [vmem:[%s2 + $0x18] sm:$0xf]
  %v70 = vld [vmem:[%s0 + $0x1] sm:$0xff]
  %v71 = vld [vmem:[%s0 + $0x9] sm:$0xff]
  %v72 = vld [vmem:[%s0 + $0x11] sm:$0xff]
  %v73 = vld [vmem:[%s0 + $0x21] sm:$0xff]
  %v74 = vld [vmem:[%s0 + $0x29] sm:$0xff]
  %v75 = vld [vmem:[%s0 + $0x31] sm:$0xff]
  %v76 = vld [vmem:[%s0 + $0x41] sm:$0xff]
  %v77 = vld [vmem:[%s0 + $0x49] sm:$0xff]
  %v78 = vld [vmem:[%s0 + $0x51] sm:$0xff]
  %v79 = vld [vmem:[%s0 + $0x61] sm:$0xff]
  %v80 = vld [vmem:[%s0 + $0x69] sm:$0xff]
  %v81 = vld [vmem:[%s0 + $0x71] sm:$0xff]
  %v82 = vld [vmem:[%s0 + $0x81] sm:$0xff]
  %v83 = vld [vmem:[%s0 + $0x89] sm:$0xff]
  %v84 = vld [vmem:[%s0 + $0x91] sm:$0xff]
  %v85 = vld [vmem:[%s0 + $0xa1] sm:$0xff]
  %v86 = vld [vmem:[%s0 + $0xa9] sm:$0xff]
  %v87 = vld [vmem:[%s0 + $0xb1] sm:$0xff]
  %v88 = vld [vmem:[%s0 + $0xc1] sm:$0xff]
  %v89 = vld [vmem:[%s0 + $0xc9] sm:$0xff]
  %v90 = vld [vmem:[%s0 + $0xd1] sm:$0xff]
  %v91 = vld [vmem:[%s0 + $0xe1] sm:$0xff]
  %v92 = vld [vmem:[%s0 + $0xe9] sm:$0xff]
  %v93 = vld [vmem:[%s0 + $0xf1] sm:$0xff]
  %s94 = scalar_lea.vmem %s1, 32
  %v95 = vld [vmem:[%s94] sm:$0xff]
  %v96 = vld [vmem:[%s94 + $0x8] sm:$0xff]
  %v97 = vld [vmem:[%s94 + $0x10] sm:$0xff]
  %v98 = vld [vmem:[%s94 + $0x18] sm:$0xf]
  %vm99 = vcmask 228352
  %v101 = vsel %vm99, %v70, 0
  %v104 = vsel %vm99, %v71, 0
  %v107 = vsel %vm99, %v72, 0
  %v110 = vsel %vm99, %v73, 0
  %v113 = vsel %vm99, %v74, 0
  %v116 = vsel %vm99, %v75, 0
  %v119 = vsel %vm99, %v76, 0
  %v122 = vsel %vm99, %v77, 0
  %v125 = vsel %vm99, %v78, 0
  %v128 = vsel %vm99, %v79, 0
  %v131 = vsel %vm99, %v80, 0
  %v134 = vsel %vm99, %v81, 0
  %v137 = vsel %vm99, %v82, 0
  %v140 = vsel %vm99, %v83, 0
  %v143 = vsel %vm99, %v84, 0
  %v146 = vsel %vm99, %v85, 0
  %v149 = vsel %vm99, %v86, 0
  %v152 = vsel %vm99, %v87, 0
  %v155 = vsel %vm99, %v88, 0
  %v158 = vsel %vm99, %v89, 0
  %v161 = vsel %vm99, %v90, 0
  %v164 = vsel %vm99, %v91, 0
  %v167 = vsel %vm99, %v92, 0
  %v170 = vsel %vm99, %v93, 0
  %vm172 = vcmask 1043456
  %v174 = vsel %vm172, %v98, 0
  %176 = vmatpush.msra.mxu0 0.0
  %177 = vmatpush.msra.mxu0 0.0
  %178 = vmatpush.msra.mxu0 0.0
  %179 = vmatpush.msra.mxu0 0.0
  %180 = vmatpush.msra.mxu0 0.0
  %181 = vmatpush.msra.mxu0 0.0
  %182 = vmatpush.msra.mxu0 0.0
  %183 = vmatpush.msra.mxu0 0.0
  %184 = vmatpush.msra.mxu0 0.0
  %185 = vmatpush.msra.mxu0 0.0
  %186 = vmatpush.msra.mxu0 0.0
  %187 = vmatpush.msra.mxu0 0.0
  %188 = vmatpush.msra.mxu0 %v174
  %189 = vmatpush.msra.mxu0 %v97
  %190 = vmatpush.msra.mxu0 %v96
  %191 = vmatpush.msra.mxu0 %v95
  %192 = vmatmul.f32.gmra.mxu0 %v101
  %v193 = vpop.f32.mrf.mxu0
  %v194 = vadd.f32 0.0, %v193
  %195 = vmatmul.f32.gmra.mxu0 %v104
  %v196 = vpop.f32.mrf.mxu0
  %v197 = vadd.f32 0.0, %v196
  %198 = vmatmul.f32.gmra.mxu0 %v107
  %v199 = vpop.f32.mrf.mxu0
  %v200 = vadd.f32 0.0, %v199
  %201 = vmatmul.f32.gmra.mxu0 %v110
  %v202 = vpop.f32.mrf.mxu0
  %v203 = vadd.f32 0.0, %v202
  %204 = vmatmul.f32.gmra.mxu0 %v113
  %v205 = vpop.f32.mrf.mxu0
  %v206 = vadd.f32 0.0, %v205
  %207 = vmatmul.f32.gmra.mxu0 %v116
  %v208 = vpop.f32.mrf.mxu0
  %v209 = vadd.f32 0.0, %v208
  %210 = vmatmul.f32.gmra.mxu0 %v119
  %v211 = vpop.f32.mrf.mxu0
  %v212 = vadd.f32 0.0, %v211
  %213 = vmatmul.f32.gmra.mxu0 %v122
  %v214 = vpop.f32.mrf.mxu0
  %v215 = vadd.f32 0.0, %v214
  %216 = vmatmul.f32.gmra.mxu0 %v125
  %v217 = vpop.f32.mrf.mxu0
  %v218 = vadd.f32 0.0, %v217
  %219 = vmatmul.f32.gmra.mxu0 %v128
  %v220 = vpop.f32.mrf.mxu0
  %v221 = vadd.f32 0.0, %v220
  %222 = vmatmul.f32.gmra.mxu0 %v131
  %v223 = vpop.f32.mrf.mxu0
  %v224 = vadd.f32 0.0, %v223
  %225 = vmatmul.f32.gmra.mxu0 %v134
  %v226 = vpop.f32.mrf.mxu0
  %v227 = vadd.f32 0.0, %v226
  %228 = vmatmul.f32.gmra.mxu0 %v137
  %v229 = vpop.f32.mrf.mxu0
  %v230 = vadd.f32 0.0, %v229
  %231 = vmatmul.f32.gmra.mxu0 %v140
  %v232 = vpop.f32.mrf.mxu0
  %v233 = vadd.f32 0.0, %v232
  %234 = vmatmul.f32.gmra.mxu0 %v143
  %v235 = vpop.f32.mrf.mxu0
  %v236 = vadd.f32 0.0, %v235
  %237 = vmatmul.f32.gmra.mxu0 %v146
  %v238 = vpop.f32.mrf.mxu0
  %v239 = vadd.f32 0.0, %v238
  %240 = vmatmul.f32.gmra.mxu0 %v149
  %v241 = vpop.f32.mrf.mxu0
  %v242 = vadd.f32 0.0, %v241
  %243 = vmatmul.f32.gmra.mxu0 %v152
  %v244 = vpop.f32.mrf.mxu0
  %v245 = vadd.f32 0.0, %v244
  %246 = vmatmul.f32.gmra.mxu0 %v155
  %v247 = vpop.f32.mrf.mxu0
  %v248 = vadd.f32 0.0, %v247
  %249 = vmatmul.f32.gmra.mxu0 %v158
  %v250 = vpop.f32.mrf.mxu0
  %v251 = vadd.f32 0.0, %v250
  %252 = vmatmul.f32.gmra.mxu0 %v161
  %v253 = vpop.f32.mrf.mxu0
  %v254 = vadd.f32 0.0, %v253
  %255 = vmatmul.f32.gmra.mxu0 %v164
  %v256 = vpop.f32.mrf.mxu0
  %v257 = vadd.f32 0.0, %v256
  %258 = vmatmul.f32.gmra.mxu0 %v167
  %v259 = vpop.f32.mrf.mxu0
  %v260 = vadd.f32 0.0, %v259
  %261 = vmatmul.f32.gmra.mxu0 %v170
  %v262 = vpop.f32.mrf.mxu0
  %v263 = vadd.f32 0.0, %v262
  %264 = vdwg.mxu0
  %v266 = vsel %vm99, %v38, 0
  %v269 = vsel %vm99, %v39, 0
  %v272 = vsel %vm99, %v40, 0
  %v275 = vsel %vm99, %v41, 0
  %v278 = vsel %vm99, %v42, 0
  %v281 = vsel %vm99, %v43, 0
  %v284 = vsel %vm99, %v44, 0
  %v287 = vsel %vm99, %v45, 0
  %v290 = vsel %vm99, %v46, 0
  %v293 = vsel %vm99, %v47, 0
  %v296 = vsel %vm99, %v48, 0
  %v299 = vsel %vm99, %v49, 0
  %v302 = vsel %vm99, %v50, 0
  %v305 = vsel %vm99, %v51, 0
  %v308 = vsel %vm99, %v52, 0
  %v311 = vsel %vm99, %v53, 0
  %v314 = vsel %vm99, %v54, 0
  %v317 = vsel %vm99, %v55, 0
  %v320 = vsel %vm99, %v56, 0
  %v323 = vsel %vm99, %v57, 0
  %v326 = vsel %vm99, %v58, 0
  %v329 = vsel %vm99, %v59, 0
  %v332 = vsel %vm99, %v60, 0
  %v335 = vsel %vm99, %v61, 0
  %v338 = vsel %vm172, %v65, 0
  %340 = vmatpush.msra.mxu0 0.0
  %341 = vmatpush.msra.mxu0 0.0
  %342 = vmatpush.msra.mxu0 0.0
  %343 = vmatpush.msra.mxu0 0.0
  %344 = vmatpush.msra.mxu0 0.0
  %345 = vmatpush.msra.mxu0 0.0
  %346 = vmatpush.msra.mxu0 0.0
  %347 = vmatpush.msra.mxu0 0.0
  %348 = vmatpush.msra.mxu0 0.0
  %349 = vmatpush.msra.mxu0 0.0
  %350 = vmatpush.msra.mxu0 0.0
  %351 = vmatpush.msra.mxu0 0.0
  %352 = vmatpush.msra.mxu0 %v338
  %353 = vmatpush.msra.mxu0 %v64
  %354 = vmatpush.msra.mxu0 %v63
  %355 = vmatpush.msra.mxu0 %v62
  %356 = vmatmul.f32.gmra.mxu0 %v266
  %v357 = vpop.f32.mrf.mxu0
  %v358 = vadd.f32 %v194, %v357
  %359 = vmatmul.f32.gmra.mxu0 %v269
  %v360 = vpop.f32.mrf.mxu0
  %v361 = vadd.f32 %v197, %v360
  %362 = vmatmul.f32.gmra.mxu0 %v272
  %v363 = vpop.f32.mrf.mxu0
  %v364 = vadd.f32 %v200, %v363
  %365 = vmatmul.f32.gmra.mxu0 %v275
  %v366 = vpop.f32.mrf.mxu0
  %v367 = vadd.f32 %v203, %v366
  %368 = vmatmul.f32.gmra.mxu0 %v278
  %v369 = vpop.f32.mrf.mxu0
  %v370 = vadd.f32 %v206, %v369
  %371 = vmatmul.f32.gmra.mxu0 %v281
  %v372 = vpop.f32.mrf.mxu0
  %v373 = vadd.f32 %v209, %v372
  %374 = vmatmul.f32.gmra.mxu0 %v284
  %v375 = vpop.f32.mrf.mxu0
  %v376 = vadd.f32 %v212, %v375
  %377 = vmatmul.f32.gmra.mxu0 %v287
  %v378 = vpop.f32.mrf.mxu0
  %v379 = vadd.f32 %v215, %v378
  %380 = vmatmul.f32.gmra.mxu0 %v290
  %v381 = vpop.f32.mrf.mxu0
  %v382 = vadd.f32 %v218, %v381
  %383 = vmatmul.f32.gmra.mxu0 %v293
  %v384 = vpop.f32.mrf.mxu0
  %v385 = vadd.f32 %v221, %v384
  %386 = vmatmul.f32.gmra.mxu0 %v296
  %v387 = vpop.f32.mrf.mxu0
  %v388 = vadd.f32 %v224, %v387
  %389 = vmatmul.f32.gmra.mxu0 %v299
  %v390 = vpop.f32.mrf.mxu0
  %v391 = vadd.f32 %v227, %v390
  %392 = vmatmul.f32.gmra.mxu0 %v302
  %v393 = vpop.f32.mrf.mxu0
  %v394 = vadd.f32 %v230, %v393
  %395 = vmatmul.f32.gmra.mxu0 %v305
  %v396 = vpop.f32.mrf.mxu0
  %v397 = vadd.f32 %v233, %v396
  %398 = vmatmul.f32.gmra.mxu0 %v308
  %v399 = vpop.f32.mrf.mxu0
  %v400 = vadd.f32 %v236, %v399
  %401 = vmatmul.f32.gmra.mxu0 %v311
  %v402 = vpop.f32.mrf.mxu0
  %v403 = vadd.f32 %v239, %v402
  %404 = vmatmul.f32.gmra.mxu0 %v314
  %v405 = vpop.f32.mrf.mxu0
  %v406 = vadd.f32 %v242, %v405
  %407 = vmatmul.f32.gmra.mxu0 %v317
  %v408 = vpop.f32.mrf.mxu0
  %v409 = vadd.f32 %v245, %v408
  %410 = vmatmul.f32.gmra.mxu0 %v320
  %v411 = vpop.f32.mrf.mxu0
  %v412 = vadd.f32 %v248, %v411
  %413 = vmatmul.f32.gmra.mxu0 %v323
  %v414 = vpop.f32.mrf.mxu0
  %v415 = vadd.f32 %v251, %v414
  %416 = vmatmul.f32.gmra.mxu0 %v326
  %v417 = vpop.f32.mrf.mxu0
  %v418 = vadd.f32 %v254, %v417
  %419 = vmatmul.f32.gmra.mxu0 %v329
  %v420 = vpop.f32.mrf.mxu0
  %v421 = vadd.f32 %v257, %v420
  %422 = vmatmul.f32.gmra.mxu0 %v332
  %v423 = vpop.f32.mrf.mxu0
  %v424 = vadd.f32 %v260, %v423
  %425 = vmatmul.f32.gmra.mxu0 %v335
  %v426 = vpop.f32.mrf.mxu0
  %v427 = vadd.f32 %v263, %v426
  %428 = vdwg.mxu0
  %s429 = scalar_lea.vmem %s2, 32
  %v430 = vld [vmem:[%s429] sm:$0xff]
  %v431 = vld [vmem:[%s429 + $0x8] sm:$0xff]
  %v432 = vld [vmem:[%s429 + $0x10] sm:$0xff]
  %v433 = vld [vmem:[%s429 + $0x18] sm:$0xf]
  %v435 = vsel %vm172, %v433, 0
  %437 = vmatpush.msra.mxu0 0.0
  %438 = vmatpush.msra.mxu0 0.0
  %439 = vmatpush.msra.mxu0 0.0
  %440 = vmatpush.msra.mxu0 0.0
  %441 = vmatpush.msra.mxu0 0.0
  %442 = vmatpush.msra.mxu0 0.0
  %443 = vmatpush.msra.mxu0 0.0
  %444 = vmatpush.msra.mxu0 0.0
  %445 = vmatpush.msra.mxu0 0.0
  %446 = vmatpush.msra.mxu0 0.0
  %447 = vmatpush.msra.mxu0 0.0
  %448 = vmatpush.msra.mxu0 0.0
  %449 = vmatpush.msra.mxu0 %v435
  %450 = vmatpush.msra.mxu0 %v432
  %451 = vmatpush.msra.mxu0 %v431
  %452 = vmatpush.msra.mxu0 %v430
  %453 = vmatmul.f32.gmra.mxu0 %v101
  %v454 = vpop.f32.mrf.mxu0
  %v455 = vadd.f32 0.0, %v454
  %456 = vmatmul.f32.gmra.mxu0 %v104
  %v457 = vpop.f32.mrf.mxu0
  %v458 = vadd.f32 0.0, %v457
  %459 = vmatmul.f32.gmra.mxu0 %v107
  %v460 = vpop.f32.mrf.mxu0
  %v461 = vadd.f32 0.0, %v460
  %462 = vmatmul.f32.gmra.mxu0 %v110
  %v463 = vpop.f32.mrf.mxu0
  %v464 = vadd.f32 0.0, %v463
  %465 = vmatmul.f32.gmra.mxu0 %v113
  %v466 = vpop.f32.mrf.mxu0
  %v467 = vadd.f32 0.0, %v466
  %468 = vmatmul.f32.gmra.mxu0 %v116
  %v469 = vpop.f32.mrf.mxu0
  %v470 = vadd.f32 0.0, %v469
  %471 = vmatmul.f32.gmra.mxu0 %v119
  %v472 = vpop.f32.mrf.mxu0
  %v473 = vadd.f32 0.0, %v472
  %474 = vmatmul.f32.gmra.mxu0 %v122
  %v475 = vpop.f32.mrf.mxu0
  %v476 = vadd.f32 0.0, %v475
  %477 = vmatmul.f32.gmra.mxu0 %v125
  %v478 = vpop.f32.mrf.mxu0
  %v479 = vadd.f32 0.0, %v478
  %480 = vmatmul.f32.gmra.mxu0 %v128
  %v481 = vpop.f32.mrf.mxu0
  %v482 = vadd.f32 0.0, %v481
  %483 = vmatmul.f32.gmra.mxu0 %v131
  %v484 = vpop.f32.mrf.mxu0
  %v485 = vadd.f32 0.0, %v484
  %486 = vmatmul.f32.gmra.mxu0 %v134
  %v487 = vpop.f32.mrf.mxu0
  %v488 = vadd.f32 0.0, %v487
  %489 = vmatmul.f32.gmra.mxu0 %v137
  %v490 = vpop.f32.mrf.mxu0
  %v491 = vadd.f32 0.0, %v490
  %492 = vmatmul.f32.gmra.mxu0 %v140
  %v493 = vpop.f32.mrf.mxu0
  %v494 = vadd.f32 0.0, %v493
  %495 = vmatmul.f32.gmra.mxu0 %v143
  %v496 = vpop.f32.mrf.mxu0
  %v497 = vadd.f32 0.0, %v496
  %498 = vmatmul.f32.gmra.mxu0 %v146
  %v499 = vpop.f32.mrf.mxu0
  %v500 = vadd.f32 0.0, %v499
  %501 = vmatmul.f32.gmra.mxu0 %v149
  %v502 = vpop.f32.mrf.mxu0
  %v503 = vadd.f32 0.0, %v502
  %504 = vmatmul.f32.gmra.mxu0 %v152
  %v505 = vpop.f32.mrf.mxu0
  %v506 = vadd.f32 0.0, %v505
  %507 = vmatmul.f32.gmra.mxu0 %v155
  %v508 = vpop.f32.mrf.mxu0
  %v509 = vadd.f32 0.0, %v508
  %510 = vmatmul.f32.gmra.mxu0 %v158
  %v511 = vpop.f32.mrf.mxu0
  %v512 = vadd.f32 0.0, %v511
  %513 = vmatmul.f32.gmra.mxu0 %v161
  %v514 = vpop.f32.mrf.mxu0
  %v515 = vadd.f32 0.0, %v514
  %516 = vmatmul.f32.gmra.mxu0 %v164
  %v517 = vpop.f32.mrf.mxu0
  %v518 = vadd.f32 0.0, %v517
  %519 = vmatmul.f32.gmra.mxu0 %v167
  %v520 = vpop.f32.mrf.mxu0
  %v521 = vadd.f32 0.0, %v520
  %522 = vmatmul.f32.gmra.mxu0 %v170
  %v523 = vpop.f32.mrf.mxu0
  %v524 = vadd.f32 0.0, %v523
  %525 = vdwg.mxu0
  %v527 = vsel %vm172, %v69, 0
  %529 = vmatpush.msra.mxu0 0.0
  %530 = vmatpush.msra.mxu0 0.0
  %531 = vmatpush.msra.mxu0 0.0
  %532 = vmatpush.msra.mxu0 0.0
  %533 = vmatpush.msra.mxu0 0.0
  %534 = vmatpush.msra.mxu0 0.0
  %535 = vmatpush.msra.mxu0 0.0
  %536 = vmatpush.msra.mxu0 0.0
  %537 = vmatpush.msra.mxu0 0.0
  %538 = vmatpush.msra.mxu0 0.0
  %539 = vmatpush.msra.mxu0 0.0
  %540 = vmatpush.msra.mxu0 0.0
  %541 = vmatpush.msra.mxu0 %v527
  %542 = vmatpush.msra.mxu0 %v68
  %543 = vmatpush.msra.mxu0 %v67
  %544 = vmatpush.msra.mxu0 %v66
  %545 = vmatmul.f32.gmra.mxu0 %v266
  %v546 = vpop.f32.mrf.mxu0
  %v547 = vadd.f32 %v455, %v546
  %548 = vmatmul.f32.gmra.mxu0 %v269
  %v549 = vpop.f32.mrf.mxu0
  %v550 = vadd.f32 %v458, %v549
  %551 = vmatmul.f32.gmra.mxu0 %v272
  %v552 = vpop.f32.mrf.mxu0
  %v553 = vadd.f32 %v461, %v552
  %554 = vmatmul.f32.gmra.mxu0 %v275
  %v555 = vpop.f32.mrf.mxu0
  %v556 = vadd.f32 %v464, %v555
  %557 = vmatmul.f32.gmra.mxu0 %v278
  %v558 = vpop.f32.mrf.mxu0
  %v559 = vadd.f32 %v467, %v558
  %560 = vmatmul.f32.gmra.mxu0 %v281
  %v561 = vpop.f32.mrf.mxu0
  %v562 = vadd.f32 %v470, %v561
  %563 = vmatmul.f32.gmra.mxu0 %v284
  %v564 = vpop.f32.mrf.mxu0
  %v565 = vadd.f32 %v473, %v564
  %566 = vmatmul.f32.gmra.mxu0 %v287
  %v567 = vpop.f32.mrf.mxu0
  %v568 = vadd.f32 %v476, %v567
  %569 = vmatmul.f32.gmra.mxu0 %v290
  %v570 = vpop.f32.mrf.mxu0
  %v571 = vadd.f32 %v479, %v570
  %572 = vmatmul.f32.gmra.mxu0 %v293
  %v573 = vpop.f32.mrf.mxu0
  %v574 = vadd.f32 %v482, %v573
  %575 = vmatmul.f32.gmra.mxu0 %v296
  %v576 = vpop.f32.mrf.mxu0
  %v577 = vadd.f32 %v485, %v576
  %578 = vmatmul.f32.gmra.mxu0 %v299
  %v579 = vpop.f32.mrf.mxu0
  %v580 = vadd.f32 %v488, %v579
  %581 = vmatmul.f32.gmra.mxu0 %v302
  %v582 = vpop.f32.mrf.mxu0
  %v583 = vadd.f32 %v491, %v582
  %584 = vmatmul.f32.gmra.mxu0 %v305
  %v585 = vpop.f32.mrf.mxu0
  %v586 = vadd.f32 %v494, %v585
  %587 = vmatmul.f32.gmra.mxu0 %v308
  %v588 = vpop.f32.mrf.mxu0
  %v589 = vadd.f32 %v497, %v588
  %590 = vmatmul.f32.gmra.mxu0 %v311
  %v591 = vpop.f32.mrf.mxu0
  %v592 = vadd.f32 %v500, %v591
  %593 = vmatmul.f32.gmra.mxu0 %v314
  %v594 = vpop.f32.mrf.mxu0
  %v595 = vadd.f32 %v503, %v594
  %596 = vmatmul.f32.gmra.mxu0 %v317
  %v597 = vpop.f32.mrf.mxu0
  %v598 = vadd.f32 %v506, %v597
  %599 = vmatmul.f32.gmra.mxu0 %v320
  %v600 = vpop.f32.mrf.mxu0
  %v601 = vadd.f32 %v509, %v600
  %602 = vmatmul.f32.gmra.mxu0 %v323
  %v603 = vpop.f32.mrf.mxu0
  %v604 = vadd.f32 %v512, %v603
  %605 = vmatmul.f32.gmra.mxu0 %v326
  %v606 = vpop.f32.mrf.mxu0
  %v607 = vadd.f32 %v515, %v606
  %608 = vmatmul.f32.gmra.mxu0 %v329
  %v609 = vpop.f32.mrf.mxu0
  %v610 = vadd.f32 %v518, %v609
  %611 = vmatmul.f32.gmra.mxu0 %v332
  %v612 = vpop.f32.mrf.mxu0
  %v613 = vadd.f32 %v521, %v612
  %614 = vmatmul.f32.gmra.mxu0 %v335
  %v615 = vpop.f32.mrf.mxu0
  %v616 = vadd.f32 %v524, %v615
  %617 = vdwg.mxu0
  %v618 = vld [vmem:[%s0 + $0x2] sm:$0xff]
  %v619 = vld [vmem:[%s0 + $0xa] sm:$0xff]
  %v620 = vld [vmem:[%s0 + $0x12] sm:$0xff]
  %v621 = vld [vmem:[%s0 + $0x22] sm:$0xff]
  %v622 = vld [vmem:[%s0 + $0x2a] sm:$0xff]
  %v623 = vld [vmem:[%s0 + $0x32] sm:$0xff]
  %v624 = vld [vmem:[%s0 + $0x42] sm:$0xff]
  %v625 = vld [vmem:[%s0 + $0x4a] sm:$0xff]
  %v626 = vld [vmem:[%s0 + $0x52] sm:$0xff]
  %v627 = vld [vmem:[%s0 + $0x62] sm:$0xff]
  %v628 = vld [vmem:[%s0 + $0x6a] sm:$0xff]
  %v629 = vld [vmem:[%s0 + $0x72] sm:$0xff]
  %v630 = vld [vmem:[%s0 + $0x82] sm:$0xff]
  %v631 = vld [vmem:[%s0 + $0x8a] sm:$0xff]
  %v632 = vld [vmem:[%s0 + $0x92] sm:$0xff]
  %v633 = vld [vmem:[%s0 + $0xa2] sm:$0xff]
  %v634 = vld [vmem:[%s0 + $0xaa] sm:$0xff]
  %v635 = vld [vmem:[%s0 + $0xb2] sm:$0xff]
  %v636 = vld [vmem:[%s0 + $0xc2] sm:$0xff]
  %v637 = vld [vmem:[%s0 + $0xca] sm:$0xff]
  %v638 = vld [vmem:[%s0 + $0xd2] sm:$0xff]
  %v639 = vld [vmem:[%s0 + $0xe2] sm:$0xff]
  %v640 = vld [vmem:[%s0 + $0xea] sm:$0xff]
  %v641 = vld [vmem:[%s0 + $0xf2] sm:$0xff]
  %s642 = scalar_lea.vmem %s1, 64
  %v643 = vld [vmem:[%s642] sm:$0xff]
  %v644 = vld [vmem:[%s642 + $0x8] sm:$0xff]
  %v645 = vld [vmem:[%s642 + $0x10] sm:$0xff]
  %v646 = vld [vmem:[%s642 + $0x18] sm:$0xf]
  %v648 = vsel %vm99, %v618, 0
  %v651 = vsel %vm99, %v619, 0
  %v654 = vsel %vm99, %v620, 0
  %v657 = vsel %vm99, %v621, 0
  %v660 = vsel %vm99, %v622, 0
  %v663 = vsel %vm99, %v623, 0
  %v666 = vsel %vm99, %v624, 0
  %v669 = vsel %vm99, %v625, 0
  %v672 = vsel %vm99, %v626, 0
  %v675 = vsel %vm99, %v627, 0
  %v678 = vsel %vm99, %v628, 0
  %v681 = vsel %vm99, %v629, 0
  %v684 = vsel %vm99, %v630, 0
  %v687 = vsel %vm99, %v631, 0
  %v690 = vsel %vm99, %v632, 0
  %v693 = vsel %vm99, %v633, 0
  %v696 = vsel %vm99, %v634, 0
  %v699 = vsel %vm99, %v635, 0
  %v702 = vsel %vm99, %v636, 0
  %v705 = vsel %vm99, %v637, 0
  %v708 = vsel %vm99, %v638, 0
  %v711 = vsel %vm99, %v639, 0
  %v714 = vsel %vm99, %v640, 0
  %v717 = vsel %vm99, %v641, 0
  %v720 = vsel %vm172, %v646, 0
  %722 = vmatpush.msra.mxu0 0.0
  %723 = vmatpush.msra.mxu0 0.0
  %724 = vmatpush.msra.mxu0 0.0
  %725 = vmatpush.msra.mxu0 0.0
  %726 = vmatpush.msra.mxu0 0.0
  %727 = vmatpush.msra.mxu0 0.0
  %728 = vmatpush.msra.mxu0 0.0
  %729 = vmatpush.msra.mxu0 0.0
  %730 = vmatpush.msra.mxu0 0.0
  %731 = vmatpush.msra.mxu0 0.0
  %732 = vmatpush.msra.mxu0 0.0
  %733 = vmatpush.msra.mxu0 0.0
  %734 = vmatpush.msra.mxu0 %v720
  %735 = vmatpush.msra.mxu0 %v645
  %736 = vmatpush.msra.mxu0 %v644
  %737 = vmatpush.msra.mxu0 %v643
  %738 = vmatmul.f32.gmra.mxu0 %v648
  %v739 = vpop.f32.mrf.mxu0
  %v740 = vadd.f32 0.0, %v739
  %741 = vmatmul.f32.gmra.mxu0 %v651
  %v742 = vpop.f32.mrf.mxu0
  %v743 = vadd.f32 0.0, %v742
  %744 = vmatmul.f32.gmra.mxu0 %v654
  %v745 = vpop.f32.mrf.mxu0
  %v746 = vadd.f32 0.0, %v745
  %747 = vmatmul.f32.gmra.mxu0 %v657
  %v748 = vpop.f32.mrf.mxu0
  %v749 = vadd.f32 0.0, %v748
  %750 = vmatmul.f32.gmra.mxu0 %v660
  %v751 = vpop.f32.mrf.mxu0
  %v752 = vadd.f32 0.0, %v751
  %753 = vmatmul.f32.gmra.mxu0 %v663
  %v754 = vpop.f32.mrf.mxu0
  %v755 = vadd.f32 0.0, %v754
  %756 = vmatmul.f32.gmra.mxu0 %v666
  %v757 = vpop.f32.mrf.mxu0
  %v758 = vadd.f32 0.0, %v757
  %759 = vmatmul.f32.gmra.mxu0 %v669
  %v760 = vpop.f32.mrf.mxu0
  %v761 = vadd.f32 0.0, %v760
  %762 = vmatmul.f32.gmra.mxu0 %v672
  %v763 = vpop.f32.mrf.mxu0
  %v764 = vadd.f32 0.0, %v763
  %765 = vmatmul.f32.gmra.mxu0 %v675
  %v766 = vpop.f32.mrf.mxu0
  %v767 = vadd.f32 0.0, %v766
  %768 = vmatmul.f32.gmra.mxu0 %v678
  %v769 = vpop.f32.mrf.mxu0
  %v770 = vadd.f32 0.0, %v769
  %771 = vmatmul.f32.gmra.mxu0 %v681
  %v772 = vpop.f32.mrf.mxu0
  %v773 = vadd.f32 0.0, %v772
  %774 = vmatmul.f32.gmra.mxu0 %v684
  %v775 = vpop.f32.mrf.mxu0
  %v776 = vadd.f32 0.0, %v775
  %777 = vmatmul.f32.gmra.mxu0 %v687
  %v778 = vpop.f32.mrf.mxu0
  %v779 = vadd.f32 0.0, %v778
  %780 = vmatmul.f32.gmra.mxu0 %v690
  %v781 = vpop.f32.mrf.mxu0
  %v782 = vadd.f32 0.0, %v781
  %783 = vmatmul.f32.gmra.mxu0 %v693
  %v784 = vpop.f32.mrf.mxu0
  %v785 = vadd.f32 0.0, %v784
  %786 = vmatmul.f32.gmra.mxu0 %v696
  %v787 = vpop.f32.mrf.mxu0
  %v788 = vadd.f32 0.0, %v787
  %789 = vmatmul.f32.gmra.mxu0 %v699
  %v790 = vpop.f32.mrf.mxu0
  %v791 = vadd.f32 0.0, %v790
  %792 = vmatmul.f32.gmra.mxu0 %v702
  %v793 = vpop.f32.mrf.mxu0
  %v794 = vadd.f32 0.0, %v793
  %795 = vmatmul.f32.gmra.mxu0 %v705
  %v796 = vpop.f32.mrf.mxu0
  %v797 = vadd.f32 0.0, %v796
  %798 = vmatmul.f32.gmra.mxu0 %v708
  %v799 = vpop.f32.mrf.mxu0
  %v800 = vadd.f32 0.0, %v799
  %801 = vmatmul.f32.gmra.mxu0 %v711
  %v802 = vpop.f32.mrf.mxu0
  %v803 = vadd.f32 0.0, %v802
  %804 = vmatmul.f32.gmra.mxu0 %v714
  %v805 = vpop.f32.mrf.mxu0
  %v806 = vadd.f32 0.0, %v805
  %807 = vmatmul.f32.gmra.mxu0 %v717
  %v808 = vpop.f32.mrf.mxu0
  %v809 = vadd.f32 0.0, %v808
  %810 = vdwg.mxu0
  %v811 = vadd.f32 %v358, %v740
  %v812 = vadd.f32 %v361, %v743
  %v813 = vadd.f32 %v364, %v746
  %v814 = vadd.f32 %v367, %v749
  %v815 = vadd.f32 %v370, %v752
  %v816 = vadd.f32 %v373, %v755
  %v817 = vadd.f32 %v376, %v758
  %v818 = vadd.f32 %v379, %v761
  %v819 = vadd.f32 %v382, %v764
  %v820 = vadd.f32 %v385, %v767
  %v821 = vadd.f32 %v388, %v770
  %v822 = vadd.f32 %v391, %v773
  %v823 = vadd.f32 %v394, %v776
  %v824 = vadd.f32 %v397, %v779
  %v825 = vadd.f32 %v400, %v782
  %v826 = vadd.f32 %v403, %v785
  %v827 = vadd.f32 %v406, %v788
  %v828 = vadd.f32 %v409, %v791
  %v829 = vadd.f32 %v412, %v794
  %v830 = vadd.f32 %v415, %v797
  %v831 = vadd.f32 %v418, %v800
  %v832 = vadd.f32 %v421, %v803
  %v833 = vadd.f32 %v424, %v806
  %v834 = vadd.f32 %v427, %v809
  %s835 = scalar_lea.vmem %s2, 64
  %v836 = vld [vmem:[%s835] sm:$0xff]
  %v837 = vld [vmem:[%s835 + $0x8] sm:$0xff]
  %v838 = vld [vmem:[%s835 + $0x10] sm:$0xff]
  %v839 = vld [vmem:[%s835 + $0x18] sm:$0xf]
  %v841 = vsel %vm172, %v839, 0
  %843 = vmatpush.msra.mxu0 0.0
  %844 = vmatpush.msra.mxu0 0.0
  %845 = vmatpush.msra.mxu0 0.0
  %846 = vmatpush.msra.mxu0 0.0
  %847 = vmatpush.msra.mxu0 0.0
  %848 = vmatpush.msra.mxu0 0.0
  %849 = vmatpush.msra.mxu0 0.0
  %850 = vmatpush.msra.mxu0 0.0
  %851 = vmatpush.msra.mxu0 0.0
  %852 = vmatpush.msra.mxu0 0.0
  %853 = vmatpush.msra.mxu0 0.0
  %854 = vmatpush.msra.mxu0 0.0
  %855 = vmatpush.msra.mxu0 %v841
  %856 = vmatpush.msra.mxu0 %v838
  %857 = vmatpush.msra.mxu0 %v837
  %858 = vmatpush.msra.mxu0 %v836
  %859 = vmatmul.f32.gmra.mxu0 %v648
  %v860 = vpop.f32.mrf.mxu0
  %v861 = vadd.f32 0.0, %v860
  %862 = vmatmul.f32.gmra.mxu0 %v651
  %v863 = vpop.f32.mrf.mxu0
  %v864 = vadd.f32 0.0, %v863
  %865 = vmatmul.f32.gmra.mxu0 %v654
  %v866 = vpop.f32.mrf.mxu0
  %v867 = vadd.f32 0.0, %v866
  %868 = vmatmul.f32.gmra.mxu0 %v657
  %v869 = vpop.f32.mrf.mxu0
  %v870 = vadd.f32 0.0, %v869
  %871 = vmatmul.f32.gmra.mxu0 %v660
  %v872 = vpop.f32.mrf.mxu0
  %v873 = vadd.f32 0.0, %v872
  %874 = vmatmul.f32.gmra.mxu0 %v663
  %v875 = vpop.f32.mrf.mxu0
  %v876 = vadd.f32 0.0, %v875
  %877 = vmatmul.f32.gmra.mxu0 %v666
  %v878 = vpop.f32.mrf.mxu0
  %v879 = vadd.f32 0.0, %v878
  %880 = vmatmul.f32.gmra.mxu0 %v669
  %v881 = vpop.f32.mrf.mxu0
  %v882 = vadd.f32 0.0, %v881
  %883 = vmatmul.f32.gmra.mxu0 %v672
  %v884 = vpop.f32.mrf.mxu0
  %v885 = vadd.f32 0.0, %v884
  %886 = vmatmul.f32.gmra.mxu0 %v675
  %v887 = vpop.f32.mrf.mxu0
  %v888 = vadd.f32 0.0, %v887
  %889 = vmatmul.f32.gmra.mxu0 %v678
  %v890 = vpop.f32.mrf.mxu0
  %v891 = vadd.f32 0.0, %v890
  %892 = vmatmul.f32.gmra.mxu0 %v681
  %v893 = vpop.f32.mrf.mxu0
  %v894 = vadd.f32 0.0, %v893
  %895 = vmatmul.f32.gmra.mxu0 %v684
  %v896 = vpop.f32.mrf.mxu0
  %v897 = vadd.f32 0.0, %v896
  %898 = vmatmul.f32.gmra.mxu0 %v687
  %v899 = vpop.f32.mrf.mxu0
  %v900 = vadd.f32 0.0, %v899
  %901 = vmatmul.f32.gmra.mxu0 %v690
  %v902 = vpop.f32.mrf.mxu0
  %v903 = vadd.f32 0.0, %v902
  %904 = vmatmul.f32.gmra.mxu0 %v693
  %v905 = vpop.f32.mrf.mxu0
  %v906 = vadd.f32 0.0, %v905
  %907 = vmatmul.f32.gmra.mxu0 %v696
  %v908 = vpop.f32.mrf.mxu0
  %v909 = vadd.f32 0.0, %v908
  %910 = vmatmul.f32.gmra.mxu0 %v699
  %v911 = vpop.f32.mrf.mxu0
  %v912 = vadd.f32 0.0, %v911
  %913 = vmatmul.f32.gmra.mxu0 %v702
  %v914 = vpop.f32.mrf.mxu0
  %v915 = vadd.f32 0.0, %v914
  %916 = vmatmul.f32.gmra.mxu0 %v705
  %v917 = vpop.f32.mrf.mxu0
  %v918 = vadd.f32 0.0, %v917
  %919 = vmatmul.f32.gmra.mxu0 %v708
  %v920 = vpop.f32.mrf.mxu0
  %v921 = vadd.f32 0.0, %v920
  %922 = vmatmul.f32.gmra.mxu0 %v711
  %v923 = vpop.f32.mrf.mxu0
  %v924 = vadd.f32 0.0, %v923
  %925 = vmatmul.f32.gmra.mxu0 %v714
  %v926 = vpop.f32.mrf.mxu0
  %v927 = vadd.f32 0.0, %v926
  %928 = vmatmul.f32.gmra.mxu0 %v717
  %v929 = vpop.f32.mrf.mxu0
  %v930 = vadd.f32 0.0, %v929
  %931 = vdwg.mxu0
  %v932 = vadd.f32 %v547, %v861
  %v933 = vadd.f32 %v550, %v864
  %v934 = vadd.f32 %v553, %v867
  %v935 = vadd.f32 %v556, %v870
  %v936 = vadd.f32 %v559, %v873
  %v937 = vadd.f32 %v562, %v876
  %v938 = vadd.f32 %v565, %v879
  %v939 = vadd.f32 %v568, %v882
  %v940 = vadd.f32 %v571, %v885
  %v941 = vadd.f32 %v574, %v888
  %v942 = vadd.f32 %v577, %v891
  %v943 = vadd.f32 %v580, %v894
  %v944 = vadd.f32 %v583, %v897
  %v945 = vadd.f32 %v586, %v900
  %v946 = vadd.f32 %v589, %v903
  %v947 = vadd.f32 %v592, %v906
  %v948 = vadd.f32 %v595, %v909
  %v949 = vadd.f32 %v598, %v912
  %v950 = vadd.f32 %v601, %v915
  %v951 = vadd.f32 %v604, %v918
  %v952 = vadd.f32 %v607, %v921
  %v953 = vadd.f32 %v610, %v924
  %v954 = vadd.f32 %v613, %v927
  %v955 = vadd.f32 %v616, %v930
  %v956 = vld [vmem:[%s0 + $0x3] sm:$0xff]
  %v957 = vld [vmem:[%s0 + $0xb] sm:$0xff]
  %v958 = vld [vmem:[%s0 + $0x13] sm:$0xff]
  %v959 = vld [vmem:[%s0 + $0x23] sm:$0xff]
  %v960 = vld [vmem:[%s0 + $0x2b] sm:$0xff]
  %v961 = vld [vmem:[%s0 + $0x33] sm:$0xff]
  %v962 = vld [vmem:[%s0 + $0x43] sm:$0xff]
  %v963 = vld [vmem:[%s0 + $0x4b] sm:$0xff]
  %v964 = vld [vmem:[%s0 + $0x53] sm:$0xff]
  %v965 = vld [vmem:[%s0 + $0x63] sm:$0xff]
  %v966 = vld [vmem:[%s0 + $0x6b] sm:$0xff]
  %v967 = vld [vmem:[%s0 + $0x73] sm:$0xff]
  %v968 = vld [vmem:[%s0 + $0x83] sm:$0xff]
  %v969 = vld [vmem:[%s0 + $0x8b] sm:$0xff]
  %v970 = vld [vmem:[%s0 + $0x93] sm:$0xff]
  %v971 = vld [vmem:[%s0 + $0xa3] sm:$0xff]
  %v972 = vld [vmem:[%s0 + $0xab] sm:$0xff]
  %v973 = vld [vmem:[%s0 + $0xb3] sm:$0xff]
  %v974 = vld [vmem:[%s0 + $0xc3] sm:$0xff]
  %v975 = vld [vmem:[%s0 + $0xcb] sm:$0xff]
  %v976 = vld [vmem:[%s0 + $0xd3] sm:$0xff]
  %v977 = vld [vmem:[%s0 + $0xe3] sm:$0xff]
  %v978 = vld [vmem:[%s0 + $0xeb] sm:$0xff]
  %v979 = vld [vmem:[%s0 + $0xf3] sm:$0xff]
  %s980 = scalar_lea.vmem %s1, 96
  %v981 = vld [vmem:[%s980] sm:$0xff]
  %v982 = vld [vmem:[%s980 + $0x8] sm:$0xff]
  %v983 = vld [vmem:[%s980 + $0x10] sm:$0xff]
  %v984 = vld [vmem:[%s980 + $0x18] sm:$0xf]
  %v986 = vsel %vm99, %v956, 0
  %v989 = vsel %vm99, %v957, 0
  %v992 = vsel %vm99, %v958, 0
  %v995 = vsel %vm99, %v959, 0
  %v998 = vsel %vm99, %v960, 0
  %v1001 = vsel %vm99, %v961, 0
  %v1004 = vsel %vm99, %v962, 0
  %v1007 = vsel %vm99, %v963, 0
  %v1010 = vsel %vm99, %v964, 0
  %v1013 = vsel %vm99, %v965, 0
  %v1016 = vsel %vm99, %v966, 0
  %v1019 = vsel %vm99, %v967, 0
  %v1022 = vsel %vm99, %v968, 0
  %v1025 = vsel %vm99, %v969, 0
  %v1028 = vsel %vm99, %v970, 0
  %v1031 = vsel %vm99, %v971, 0
  %v1034 = vsel %vm99, %v972, 0
  %v1037 = vsel %vm99, %v973, 0
  %v1040 = vsel %vm99, %v974, 0
  %v1043 = vsel %vm99, %v975, 0
  %v1046 = vsel %vm99, %v976, 0
  %v1049 = vsel %vm99, %v977, 0
  %v1052 = vsel %vm99, %v978, 0
  %v1055 = vsel %vm99, %v979, 0
  %v1058 = vsel %vm172, %v984, 0
  %1060 = vmatpush.msra.mxu0 0.0
  %1061 = vmatpush.msra.mxu0 0.0
  %1062 = vmatpush.msra.mxu0 0.0
  %1063 = vmatpush.msra.mxu0 0.0
  %1064 = vmatpush.msra.mxu0 0.0
  %1065 = vmatpush.msra.mxu0 0.0
  %1066 = vmatpush.msra.mxu0 0.0
  %1067 = vmatpush.msra.mxu0 0.0
  %1068 = vmatpush.msra.mxu0 0.0
  %1069 = vmatpush.msra.mxu0 0.0
  %1070 = vmatpush.msra.mxu0 0.0
  %1071 = vmatpush.msra.mxu0 0.0
  %1072 = vmatpush.msra.mxu0 %v1058
  %1073 = vmatpush.msra.mxu0 %v983
  %1074 = vmatpush.msra.mxu0 %v982
  %1075 = vmatpush.msra.mxu0 %v981
  %1076 = vmatmul.f32.gmra.mxu0 %v986
  %v1077 = vpop.f32.mrf.mxu0
  %v1078 = vadd.f32 0.0, %v1077
  %1079 = vmatmul.f32.gmra.mxu0 %v989
  %v1080 = vpop.f32.mrf.mxu0
  %v1081 = vadd.f32 0.0, %v1080
  %1082 = vmatmul.f32.gmra.mxu0 %v992
  %v1083 = vpop.f32.mrf.mxu0
  %v1084 = vadd.f32 0.0, %v1083
  %1085 = vmatmul.f32.gmra.mxu0 %v995
  %v1086 = vpop.f32.mrf.mxu0
  %v1087 = vadd.f32 0.0, %v1086
  %1088 = vmatmul.f32.gmra.mxu0 %v998
  %v1089 = vpop.f32.mrf.mxu0
  %v1090 = vadd.f32 0.0, %v1089
  %1091 = vmatmul.f32.gmra.mxu0 %v1001
  %v1092 = vpop.f32.mrf.mxu0
  %v1093 = vadd.f32 0.0, %v1092
  %1094 = vmatmul.f32.gmra.mxu0 %v1004
  %v1095 = vpop.f32.mrf.mxu0
  %v1096 = vadd.f32 0.0, %v1095
  %1097 = vmatmul.f32.gmra.mxu0 %v1007
  %v1098 = vpop.f32.mrf.mxu0
  %v1099 = vadd.f32 0.0, %v1098
  %1100 = vmatmul.f32.gmra.mxu0 %v1010
  %v1101 = vpop.f32.mrf.mxu0
  %v1102 = vadd.f32 0.0, %v1101
  %1103 = vmatmul.f32.gmra.mxu0 %v1013
  %v1104 = vpop.f32.mrf.mxu0
  %v1105 = vadd.f32 0.0, %v1104
  %1106 = vmatmul.f32.gmra.mxu0 %v1016
  %v1107 = vpop.f32.mrf.mxu0
  %v1108 = vadd.f32 0.0, %v1107
  %1109 = vmatmul.f32.gmra.mxu0 %v1019
  %v1110 = vpop.f32.mrf.mxu0
  %v1111 = vadd.f32 0.0, %v1110
  %1112 = vmatmul.f32.gmra.mxu0 %v1022
  %v1113 = vpop.f32.mrf.mxu0
  %v1114 = vadd.f32 0.0, %v1113
  %1115 = vmatmul.f32.gmra.mxu0 %v1025
  %v1116 = vpop.f32.mrf.mxu0
  %v1117 = vadd.f32 0.0, %v1116
  %1118 = vmatmul.f32.gmra.mxu0 %v1028
  %v1119 = vpop.f32.mrf.mxu0
  %v1120 = vadd.f32 0.0, %v1119
  %1121 = vmatmul.f32.gmra.mxu0 %v1031
  %v1122 = vpop.f32.mrf.mxu0
  %v1123 = vadd.f32 0.0, %v1122
  %1124 = vmatmul.f32.gmra.mxu0 %v1034
  %v1125 = vpop.f32.mrf.mxu0
  %v1126 = vadd.f32 0.0, %v1125
  %1127 = vmatmul.f32.gmra.mxu0 %v1037
  %v1128 = vpop.f32.mrf.mxu0
  %v1129 = vadd.f32 0.0, %v1128
  %1130 = vmatmul.f32.gmra.mxu0 %v1040
  %v1131 = vpop.f32.mrf.mxu0
  %v1132 = vadd.f32 0.0, %v1131
  %1133 = vmatmul.f32.gmra.mxu0 %v1043
  %v1134 = vpop.f32.mrf.mxu0
  %v1135 = vadd.f32 0.0, %v1134
  %1136 = vmatmul.f32.gmra.mxu0 %v1046
  %v1137 = vpop.f32.mrf.mxu0
  %v1138 = vadd.f32 0.0, %v1137
  %1139 = vmatmul.f32.gmra.mxu0 %v1049
  %v1140 = vpop.f32.mrf.mxu0
  %v1141 = vadd.f32 0.0, %v1140
  %1142 = vmatmul.f32.gmra.mxu0 %v1052
  %v1143 = vpop.f32.mrf.mxu0
  %v1144 = vadd.f32 0.0, %v1143
  %1145 = vmatmul.f32.gmra.mxu0 %v1055
  %v1146 = vpop.f32.mrf.mxu0
  %v1147 = vadd.f32 0.0, %v1146
  %1148 = vdwg.mxu0
  %v1149 = vadd.f32 %v811, %v1078
  %v1150 = vadd.f32 %v812, %v1081
  %v1151 = vadd.f32 %v813, %v1084
  %v1152 = vadd.f32 %v814, %v1087
  %v1153 = vadd.f32 %v815, %v1090
  %v1154 = vadd.f32 %v816, %v1093
  %v1155 = vadd.f32 %v817, %v1096
  %v1156 = vadd.f32 %v818, %v1099
  %v1157 = vadd.f32 %v819, %v1102
  %v1158 = vadd.f32 %v820, %v1105
  %v1159 = vadd.f32 %v821, %v1108
  %v1160 = vadd.f32 %v822, %v1111
  %v1161 = vadd.f32 %v823, %v1114
  %v1162 = vadd.f32 %v824, %v1117
  %v1163 = vadd.f32 %v825, %v1120
  %v1164 = vadd.f32 %v826, %v1123
  %v1165 = vadd.f32 %v827, %v1126
  %v1166 = vadd.f32 %v828, %v1129
  %v1167 = vadd.f32 %v829, %v1132
  %v1168 = vadd.f32 %v830, %v1135
  %v1169 = vadd.f32 %v831, %v1138
  %v1170 = vadd.f32 %v832, %v1141
  %v1171 = vadd.f32 %v833, %v1144
  %v1172 = vadd.f32 %v834, %v1147
  %s1173 = scalar_lea.vmem %s2, 96
  %v1174 = vld [vmem:[%s1173] sm:$0xff]
  %v1175 = vld [vmem:[%s1173 + $0x8] sm:$0xff]
  %v1176 = vld [vmem:[%s1173 + $0x10] sm:$0xff]
  %v1177 = vld [vmem:[%s1173 + $0x18] sm:$0xf]
  %v1179 = vsel %vm172, %v1177, 0
  %1181 = vmatpush.msra.mxu0 0.0
  %1182 = vmatpush.msra.mxu0 0.0
  %1183 = vmatpush.msra.mxu0 0.0
  %1184 = vmatpush.msra.mxu0 0.0
  %1185 = vmatpush.msra.mxu0 0.0
  %1186 = vmatpush.msra.mxu0 0.0
  %1187 = vmatpush.msra.mxu0 0.0
  %1188 = vmatpush.msra.mxu0 0.0
  %1189 = vmatpush.msra.mxu0 0.0
  %1190 = vmatpush.msra.mxu0 0.0
  %1191 = vmatpush.msra.mxu0 0.0
  %1192 = vmatpush.msra.mxu0 0.0
  %1193 = vmatpush.msra.mxu0 %v1179
  %1194 = vmatpush.msra.mxu0 %v1176
  %1195 = vmatpush.msra.mxu0 %v1175
  %1196 = vmatpush.msra.mxu0 %v1174
  %1197 = vmatmul.f32.gmra.mxu0 %v986
  %v1198 = vpop.f32.mrf.mxu0
  %v1199 = vadd.f32 0.0, %v1198
  %1200 = vmatmul.f32.gmra.mxu0 %v989
  %v1201 = vpop.f32.mrf.mxu0
  %v1202 = vadd.f32 0.0, %v1201
  %1203 = vmatmul.f32.gmra.mxu0 %v992
  %v1204 = vpop.f32.mrf.mxu0
  %v1205 = vadd.f32 0.0, %v1204
  %1206 = vmatmul.f32.gmra.mxu0 %v995
  %v1207 = vpop.f32.mrf.mxu0
  %v1208 = vadd.f32 0.0, %v1207
  %1209 = vmatmul.f32.gmra.mxu0 %v998
  %v1210 = vpop.f32.mrf.mxu0
  %v1211 = vadd.f32 0.0, %v1210
  %1212 = vmatmul.f32.gmra.mxu0 %v1001
  %v1213 = vpop.f32.mrf.mxu0
  %v1214 = vadd.f32 0.0, %v1213
  %1215 = vmatmul.f32.gmra.mxu0 %v1004
  %v1216 = vpop.f32.mrf.mxu0
  %v1217 = vadd.f32 0.0, %v1216
  %1218 = vmatmul.f32.gmra.mxu0 %v1007
  %v1219 = vpop.f32.mrf.mxu0
  %v1220 = vadd.f32 0.0, %v1219
  %1221 = vmatmul.f32.gmra.mxu0 %v1010
  %v1222 = vpop.f32.mrf.mxu0
  %v1223 = vadd.f32 0.0, %v1222
  %1224 = vmatmul.f32.gmra.mxu0 %v1013
  %v1225 = vpop.f32.mrf.mxu0
  %v1226 = vadd.f32 0.0, %v1225
  %1227 = vmatmul.f32.gmra.mxu0 %v1016
  %v1228 = vpop.f32.mrf.mxu0
  %v1229 = vadd.f32 0.0, %v1228
  %1230 = vmatmul.f32.gmra.mxu0 %v1019
  %v1231 = vpop.f32.mrf.mxu0
  %v1232 = vadd.f32 0.0, %v1231
  %1233 = vmatmul.f32.gmra.mxu0 %v1022
  %v1234 = vpop.f32.mrf.mxu0
  %v1235 = vadd.f32 0.0, %v1234
  %1236 = vmatmul.f32.gmra.mxu0 %v1025
  %v1237 = vpop.f32.mrf.mxu0
  %v1238 = vadd.f32 0.0, %v1237
  %1239 = vmatmul.f32.gmra.mxu0 %v1028
  %v1240 = vpop.f32.mrf.mxu0
  %v1241 = vadd.f32 0.0, %v1240
  %1242 = vmatmul.f32.gmra.mxu0 %v1031
  %v1243 = vpop.f32.mrf.mxu0
  %v1244 = vadd.f32 0.0, %v1243
  %1245 = vmatmul.f32.gmra.mxu0 %v1034
  %v1246 = vpop.f32.mrf.mxu0
  %v1247 = vadd.f32 0.0, %v1246
  %1248 = vmatmul.f32.gmra.mxu0 %v1037
  %v1249 = vpop.f32.mrf.mxu0
  %v1250 = vadd.f32 0.0, %v1249
  %1251 = vmatmul.f32.gmra.mxu0 %v1040
  %v1252 = vpop.f32.mrf.mxu0
  %v1253 = vadd.f32 0.0, %v1252
  %1254 = vmatmul.f32.gmra.mxu0 %v1043
  %v1255 = vpop.f32.mrf.mxu0
  %v1256 = vadd.f32 0.0, %v1255
  %1257 = vmatmul.f32.gmra.mxu0 %v1046
  %v1258 = vpop.f32.mrf.mxu0
  %v1259 = vadd.f32 0.0, %v1258
  %1260 = vmatmul.f32.gmra.mxu0 %v1049
  %v1261 = vpop.f32.mrf.mxu0
  %v1262 = vadd.f32 0.0, %v1261
  %1263 = vmatmul.f32.gmra.mxu0 %v1052
  %v1264 = vpop.f32.mrf.mxu0
  %v1265 = vadd.f32 0.0, %v1264
  %1266 = vmatmul.f32.gmra.mxu0 %v1055
  %v1267 = vpop.f32.mrf.mxu0
  %v1268 = vadd.f32 0.0, %v1267
  %1269 = vdwg.mxu0
  %v1270 = vadd.f32 %v932, %v1199
  %v1271 = vadd.f32 %v933, %v1202
  %v1272 = vadd.f32 %v934, %v1205
  %v1273 = vadd.f32 %v935, %v1208
  %v1274 = vadd.f32 %v936, %v1211
  %v1275 = vadd.f32 %v937, %v1214
  %v1276 = vadd.f32 %v938, %v1217
  %v1277 = vadd.f32 %v939, %v1220
  %v1278 = vadd.f32 %v940, %v1223
  %v1279 = vadd.f32 %v941, %v1226
  %v1280 = vadd.f32 %v942, %v1229
  %v1281 = vadd.f32 %v943, %v1232
  %v1282 = vadd.f32 %v944, %v1235
  %v1283 = vadd.f32 %v945, %v1238
  %v1284 = vadd.f32 %v946, %v1241
  %v1285 = vadd.f32 %v947, %v1244
  %v1286 = vadd.f32 %v948, %v1247
  %v1287 = vadd.f32 %v949, %v1250
  %v1288 = vadd.f32 %v950, %v1253
  %v1289 = vadd.f32 %v951, %v1256
  %v1290 = vadd.f32 %v952, %v1259
  %v1291 = vadd.f32 %v953, %v1262
  %v1292 = vadd.f32 %v954, %v1265
  %v1293 = vadd.f32 %v955, %v1268
  %v1294 = vld [vmem:[%s0 + $0x4] sm:$0xff]
  %v1295 = vld [vmem:[%s0 + $0xc] sm:$0xff]
  %v1296 = vld [vmem:[%s0 + $0x14] sm:$0xff]
  %v1297 = vld [vmem:[%s0 + $0x24] sm:$0xff]
  %v1298 = vld [vmem:[%s0 + $0x2c] sm:$0xff]
  %v1299 = vld [vmem:[%s0 + $0x34] sm:$0xff]
  %v1300 = vld [vmem:[%s0 + $0x44] sm:$0xff]
  %v1301 = vld [vmem:[%s0 + $0x4c] sm:$0xff]
  %v1302 = vld [vmem:[%s0 + $0x54] sm:$0xff]
  %v1303 = vld [vmem:[%s0 + $0x64] sm:$0xff]
  %v1304 = vld [vmem:[%s0 + $0x6c] sm:$0xff]
  %v1305 = vld [vmem:[%s0 + $0x74] sm:$0xff]
  %v1306 = vld [vmem:[%s0 + $0x84] sm:$0xff]
  %v1307 = vld [vmem:[%s0 + $0x8c] sm:$0xff]
  %v1308 = vld [vmem:[%s0 + $0x94] sm:$0xff]
  %v1309 = vld [vmem:[%s0 + $0xa4] sm:$0xff]
  %v1310 = vld [vmem:[%s0 + $0xac] sm:$0xff]
  %v1311 = vld [vmem:[%s0 + $0xb4] sm:$0xff]
  %v1312 = vld [vmem:[%s0 + $0xc4] sm:$0xff]
  %v1313 = vld [vmem:[%s0 + $0xcc] sm:$0xff]
  %v1314 = vld [vmem:[%s0 + $0xd4] sm:$0xff]
  %v1315 = vld [vmem:[%s0 + $0xe4] sm:$0xff]
  %v1316 = vld [vmem:[%s0 + $0xec] sm:$0xff]
  %v1317 = vld [vmem:[%s0 + $0xf4] sm:$0xff]
  %s1318 = scalar_lea.vmem %s1, 128
  %v1319 = vld [vmem:[%s1318] sm:$0xff]
  %v1320 = vld [vmem:[%s1318 + $0x8] sm:$0xff]
  %v1321 = vld [vmem:[%s1318 + $0x10] sm:$0xff]
  %v1322 = vld [vmem:[%s1318 + $0x18] sm:$0xf]
  %v1324 = vsel %vm99, %v1294, 0
  %v1327 = vsel %vm99, %v1295, 0
  %v1330 = vsel %vm99, %v1296, 0
  %v1333 = vsel %vm99, %v1297, 0
  %v1336 = vsel %vm99, %v1298, 0
  %v1339 = vsel %vm99, %v1299, 0
  %v1342 = vsel %vm99, %v1300, 0
  %v1345 = vsel %vm99, %v1301, 0
  %v1348 = vsel %vm99, %v1302, 0
  %v1351 = vsel %vm99, %v1303, 0
  %v1354 = vsel %vm99, %v1304, 0
  %v1357 = vsel %vm99, %v1305, 0
  %v1360 = vsel %vm99, %v1306, 0
  %v1363 = vsel %vm99, %v1307, 0
  %v1366 = vsel %vm99, %v1308, 0
  %v1369 = vsel %vm99, %v1309, 0
  %v1372 = vsel %vm99, %v1310, 0
  %v1375 = vsel %vm99, %v1311, 0
  %v1378 = vsel %vm99, %v1312, 0
  %v1381 = vsel %vm99, %v1313, 0
  %v1384 = vsel %vm99, %v1314, 0
  %v1387 = vsel %vm99, %v1315, 0
  %v1390 = vsel %vm99, %v1316, 0
  %v1393 = vsel %vm99, %v1317, 0
  %v1396 = vsel %vm172, %v1322, 0
  %1398 = vmatpush.msra.mxu0 0.0
  %1399 = vmatpush.msra.mxu0 0.0
  %1400 = vmatpush.msra.mxu0 0.0
  %1401 = vmatpush.msra.mxu0 0.0
  %1402 = vmatpush.msra.mxu0 0.0
  %1403 = vmatpush.msra.mxu0 0.0
  %1404 = vmatpush.msra.mxu0 0.0
  %1405 = vmatpush.msra.mxu0 0.0
  %1406 = vmatpush.msra.mxu0 0.0
  %1407 = vmatpush.msra.mxu0 0.0
  %1408 = vmatpush.msra.mxu0 0.0
  %1409 = vmatpush.msra.mxu0 0.0
  %1410 = vmatpush.msra.mxu0 %v1396
  %1411 = vmatpush.msra.mxu0 %v1321
  %1412 = vmatpush.msra.mxu0 %v1320
  %1413 = vmatpush.msra.mxu0 %v1319
  %1414 = vmatmul.f32.gmra.mxu0 %v1324
  %v1415 = vpop.f32.mrf.mxu0
  %v1416 = vadd.f32 0.0, %v1415
  %1417 = vmatmul.f32.gmra.mxu0 %v1327
  %v1418 = vpop.f32.mrf.mxu0
  %v1419 = vadd.f32 0.0, %v1418
  %1420 = vmatmul.f32.gmra.mxu0 %v1330
  %v1421 = vpop.f32.mrf.mxu0
  %v1422 = vadd.f32 0.0, %v1421
  %1423 = vmatmul.f32.gmra.mxu0 %v1333
  %v1424 = vpop.f32.mrf.mxu0
  %v1425 = vadd.f32 0.0, %v1424
  %1426 = vmatmul.f32.gmra.mxu0 %v1336
  %v1427 = vpop.f32.mrf.mxu0
  %v1428 = vadd.f32 0.0, %v1427
  %1429 = vmatmul.f32.gmra.mxu0 %v1339
  %v1430 = vpop.f32.mrf.mxu0
  %v1431 = vadd.f32 0.0, %v1430
  %1432 = vmatmul.f32.gmra.mxu0 %v1342
  %v1433 = vpop.f32.mrf.mxu0
  %v1434 = vadd.f32 0.0, %v1433
  %1435 = vmatmul.f32.gmra.mxu0 %v1345
  %v1436 = vpop.f32.mrf.mxu0
  %v1437 = vadd.f32 0.0, %v1436
  %1438 = vmatmul.f32.gmra.mxu0 %v1348
  %v1439 = vpop.f32.mrf.mxu0
  %v1440 = vadd.f32 0.0, %v1439
  %1441 = vmatmul.f32.gmra.mxu0 %v1351
  %v1442 = vpop.f32.mrf.mxu0
  %v1443 = vadd.f32 0.0, %v1442
  %1444 = vmatmul.f32.gmra.mxu0 %v1354
  %v1445 = vpop.f32.mrf.mxu0
  %v1446 = vadd.f32 0.0, %v1445
  %1447 = vmatmul.f32.gmra.mxu0 %v1357
  %v1448 = vpop.f32.mrf.mxu0
  %v1449 = vadd.f32 0.0, %v1448
  %1450 = vmatmul.f32.gmra.mxu0 %v1360
  %v1451 = vpop.f32.mrf.mxu0
  %v1452 = vadd.f32 0.0, %v1451
  %1453 = vmatmul.f32.gmra.mxu0 %v1363
  %v1454 = vpop.f32.mrf.mxu0
  %v1455 = vadd.f32 0.0, %v1454
  %1456 = vmatmul.f32.gmra.mxu0 %v1366
  %v1457 = vpop.f32.mrf.mxu0
  %v1458 = vadd.f32 0.0, %v1457
  %1459 = vmatmul.f32.gmra.mxu0 %v1369
  %v1460 = vpop.f32.mrf.mxu0
  %v1461 = vadd.f32 0.0, %v1460
  %1462 = vmatmul.f32.gmra.mxu0 %v1372
  %v1463 = vpop.f32.mrf.mxu0
  %v1464 = vadd.f32 0.0, %v1463
  %1465 = vmatmul.f32.gmra.mxu0 %v1375
  %v1466 = vpop.f32.mrf.mxu0
  %v1467 = vadd.f32 0.0, %v1466
  %1468 = vmatmul.f32.gmra.mxu0 %v1378
  %v1469 = vpop.f32.mrf.mxu0
  %v1470 = vadd.f32 0.0, %v1469
  %1471 = vmatmul.f32.gmra.mxu0 %v1381
  %v1472 = vpop.f32.mrf.mxu0
  %v1473 = vadd.f32 0.0, %v1472
  %1474 = vmatmul.f32.gmra.mxu0 %v1384
  %v1475 = vpop.f32.mrf.mxu0
  %v1476 = vadd.f32 0.0, %v1475
  %1477 = vmatmul.f32.gmra.mxu0 %v1387
  %v1478 = vpop.f32.mrf.mxu0
  %v1479 = vadd.f32 0.0, %v1478
  %1480 = vmatmul.f32.gmra.mxu0 %v1390
  %v1481 = vpop.f32.mrf.mxu0
  %v1482 = vadd.f32 0.0, %v1481
  %1483 = vmatmul.f32.gmra.mxu0 %v1393
  %v1484 = vpop.f32.mrf.mxu0
  %v1485 = vadd.f32 0.0, %v1484
  %1486 = vdwg.mxu0
  %v1487 = vadd.f32 %v1149, %v1416
  %v1488 = vadd.f32 %v1150, %v1419
  %v1489 = vadd.f32 %v1151, %v1422
  %v1490 = vadd.f32 %v1152, %v1425
  %v1491 = vadd.f32 %v1153, %v1428
  %v1492 = vadd.f32 %v1154, %v1431
  %v1493 = vadd.f32 %v1155, %v1434
  %v1494 = vadd.f32 %v1156, %v1437
  %v1495 = vadd.f32 %v1157, %v1440
  %v1496 = vadd.f32 %v1158, %v1443
  %v1497 = vadd.f32 %v1159, %v1446
  %v1498 = vadd.f32 %v1160, %v1449
  %v1499 = vadd.f32 %v1161, %v1452
  %v1500 = vadd.f32 %v1162, %v1455
  %v1501 = vadd.f32 %v1163, %v1458
  %v1502 = vadd.f32 %v1164, %v1461
  %v1503 = vadd.f32 %v1165, %v1464
  %v1504 = vadd.f32 %v1166, %v1467
  %v1505 = vadd.f32 %v1167, %v1470
  %v1506 = vadd.f32 %v1168, %v1473
  %v1507 = vadd.f32 %v1169, %v1476
  %v1508 = vadd.f32 %v1170, %v1479
  %v1509 = vadd.f32 %v1171, %v1482
  %v1510 = vadd.f32 %v1172, %v1485
  %s1511 = scalar_lea.vmem %s2, 128
  %v1512 = vld [vmem:[%s1511] sm:$0xff]
  %v1513 = vld [vmem:[%s1511 + $0x8] sm:$0xff]
  %v1514 = vld [vmem:[%s1511 + $0x10] sm:$0xff]
  %v1515 = vld [vmem:[%s1511 + $0x18] sm:$0xf]
  %v1517 = vsel %vm172, %v1515, 0
  %1519 = vmatpush.msra.mxu0 0.0
  %1520 = vmatpush.msra.mxu0 0.0
  %1521 = vmatpush.msra.mxu0 0.0
  %1522 = vmatpush.msra.mxu0 0.0
  %1523 = vmatpush.msra.mxu0 0.0
  %1524 = vmatpush.msra.mxu0 0.0
  %1525 = vmatpush.msra.mxu0 0.0
  %1526 = vmatpush.msra.mxu0 0.0
  %1527 = vmatpush.msra.mxu0 0.0
  %1528 = vmatpush.msra.mxu0 0.0
  %1529 = vmatpush.msra.mxu0 0.0
  %1530 = vmatpush.msra.mxu0 0.0
  %1531 = vmatpush.msra.mxu0 %v1517
  %1532 = vmatpush.msra.mxu0 %v1514
  %1533 = vmatpush.msra.mxu0 %v1513
  %1534 = vmatpush.msra.mxu0 %v1512
  %1535 = vmatmul.f32.gmra.mxu0 %v1324
  %v1536 = vpop.f32.mrf.mxu0
  %v1537 = vadd.f32 0.0, %v1536
  %1538 = vmatmul.f32.gmra.mxu0 %v1327
  %v1539 = vpop.f32.mrf.mxu0
  %v1540 = vadd.f32 0.0, %v1539
  %1541 = vmatmul.f32.gmra.mxu0 %v1330
  %v1542 = vpop.f32.mrf.mxu0
  %v1543 = vadd.f32 0.0, %v1542
  %1544 = vmatmul.f32.gmra.mxu0 %v1333
  %v1545 = vpop.f32.mrf.mxu0
  %v1546 = vadd.f32 0.0, %v1545
  %1547 = vmatmul.f32.gmra.mxu0 %v1336
  %v1548 = vpop.f32.mrf.mxu0
  %v1549 = vadd.f32 0.0, %v1548
  %1550 = vmatmul.f32.gmra.mxu0 %v1339
  %v1551 = vpop.f32.mrf.mxu0
  %v1552 = vadd.f32 0.0, %v1551
  %1553 = vmatmul.f32.gmra.mxu0 %v1342
  %v1554 = vpop.f32.mrf.mxu0
  %v1555 = vadd.f32 0.0, %v1554
  %1556 = vmatmul.f32.gmra.mxu0 %v1345
  %v1557 = vpop.f32.mrf.mxu0
  %v1558 = vadd.f32 0.0, %v1557
  %1559 = vmatmul.f32.gmra.mxu0 %v1348
  %v1560 = vpop.f32.mrf.mxu0
  %v1561 = vadd.f32 0.0, %v1560
  %1562 = vmatmul.f32.gmra.mxu0 %v1351
  %v1563 = vpop.f32.mrf.mxu0
  %v1564 = vadd.f32 0.0, %v1563
  %1565 = vmatmul.f32.gmra.mxu0 %v1354
  %v1566 = vpop.f32.mrf.mxu0
  %v1567 = vadd.f32 0.0, %v1566
  %1568 = vmatmul.f32.gmra.mxu0 %v1357
  %v1569 = vpop.f32.mrf.mxu0
  %v1570 = vadd.f32 0.0, %v1569
  %1571 = vmatmul.f32.gmra.mxu0 %v1360
  %v1572 = vpop.f32.mrf.mxu0
  %v1573 = vadd.f32 0.0, %v1572
  %1574 = vmatmul.f32.gmra.mxu0 %v1363
  %v1575 = vpop.f32.mrf.mxu0
  %v1576 = vadd.f32 0.0, %v1575
  %1577 = vmatmul.f32.gmra.mxu0 %v1366
  %v1578 = vpop.f32.mrf.mxu0
  %v1579 = vadd.f32 0.0, %v1578
  %1580 = vmatmul.f32.gmra.mxu0 %v1369
  %v1581 = vpop.f32.mrf.mxu0
  %v1582 = vadd.f32 0.0, %v1581
  %1583 = vmatmul.f32.gmra.mxu0 %v1372
  %v1584 = vpop.f32.mrf.mxu0
  %v1585 = vadd.f32 0.0, %v1584
  %1586 = vmatmul.f32.gmra.mxu0 %v1375
  %v1587 = vpop.f32.mrf.mxu0
  %v1588 = vadd.f32 0.0, %v1587
  %1589 = vmatmul.f32.gmra.mxu0 %v1378
  %v1590 = vpop.f32.mrf.mxu0
  %v1591 = vadd.f32 0.0, %v1590
  %1592 = vmatmul.f32.gmra.mxu0 %v1381
  %v1593 = vpop.f32.mrf.mxu0
  %v1594 = vadd.f32 0.0, %v1593
  %1595 = vmatmul.f32.gmra.mxu0 %v1384
  %v1596 = vpop.f32.mrf.mxu0
  %v1597 = vadd.f32 0.0, %v1596
  %1598 = vmatmul.f32.gmra.mxu0 %v1387
  %v1599 = vpop.f32.mrf.mxu0
  %v1600 = vadd.f32 0.0, %v1599
  %1601 = vmatmul.f32.gmra.mxu0 %v1390
  %v1602 = vpop.f32.mrf.mxu0
  %v1603 = vadd.f32 0.0, %v1602
  %1604 = vmatmul.f32.gmra.mxu0 %v1393
  %v1605 = vpop.f32.mrf.mxu0
  %v1606 = vadd.f32 0.0, %v1605
  %1607 = vdwg.mxu0
  %v1608 = vadd.f32 %v1270, %v1537
  %v1609 = vadd.f32 %v1271, %v1540
  %v1610 = vadd.f32 %v1272, %v1543
  %v1611 = vadd.f32 %v1273, %v1546
  %v1612 = vadd.f32 %v1274, %v1549
  %v1613 = vadd.f32 %v1275, %v1552
  %v1614 = vadd.f32 %v1276, %v1555
  %v1615 = vadd.f32 %v1277, %v1558
  %v1616 = vadd.f32 %v1278, %v1561
  %v1617 = vadd.f32 %v1279, %v1564
  %v1618 = vadd.f32 %v1280, %v1567
  %v1619 = vadd.f32 %v1281, %v1570
  %v1620 = vadd.f32 %v1282, %v1573
  %v1621 = vadd.f32 %v1283, %v1576
  %v1622 = vadd.f32 %v1284, %v1579
  %v1623 = vadd.f32 %v1285, %v1582
  %v1624 = vadd.f32 %v1286, %v1585
  %v1625 = vadd.f32 %v1287, %v1588
  %v1626 = vadd.f32 %v1288, %v1591
  %v1627 = vadd.f32 %v1289, %v1594
  %v1628 = vadd.f32 %v1290, %v1597
  %v1629 = vadd.f32 %v1291, %v1600
  %v1630 = vadd.f32 %v1292, %v1603
  %v1631 = vadd.f32 %v1293, %v1606
  %v1632 = vmax.f32 %v1487, %v1608
  %v1633 = vmax.f32 %v1488, %v1609
  %v1634 = vmax.f32 %v1489, %v1610
  %v1635 = vmax.f32 %v1490, %v1611
  %v1636 = vmax.f32 %v1491, %v1612
  %v1637 = vmax.f32 %v1492, %v1613
  %v1638 = vmax.f32 %v1493, %v1614
  %v1639 = vmax.f32 %v1494, %v1615
  %v1640 = vmax.f32 %v1495, %v1616
  %v1641 = vmax.f32 %v1496, %v1617
  %v1642 = vmax.f32 %v1497, %v1618
  %v1643 = vmax.f32 %v1498, %v1619
  %v1644 = vmax.f32 %v1499, %v1620
  %v1645 = vmax.f32 %v1500, %v1621
  %v1646 = vmax.f32 %v1501, %v1622
  %v1647 = vmax.f32 %v1502, %v1623
  %v1648 = vmax.f32 %v1503, %v1624
  %v1649 = vmax.f32 %v1504, %v1625
  %v1650 = vmax.f32 %v1505, %v1626
  %v1651 = vmax.f32 %v1506, %v1627
  %v1652 = vmax.f32 %v1507, %v1628
  %v1653 = vmax.f32 %v1508, %v1629
  %v1654 = vmax.f32 %v1509, %v1630
  %v1655 = vmax.f32 %v1510, %v1631
  %vm1656 = vcmask 982016
  %1657 = vst.msk [vmem:[#allocation2] sm:$0xff] %vm1656, %v1632
  %1658 = vst.msk [vmem:[#allocation2 + $0x8] sm:$0xff] %vm1656, %v1633
  %1659 = vst.msk [vmem:[#allocation2 + $0x10] sm:$0xff] %vm1656, %v1634
  %1660 = vst.msk [vmem:[#allocation2 + $0x18] sm:$0xff] %vm1656, %v1635
  %1661 = vst.msk [vmem:[#allocation2 + $0x20] sm:$0xff] %vm1656, %v1636
  %1662 = vst.msk [vmem:[#allocation2 + $0x28] sm:$0xff] %vm1656, %v1637
  %1663 = vst.msk [vmem:[#allocation2 + $0x30] sm:$0xff] %vm1656, %v1638
  %1664 = vst.msk [vmem:[#allocation2 + $0x38] sm:$0xff] %vm1656, %v1639
  %1665 = vst.msk [vmem:[#allocation2 + $0x40] sm:$0xff] %vm1656, %v1640
  %1666 = vst.msk [vmem:[#allocation2 + $0x48] sm:$0xff] %vm1656, %v1641
  %1667 = vst.msk [vmem:[#allocation2 + $0x50] sm:$0xff] %vm1656, %v1642
  %1668 = vst.msk [vmem:[#allocation2 + $0x58] sm:$0xff] %vm1656, %v1643
  %1669 = vst.msk [vmem:[#allocation2 + $0x60] sm:$0xff] %vm1656, %v1644
  %1670 = vst.msk [vmem:[#allocation2 + $0x68] sm:$0xff] %vm1656, %v1645
  %1671 = vst.msk [vmem:[#allocation2 + $0x70] sm:$0xff] %vm1656, %v1646
  %1672 = vst.msk [vmem:[#allocation2 + $0x78] sm:$0xff] %vm1656, %v1647
  %1673 = vst.msk [vmem:[#allocation2 + $0x80] sm:$0xff] %vm1656, %v1648
  %1674 = vst.msk [vmem:[#allocation2 + $0x88] sm:$0xff] %vm1656, %v1649
  %1675 = vst.msk [vmem:[#allocation2 + $0x90] sm:$0xff] %vm1656, %v1650
  %1676 = vst.msk [vmem:[#allocation2 + $0x98] sm:$0xff] %vm1656, %v1651
  %1677 = vst.msk [vmem:[#allocation2 + $0xa0] sm:$0xff] %vm1656, %v1652
  %1678 = vst.msk [vmem:[#allocation2 + $0xa8] sm:$0xff] %vm1656, %v1653
  %1679 = vst.msk [vmem:[#allocation2 + $0xb0] sm:$0xff] %vm1656, %v1654
  %1680 = vst.msk [vmem:[#allocation2 + $0xb8] sm:$0xff] %vm1656, %v1655
  %v1681 = vld [vmem:[#allocation2] ss:$2 sm:$0xff]
  %s1682 = scalar_lea.vmem [#allocation2], 16
  %v1683 = vld [vmem:[%s1682] ss:$2 sm:$0xff]
  %s1684 = scalar_lea.vmem [#allocation2], 32
  %v1685 = vld [vmem:[%s1684] ss:$2 sm:$0xff]
  %s1686 = scalar_lea.vmem [#allocation2], 48
  %v1687 = vld [vmem:[%s1686] ss:$2 sm:$0xff]
  %s1688 = scalar_lea.vmem [#allocation2], 64
  %v1689 = vld [vmem:[%s1688] ss:$2 sm:$0xff]
  %s1690 = scalar_lea.vmem [#allocation2], 80
  %v1691 = vld [vmem:[%s1690] ss:$2 sm:$0xff]
  %s1692 = scalar_lea.vmem [#allocation2], 96
  %v1693 = vld [vmem:[%s1692] ss:$2 sm:$0xff]
  %s1694 = scalar_lea.vmem [#allocation2], 112
  %v1695 = vld [vmem:[%s1694] ss:$2 sm:$0xff]
  %s1696 = scalar_lea.vmem [#allocation2], 128
  %v1697 = vld [vmem:[%s1696] ss:$2 sm:$0xff]
  %s1698 = scalar_lea.vmem [#allocation2], 144
  %v1699 = vld [vmem:[%s1698] ss:$2 sm:$0xff]
  %s1700 = scalar_lea.vmem [#allocation2], 160
  %v1701 = vld [vmem:[%s1700] ss:$2 sm:$0xff]
  %s1702 = scalar_lea.vmem [#allocation2], 176
  %v1703 = vld [vmem:[%s1702] ss:$2 sm:$0xff]
  %s1704 = scalar_lea.vmem [#allocation2], 1
  %v1705 = vld [vmem:[%s1704] ss:$2 sm:$0xff]
  %s1706 = scalar_lea.vmem [#allocation2], 17
  %v1707 = vld [vmem:[%s1706] ss:$2 sm:$0xff]
  %s1708 = scalar_lea.vmem [#allocation2], 33
  %v1709 = vld [vmem:[%s1708] ss:$2 sm:$0xff]
  %s1710 = scalar_lea.vmem [#allocation2], 49
  %v1711 = vld [vmem:[%s1710] ss:$2 sm:$0xff]
  %s1712 = scalar_lea.vmem [#allocation2], 65
  %v1713 = vld [vmem:[%s1712] ss:$2 sm:$0xff]
  %s1714 = scalar_lea.vmem [#allocation2], 81
  %v1715 = vld [vmem:[%s1714] ss:$2 sm:$0xff]
  %s1716 = scalar_lea.vmem [#allocation2], 97
  %v1717 = vld [vmem:[%s1716] ss:$2 sm:$0xff]
  %s1718 = scalar_lea.vmem [#allocation2], 113
  %v1719 = vld [vmem:[%s1718] ss:$2 sm:$0xff]
  %s1720 = scalar_lea.vmem [#allocation2], 129
  %v1721 = vld [vmem:[%s1720] ss:$2 sm:$0xff]
  %s1722 = scalar_lea.vmem [#allocation2], 145
  %v1723 = vld [vmem:[%s1722] ss:$2 sm:$0xff]
  %s1724 = scalar_lea.vmem [#allocation2], 161
  %v1725 = vld [vmem:[%s1724] ss:$2 sm:$0xff]
  %s1726 = scalar_lea.vmem [#allocation2], 177
  %v1727 = vld [vmem:[%s1726] ss:$2 sm:$0xff]
  %v1728 = vmax.f32 %v1681, %v1705
  %v1729 = vmax.f32 %v1683, %v1707
  %v1730 = vmax.f32 %v1685, %v1709
  %v1731 = vmax.f32 %v1687, %v1711
  %v1732 = vmax.f32 %v1689, %v1713
  %v1733 = vmax.f32 %v1691, %v1715
  %v1734 = vmax.f32 %v1693, %v1717
  %v1735 = vmax.f32 %v1695, %v1719
  %v1736 = vmax.f32 %v1697, %v1721
  %v1737 = vmax.f32 %v1699, %v1723
  %v1738 = vmax.f32 %v1701, %v1725
  %v1739 = vmax.f32 %v1703, %v1727
  %v1740 = vld [vmem:[%s3] sm:$0x1]
  %v1742 = vperm.slane %v1740, 0
  %v1744 = vadd.f32 %v1728, %v1742
  %v1745 = vadd.f32 %v1729, %v1742
  %v1746 = vadd.f32 %v1730, %v1742
  %v1747 = vadd.f32 %v1731, %v1742
  %v1748 = vadd.f32 %v1732, %v1742
  %v1749 = vadd.f32 %v1733, %v1742
  %v1750 = vadd.f32 %v1734, %v1742
  %v1751 = vadd.f32 %v1735, %v1742
  %v1752 = vadd.f32 %v1736, %v1742
  %v1753 = vadd.f32 %v1737, %v1742
  %v1754 = vadd.f32 %v1738, %v1742
  %v1755 = vadd.f32 %v1739, %v1742
  %v1756 = vmax.f32 %v1744, 0.0
  %v1757 = vmax.f32 %v1745, 0.0
  %v1758 = vmax.f32 %v1746, 0.0
  %v1759 = vmax.f32 %v1747, 0.0
  %v1760 = vmax.f32 %v1748, 0.0
  %v1761 = vmax.f32 %v1749, 0.0
  %v1762 = vmax.f32 %v1750, 0.0
  %v1763 = vmax.f32 %v1751, 0.0
  %v1764 = vmax.f32 %v1752, 0.0
  %v1765 = vmax.f32 %v1753, 0.0
  %v1766 = vmax.f32 %v1754, 0.0
  %v1767 = vmax.f32 %v1755, 0.0
  %1768 = vst.msk [vmem:[#allocation3] sm:$0xff] %vm1656, %v1756
  %vm1769 = vcmask 977920
  %1770 = vst.msk [vmem:[#allocation3 + $0x8] sm:$0xf] %vm1769, %v1757
  %s1771 = scalar_lea.vmem [#allocation3], 16
  %vm1772 = vcmask 982020
  %1773 = vst.msk [vmem:[%s1771 - $0x4] sm:$0xf0] %vm1772, %v1757
  %1774 = vst.msk [vmem:[%s1771 + $0x4] sm:$0xff] %vm1656, %v1758
  %s1775 = scalar_lea.vmem [#allocation3], 32
  %1776 = vst.msk [vmem:[%s1775] sm:$0xff] %vm1656, %v1759
  %1777 = vst.msk [vmem:[%s1775 + $0x8] sm:$0xf] %vm1769, %v1760
  %s1778 = scalar_lea.vmem [#allocation3], 48
  %1779 = vst.msk [vmem:[%s1778 - $0x4] sm:$0xf0] %vm1772, %v1760
  %1780 = vst.msk [vmem:[%s1778 + $0x4] sm:$0xff] %vm1656, %v1761
  %s1781 = scalar_lea.vmem [#allocation3], 64
  %1782 = vst.msk [vmem:[%s1781] sm:$0xff] %vm1656, %v1762
  %1783 = vst.msk [vmem:[%s1781 + $0x8] sm:$0xf] %vm1769, %v1763
  %s1784 = scalar_lea.vmem [#allocation3], 80
  %1785 = vst.msk [vmem:[%s1784 - $0x4] sm:$0xf0] %vm1772, %v1763
  %1786 = vst.msk [vmem:[%s1784 + $0x4] sm:$0xff] %vm1656, %v1764
  %s1787 = scalar_lea.vmem [#allocation3], 96
  %1788 = vst.msk [vmem:[%s1787] sm:$0xff] %vm1656, %v1765
  %1789 = vst.msk [vmem:[%s1787 + $0x8] sm:$0xf] %vm1769, %v1766
  %s1790 = scalar_lea.vmem [#allocation3], 112
  %1791 = vst.msk [vmem:[%s1790 - $0x4] sm:$0xf0] %vm1772, %v1766
  %1792 = vst.msk [vmem:[%s1790 + $0x4] sm:$0xff] %vm1656, %v1767
  %v1793 = vld [vmem:[#allocation3] sm:$0xff]
  %v1794 = vld [vmem:[#allocation3 + $0x10] sm:$0xff]
  %v1795 = vld [vmem:[#allocation3 + $0x20] sm:$0xff]
  %v1796 = vld [vmem:[#allocation3 + $0x30] sm:$0xff]
  %v1797 = vld [vmem:[#allocation3 + $0x40] sm:$0xff]
  %v1798 = vld [vmem:[#allocation3 + $0x50] sm:$0xff]
  %v1799 = vld [vmem:[#allocation3 + $0x60] sm:$0xff]
  %v1800 = vld [vmem:[#allocation3 + $0x70] sm:$0xff]
  %v1801 = vld [vmem:[%s4] sm:$0xff]
  %v1802 = vld [vmem:[%s4 + $0x8] sm:$0xff]
  %v1803 = vld [vmem:[%s4 + $0x10] sm:$0xff]
  %v1804 = vld [vmem:[%s4 + $0x18] sm:$0xff]
  %v1805 = vld [vmem:[%s4 + $0x20] sm:$0xff]
  %v1806 = vld [vmem:[%s4 + $0x28] sm:$0xff]
  %v1807 = vld [vmem:[%s4 + $0x30] sm:$0xff]
  %v1808 = vld [vmem:[%s4 + $0x38] sm:$0xff]
  %v1809 = vld [vmem:[%s4 + $0x40] sm:$0xff]
  %v1810 = vld [vmem:[%s4 + $0x48] sm:$0xff]
  %v1811 = vld [vmem:[%s4 + $0x50] sm:$0xff]
  %v1812 = vld [vmem:[%s4 + $0x58] sm:$0xff]
  %v1813 = vld [vmem:[%s4 + $0x60] sm:$0xff]
  %v1814 = vld [vmem:[%s4 + $0x68] sm:$0xff]
  %v1815 = vld [vmem:[%s4 + $0x70] sm:$0xff]
  %v1816 = vld [vmem:[%s5] sm:$0xff]
  %v1817 = vld [vmem:[%s5 + $0x8] sm:$0xff]
  %v1818 = vld [vmem:[%s5 + $0x10] sm:$0xff]
  %v1819 = vld [vmem:[%s5 + $0x18] sm:$0xff]
  %v1820 = vld [vmem:[%s5 + $0x20] sm:$0xff]
  %v1821 = vld [vmem:[%s5 + $0x28] sm:$0xff]
  %v1822 = vld [vmem:[%s5 + $0x30] sm:$0xff]
  %v1823 = vld [vmem:[%s5 + $0x38] sm:$0xff]
  %v1824 = vld [vmem:[%s5 + $0x40] sm:$0xff]
  %v1825 = vld [vmem:[%s5 + $0x48] sm:$0xff]
  %v1826 = vld [vmem:[%s5 + $0x50] sm:$0xff]
  %v1827 = vld [vmem:[%s5 + $0x58] sm:$0xff]
  %v1828 = vld [vmem:[%s5 + $0x60] sm:$0xff]
  %v1829 = vld [vmem:[%s5 + $0x68] sm:$0xff]
  %v1830 = vld [vmem:[%s5 + $0x70] sm:$0xff]
  %v1831 = vld [vmem:[#allocation3 + $0x1] sm:$0xff]
  %v1832 = vld [vmem:[#allocation3 + $0x11] sm:$0xff]
  %v1833 = vld [vmem:[#allocation3 + $0x21] sm:$0xff]
  %v1834 = vld [vmem:[#allocation3 + $0x31] sm:$0xff]
  %v1835 = vld [vmem:[#allocation3 + $0x41] sm:$0xff]
  %v1836 = vld [vmem:[#allocation3 + $0x51] sm:$0xff]
  %v1837 = vld [vmem:[#allocation3 + $0x61] sm:$0xff]
  %v1838 = vld [vmem:[#allocation3 + $0x71] sm:$0xff]
  %s1839 = scalar_lea.vmem %s4, 120
  %v1840 = vld [vmem:[%s1839] sm:$0xff]
  %v1841 = vld [vmem:[%s1839 + $0x8] sm:$0xff]
  %v1842 = vld [vmem:[%s1839 + $0x10] sm:$0xff]
  %v1843 = vld [vmem:[%s1839 + $0x18] sm:$0xff]
  %v1844 = vld [vmem:[%s1839 + $0x20] sm:$0xff]
  %v1845 = vld [vmem:[%s1839 + $0x28] sm:$0xff]
  %v1846 = vld [vmem:[%s1839 + $0x30] sm:$0xff]
  %v1847 = vld [vmem:[%s1839 + $0x38] sm:$0xff]
  %v1848 = vld [vmem:[%s1839 + $0x40] sm:$0xff]
  %v1849 = vld [vmem:[%s1839 + $0x48] sm:$0xff]
  %v1850 = vld [vmem:[%s1839 + $0x50] sm:$0xff]
  %v1851 = vld [vmem:[%s1839 + $0x58] sm:$0xff]
  %v1852 = vld [vmem:[%s1839 + $0x60] sm:$0xff]
  %v1853 = vld [vmem:[%s1839 + $0x68] sm:$0xff]
  %v1854 = vld [vmem:[%s1839 + $0x70] sm:$0xff]
  %v1856 = vsel %vm1656, %v1831, 0
  %v1859 = vsel %vm1656, %v1832, 0
  %v1862 = vsel %vm1656, %v1833, 0
  %v1865 = vsel %vm1656, %v1834, 0
  %v1868 = vsel %vm1656, %v1835, 0
  %v1871 = vsel %vm1656, %v1836, 0
  %v1874 = vsel %vm1656, %v1837, 0
  %v1877 = vsel %vm1656, %v1838, 0
  %1879 = vmatpush.msra.mxu0 0.0
  %1880 = vmatpush.msra.mxu0 %v1854
  %1881 = vmatpush.msra.mxu0 %v1853
  %1882 = vmatpush.msra.mxu0 %v1852
  %1883 = vmatpush.msra.mxu0 %v1851
  %1884 = vmatpush.msra.mxu0 %v1850
  %1885 = vmatpush.msra.mxu0 %v1849
  %1886 = vmatpush.msra.mxu0 %v1848
  %1887 = vmatpush.msra.mxu0 %v1847
  %1888 = vmatpush.msra.mxu0 %v1846
  %1889 = vmatpush.msra.mxu0 %v1845
  %1890 = vmatpush.msra.mxu0 %v1844
  %1891 = vmatpush.msra.mxu0 %v1843
  %1892 = vmatpush.msra.mxu0 %v1842
  %1893 = vmatpush.msra.mxu0 %v1841
  %1894 = vmatpush.msra.mxu0 %v1840
  %1895 = vmatmul.f32.gmra.mxu0 %v1856
  %v1896 = vpop.f32.mrf.mxu0
  %v1897 = vadd.f32 0.0, %v1896
  %1898 = vmatmul.f32.gmra.mxu0 %v1859
  %v1899 = vpop.f32.mrf.mxu0
  %v1900 = vadd.f32 0.0, %v1899
  %1901 = vmatmul.f32.gmra.mxu0 %v1862
  %v1902 = vpop.f32.mrf.mxu0
  %v1903 = vadd.f32 0.0, %v1902
  %1904 = vmatmul.f32.gmra.mxu0 %v1865
  %v1905 = vpop.f32.mrf.mxu0
  %v1906 = vadd.f32 0.0, %v1905
  %1907 = vmatmul.f32.gmra.mxu0 %v1868
  %v1908 = vpop.f32.mrf.mxu0
  %v1909 = vadd.f32 0.0, %v1908
  %1910 = vmatmul.f32.gmra.mxu0 %v1871
  %v1911 = vpop.f32.mrf.mxu0
  %v1912 = vadd.f32 0.0, %v1911
  %1913 = vmatmul.f32.gmra.mxu0 %v1874
  %v1914 = vpop.f32.mrf.mxu0
  %v1915 = vadd.f32 0.0, %v1914
  %1916 = vmatmul.f32.gmra.mxu0 %v1877
  %v1917 = vpop.f32.mrf.mxu0
  %v1918 = vadd.f32 0.0, %v1917
  %1919 = vdwg.mxu0
  %v1921 = vsel %vm1656, %v1793, 0
  %v1924 = vsel %vm1656, %v1794, 0
  %v1927 = vsel %vm1656, %v1795, 0
  %v1930 = vsel %vm1656, %v1796, 0
  %v1933 = vsel %vm1656, %v1797, 0
  %v1936 = vsel %vm1656, %v1798, 0
  %v1939 = vsel %vm1656, %v1799, 0
  %v1942 = vsel %vm1656, %v1800, 0
  %1944 = vmatpush.msra.mxu0 0.0
  %1945 = vmatpush.msra.mxu0 %v1815
  %1946 = vmatpush.msra.mxu0 %v1814
  %1947 = vmatpush.msra.mxu0 %v1813
  %1948 = vmatpush.msra.mxu0 %v1812
  %1949 = vmatpush.msra.mxu0 %v1811
  %1950 = vmatpush.msra.mxu0 %v1810
  %1951 = vmatpush.msra.mxu0 %v1809
  %1952 = vmatpush.msra.mxu0 %v1808
  %1953 = vmatpush.msra.mxu0 %v1807
  %1954 = vmatpush.msra.mxu0 %v1806
  %1955 = vmatpush.msra.mxu0 %v1805
  %1956 = vmatpush.msra.mxu0 %v1804
  %1957 = vmatpush.msra.mxu0 %v1803
  %1958 = vmatpush.msra.mxu0 %v1802
  %1959 = vmatpush.msra.mxu0 %v1801
  %1960 = vmatmul.f32.gmra.mxu0 %v1921
  %v1961 = vpop.f32.mrf.mxu0
  %v1962 = vadd.f32 %v1897, %v1961
  %1963 = vmatmul.f32.gmra.mxu0 %v1924
  %v1964 = vpop.f32.mrf.mxu0
  %v1965 = vadd.f32 %v1900, %v1964
  %1966 = vmatmul.f32.gmra.mxu0 %v1927
  %v1967 = vpop.f32.mrf.mxu0
  %v1968 = vadd.f32 %v1903, %v1967
  %1969 = vmatmul.f32.gmra.mxu0 %v1930
  %v1970 = vpop.f32.mrf.mxu0
  %v1971 = vadd.f32 %v1906, %v1970
  %1972 = vmatmul.f32.gmra.mxu0 %v1933
  %v1973 = vpop.f32.mrf.mxu0
  %v1974 = vadd.f32 %v1909, %v1973
  %1975 = vmatmul.f32.gmra.mxu0 %v1936
  %v1976 = vpop.f32.mrf.mxu0
  %v1977 = vadd.f32 %v1912, %v1976
  %1978 = vmatmul.f32.gmra.mxu0 %v1939
  %v1979 = vpop.f32.mrf.mxu0
  %v1980 = vadd.f32 %v1915, %v1979
  %1981 = vmatmul.f32.gmra.mxu0 %v1942
  %v1982 = vpop.f32.mrf.mxu0
  %v1983 = vadd.f32 %v1918, %v1982
  %1984 = vdwg.mxu0
  %s1985 = scalar_lea.vmem %s5, 120
  %v1986 = vld [vmem:[%s1985] sm:$0xff]
  %v1987 = vld [vmem:[%s1985 + $0x8] sm:$0xff]
  %v1988 = vld [vmem:[%s1985 + $0x10] sm:$0xff]
  %v1989 = vld [vmem:[%s1985 + $0x18] sm:$0xff]
  %v1990 = vld [vmem:[%s1985 + $0x20] sm:$0xff]
  %v1991 = vld [vmem:[%s1985 + $0x28] sm:$0xff]
  %v1992 = vld [vmem:[%s1985 + $0x30] sm:$0xff]
  %v1993 = vld [vmem:[%s1985 + $0x38] sm:$0xff]
  %v1994 = vld [vmem:[%s1985 + $0x40] sm:$0xff]
  %v1995 = vld [vmem:[%s1985 + $0x48] sm:$0xff]
  %v1996 = vld [vmem:[%s1985 + $0x50] sm:$0xff]
  %v1997 = vld [vmem:[%s1985 + $0x58] sm:$0xff]
  %v1998 = vld [vmem:[%s1985 + $0x60] sm:$0xff]
  %v1999 = vld [vmem:[%s1985 + $0x68] sm:$0xff]
  %v2000 = vld [vmem:[%s1985 + $0x70] sm:$0xff]
  %2001 = vmatpush.msra.mxu0 0.0
  %2002 = vmatpush.msra.mxu0 %v2000
  %2003 = vmatpush.msra.mxu0 %v1999
  %2004 = vmatpush.msra.mxu0 %v1998
  %2005 = vmatpush.msra.mxu0 %v1997
  %2006 = vmatpush.msra.mxu0 %v1996
  %2007 = vmatpush.msra.mxu0 %v1995
  %2008 = vmatpush.msra.mxu0 %v1994
  %2009 = vmatpush.msra.mxu0 %v1993
  %2010 = vmatpush.msra.mxu0 %v1992
  %2011 = vmatpush.msra.mxu0 %v1991
  %2012 = vmatpush.msra.mxu0 %v1990
  %2013 = vmatpush.msra.mxu0 %v1989
  %2014 = vmatpush.msra.mxu0 %v1988
  %2015 = vmatpush.msra.mxu0 %v1987
  %2016 = vmatpush.msra.mxu0 %v1986
  %2017 = vmatmul.f32.gmra.mxu0 %v1856
  %v2018 = vpop.f32.mrf.mxu0
  %v2019 = vadd.f32 0.0, %v2018
  %2020 = vmatmul.f32.gmra.mxu0 %v1859
  %v2021 = vpop.f32.mrf.mxu0
  %v2022 = vadd.f32 0.0, %v2021
  %2023 = vmatmul.f32.gmra.mxu0 %v1862
  %v2024 = vpop.f32.mrf.mxu0
  %v2025 = vadd.f32 0.0, %v2024
  %2026 = vmatmul.f32.gmra.mxu0 %v1865
  %v2027 = vpop.f32.mrf.mxu0
  %v2028 = vadd.f32 0.0, %v2027
  %2029 = vmatmul.f32.gmra.mxu0 %v1868
  %v2030 = vpop.f32.mrf.mxu0
  %v2031 = vadd.f32 0.0, %v2030
  %2032 = vmatmul.f32.gmra.mxu0 %v1871
  %v2033 = vpop.f32.mrf.mxu0
  %v2034 = vadd.f32 0.0, %v2033
  %2035 = vmatmul.f32.gmra.mxu0 %v1874
  %v2036 = vpop.f32.mrf.mxu0
  %v2037 = vadd.f32 0.0, %v2036
  %2038 = vmatmul.f32.gmra.mxu0 %v1877
  %v2039 = vpop.f32.mrf.mxu0
  %v2040 = vadd.f32 0.0, %v2039
  %2041 = vdwg.mxu0
  %2042 = vmatpush.msra.mxu0 0.0
  %2043 = vmatpush.msra.mxu0 %v1830
  %2044 = vmatpush.msra.mxu0 %v1829
  %2045 = vmatpush.msra.mxu0 %v1828
  %2046 = vmatpush.msra.mxu0 %v1827
  %2047 = vmatpush.msra.mxu0 %v1826
  %2048 = vmatpush.msra.mxu0 %v1825
  %2049 = vmatpush.msra.mxu0 %v1824
  %2050 = vmatpush.msra.mxu0 %v1823
  %2051 = vmatpush.msra.mxu0 %v1822
  %2052 = vmatpush.msra.mxu0 %v1821
  %2053 = vmatpush.msra.mxu0 %v1820
  %2054 = vmatpush.msra.mxu0 %v1819
  %2055 = vmatpush.msra.mxu0 %v1818
  %2056 = vmatpush.msra.mxu0 %v1817
  %2057 = vmatpush.msra.mxu0 %v1816
  %2058 = vmatmul.f32.gmra.mxu0 %v1921
  %v2059 = vpop.f32.mrf.mxu0
  %v2060 = vadd.f32 %v2019, %v2059
  %2061 = vmatmul.f32.gmra.mxu0 %v1924
  %v2062 = vpop.f32.mrf.mxu0
  %v2063 = vadd.f32 %v2022, %v2062
  %2064 = vmatmul.f32.gmra.mxu0 %v1927
  %v2065 = vpop.f32.mrf.mxu0
  %v2066 = vadd.f32 %v2025, %v2065
  %2067 = vmatmul.f32.gmra.mxu0 %v1930
  %v2068 = vpop.f32.mrf.mxu0
  %v2069 = vadd.f32 %v2028, %v2068
  %2070 = vmatmul.f32.gmra.mxu0 %v1933
  %v2071 = vpop.f32.mrf.mxu0
  %v2072 = vadd.f32 %v2031, %v2071
  %2073 = vmatmul.f32.gmra.mxu0 %v1936
  %v2074 = vpop.f32.mrf.mxu0
  %v2075 = vadd.f32 %v2034, %v2074
  %2076 = vmatmul.f32.gmra.mxu0 %v1939
  %v2077 = vpop.f32.mrf.mxu0
  %v2078 = vadd.f32 %v2037, %v2077
  %2079 = vmatmul.f32.gmra.mxu0 %v1942
  %v2080 = vpop.f32.mrf.mxu0
  %v2081 = vadd.f32 %v2040, %v2080
  %2082 = vdwg.mxu0
  %v2083 = vld [vmem:[#allocation3 + $0x2] sm:$0xff]
  %v2084 = vld [vmem:[#allocation3 + $0x12] sm:$0xff]
  %v2085 = vld [vmem:[#allocation3 + $0x22] sm:$0xff]
  %v2086 = vld [vmem:[#allocation3 + $0x32] sm:$0xff]
  %v2087 = vld [vmem:[#allocation3 + $0x42] sm:$0xff]
  %v2088 = vld [vmem:[#allocation3 + $0x52] sm:$0xff]
  %v2089 = vld [vmem:[#allocation3 + $0x62] sm:$0xff]
  %v2090 = vld [vmem:[#allocation3 + $0x72] sm:$0xff]
  %s2091 = scalar_lea.vmem %s4, 240
  %v2092 = vld [vmem:[%s2091] sm:$0xff]
  %v2093 = vld [vmem:[%s2091 + $0x8] sm:$0xff]
  %v2094 = vld [vmem:[%s2091 + $0x10] sm:$0xff]
  %v2095 = vld [vmem:[%s2091 + $0x18] sm:$0xff]
  %v2096 = vld [vmem:[%s2091 + $0x20] sm:$0xff]
  %v2097 = vld [vmem:[%s2091 + $0x28] sm:$0xff]
  %v2098 = vld [vmem:[%s2091 + $0x30] sm:$0xff]
  %v2099 = vld [vmem:[%s2091 + $0x38] sm:$0xff]
  %v2100 = vld [vmem:[%s2091 + $0x40] sm:$0xff]
  %v2101 = vld [vmem:[%s2091 + $0x48] sm:$0xff]
  %v2102 = vld [vmem:[%s2091 + $0x50] sm:$0xff]
  %v2103 = vld [vmem:[%s2091 + $0x58] sm:$0xff]
  %v2104 = vld [vmem:[%s2091 + $0x60] sm:$0xff]
  %v2105 = vld [vmem:[%s2091 + $0x68] sm:$0xff]
  %v2106 = vld [vmem:[%s2091 + $0x70] sm:$0xff]
  %v2108 = vsel %vm1656, %v2083, 0
  %v2111 = vsel %vm1656, %v2084, 0
  %v2114 = vsel %vm1656, %v2085, 0
  %v2117 = vsel %vm1656, %v2086, 0
  %v2120 = vsel %vm1656, %v2087, 0
  %v2123 = vsel %vm1656, %v2088, 0
  %v2126 = vsel %vm1656, %v2089, 0
  %v2129 = vsel %vm1656, %v2090, 0
  %2131 = vmatpush.msra.mxu0 0.0
  %2132 = vmatpush.msra.mxu0 %v2106
  %2133 = vmatpush.msra.mxu0 %v2105
  %2134 = vmatpush.msra.mxu0 %v2104
  %2135 = vmatpush.msra.mxu0 %v2103
  %2136 = vmatpush.msra.mxu0 %v2102
  %2137 = vmatpush.msra.mxu0 %v2101
  %2138 = vmatpush.msra.mxu0 %v2100
  %2139 = vmatpush.msra.mxu0 %v2099
  %2140 = vmatpush.msra.mxu0 %v2098
  %2141 = vmatpush.msra.mxu0 %v2097
  %2142 = vmatpush.msra.mxu0 %v2096
  %2143 = vmatpush.msra.mxu0 %v2095
  %2144 = vmatpush.msra.mxu0 %v2094
  %2145 = vmatpush.msra.mxu0 %v2093
  %2146 = vmatpush.msra.mxu0 %v2092
  %2147 = vmatmul.f32.gmra.mxu0 %v2108
  %v2148 = vpop.f32.mrf.mxu0
  %v2149 = vadd.f32 0.0, %v2148
  %2150 = vmatmul.f32.gmra.mxu0 %v2111
  %v2151 = vpop.f32.mrf.mxu0
  %v2152 = vadd.f32 0.0, %v2151
  %2153 = vmatmul.f32.gmra.mxu0 %v2114
  %v2154 = vpop.f32.mrf.mxu0
  %v2155 = vadd.f32 0.0, %v2154
  %2156 = vmatmul.f32.gmra.mxu0 %v2117
  %v2157 = vpop.f32.mrf.mxu0
  %v2158 = vadd.f32 0.0, %v2157
  %2159 = vmatmul.f32.gmra.mxu0 %v2120
  %v2160 = vpop.f32.mrf.mxu0
  %v2161 = vadd.f32 0.0, %v2160
  %2162 = vmatmul.f32.gmra.mxu0 %v2123
  %v2163 = vpop.f32.mrf.mxu0
  %v2164 = vadd.f32 0.0, %v2163
  %2165 = vmatmul.f32.gmra.mxu0 %v2126
  %v2166 = vpop.f32.mrf.mxu0
  %v2167 = vadd.f32 0.0, %v2166
  %2168 = vmatmul.f32.gmra.mxu0 %v2129
  %v2169 = vpop.f32.mrf.mxu0
  %v2170 = vadd.f32 0.0, %v2169
  %2171 = vdwg.mxu0
  %v2172 = vadd.f32 %v1962, %v2149
  %v2173 = vadd.f32 %v1965, %v2152
  %v2174 = vadd.f32 %v1968, %v2155
  %v2175 = vadd.f32 %v1971, %v2158
  %v2176 = vadd.f32 %v1974, %v2161
  %v2177 = vadd.f32 %v1977, %v2164
  %v2178 = vadd.f32 %v1980, %v2167
  %v2179 = vadd.f32 %v1983, %v2170
  %s2180 = scalar_lea.vmem %s5, 240
  %v2181 = vld [vmem:[%s2180] sm:$0xff]
  %v2182 = vld [vmem:[%s2180 + $0x8] sm:$0xff]
  %v2183 = vld [vmem:[%s2180 + $0x10] sm:$0xff]
  %v2184 = vld [vmem:[%s2180 + $0x18] sm:$0xff]
  %v2185 = vld [vmem:[%s2180 + $0x20] sm:$0xff]
  %v2186 = vld [vmem:[%s2180 + $0x28] sm:$0xff]
  %v2187 = vld [vmem:[%s2180 + $0x30] sm:$0xff]
  %v2188 = vld [vmem:[%s2180 + $0x38] sm:$0xff]
  %v2189 = vld [vmem:[%s2180 + $0x40] sm:$0xff]
  %v2190 = vld [vmem:[%s2180 + $0x48] sm:$0xff]
  %v2191 = vld [vmem:[%s2180 + $0x50] sm:$0xff]
  %v2192 = vld [vmem:[%s2180 + $0x58] sm:$0xff]
  %v2193 = vld [vmem:[%s2180 + $0x60] sm:$0xff]
  %v2194 = vld [vmem:[%s2180 + $0x68] sm:$0xff]
  %v2195 = vld [vmem:[%s2180 + $0x70] sm:$0xff]
  %2196 = vmatpush.msra.mxu0 0.0
  %2197 = vmatpush.msra.mxu0 %v2195
  %2198 = vmatpush.msra.mxu0 %v2194
  %2199 = vmatpush.msra.mxu0 %v2193
  %2200 = vmatpush.msra.mxu0 %v2192
  %2201 = vmatpush.msra.mxu0 %v2191
  %2202 = vmatpush.msra.mxu0 %v2190
  %2203 = vmatpush.msra.mxu0 %v2189
  %2204 = vmatpush.msra.mxu0 %v2188
  %2205 = vmatpush.msra.mxu0 %v2187
  %2206 = vmatpush.msra.mxu0 %v2186
  %2207 = vmatpush.msra.mxu0 %v2185
  %2208 = vmatpush.msra.mxu0 %v2184
  %2209 = vmatpush.msra.mxu0 %v2183
  %2210 = vmatpush.msra.mxu0 %v2182
  %2211 = vmatpush.msra.mxu0 %v2181
  %2212 = vmatmul.f32.gmra.mxu0 %v2108
  %v2213 = vpop.f32.mrf.mxu0
  %v2214 = vadd.f32 0.0, %v2213
  %2215 = vmatmul.f32.gmra.mxu0 %v2111
  %v2216 = vpop.f32.mrf.mxu0
  %v2217 = vadd.f32 0.0, %v2216
  %2218 = vmatmul.f32.gmra.mxu0 %v2114
  %v2219 = vpop.f32.mrf.mxu0
  %v2220 = vadd.f32 0.0, %v2219
  %2221 = vmatmul.f32.gmra.mxu0 %v2117
  %v2222 = vpop.f32.mrf.mxu0
  %v2223 = vadd.f32 0.0, %v2222
  %2224 = vmatmul.f32.gmra.mxu0 %v2120
  %v2225 = vpop.f32.mrf.mxu0
  %v2226 = vadd.f32 0.0, %v2225
  %2227 = vmatmul.f32.gmra.mxu0 %v2123
  %v2228 = vpop.f32.mrf.mxu0
  %v2229 = vadd.f32 0.0, %v2228
  %2230 = vmatmul.f32.gmra.mxu0 %v2126
  %v2231 = vpop.f32.mrf.mxu0
  %v2232 = vadd.f32 0.0, %v2231
  %2233 = vmatmul.f32.gmra.mxu0 %v2129
  %v2234 = vpop.f32.mrf.mxu0
  %v2235 = vadd.f32 0.0, %v2234
  %2236 = vdwg.mxu0
  %v2237 = vadd.f32 %v2060, %v2214
  %v2238 = vadd.f32 %v2063, %v2217
  %v2239 = vadd.f32 %v2066, %v2220
  %v2240 = vadd.f32 %v2069, %v2223
  %v2241 = vadd.f32 %v2072, %v2226
  %v2242 = vadd.f32 %v2075, %v2229
  %v2243 = vadd.f32 %v2078, %v2232
  %v2244 = vadd.f32 %v2081, %v2235
  %v2245 = vld [vmem:[#allocation3 + $0x3] sm:$0xff]
  %v2246 = vld [vmem:[#allocation3 + $0x13] sm:$0xff]
  %v2247 = vld [vmem:[#allocation3 + $0x23] sm:$0xff]
  %v2248 = vld [vmem:[#allocation3 + $0x33] sm:$0xff]
  %v2249 = vld [vmem:[#allocation3 + $0x43] sm:$0xff]
  %v2250 = vld [vmem:[#allocation3 + $0x53] sm:$0xff]
  %v2251 = vld [vmem:[#allocation3 + $0x63] sm:$0xff]
  %v2252 = vld [vmem:[#allocation3 + $0x73] sm:$0xff]
  %s2253 = scalar_lea.vmem %s4, 360
  %v2254 = vld [vmem:[%s2253] sm:$0xff]
  %v2255 = vld [vmem:[%s2253 + $0x8] sm:$0xff]
  %v2256 = vld [vmem:[%s2253 + $0x10] sm:$0xff]
  %v2257 = vld [vmem:[%s2253 + $0x18] sm:$0xff]
  %v2258 = vld [vmem:[%s2253 + $0x20] sm:$0xff]
  %v2259 = vld [vmem:[%s2253 + $0x28] sm:$0xff]
  %v2260 = vld [vmem:[%s2253 + $0x30] sm:$0xff]
  %v2261 = vld [vmem:[%s2253 + $0x38] sm:$0xff]
  %v2262 = vld [vmem:[%s2253 + $0x40] sm:$0xff]
  %v2263 = vld [vmem:[%s2253 + $0x48] sm:$0xff]
  %v2264 = vld [vmem:[%s2253 + $0x50] sm:$0xff]
  %v2265 = vld [vmem:[%s2253 + $0x58] sm:$0xff]
  %v2266 = vld [vmem:[%s2253 + $0x60] sm:$0xff]
  %v2267 = vld [vmem:[%s2253 + $0x68] sm:$0xff]
  %v2268 = vld [vmem:[%s2253 + $0x70] sm:$0xff]
  %v2270 = vsel %vm1656, %v2245, 0
  %v2273 = vsel %vm1656, %v2246, 0
  %v2276 = vsel %vm1656, %v2247, 0
  %v2279 = vsel %vm1656, %v2248, 0
  %v2282 = vsel %vm1656, %v2249, 0
  %v2285 = vsel %vm1656, %v2250, 0
  %v2288 = vsel %vm1656, %v2251, 0
  %v2291 = vsel %vm1656, %v2252, 0
  %2293 = vmatpush.msra.mxu0 0.0
  %2294 = vmatpush.msra.mxu0 %v2268
  %2295 = vmatpush.msra.mxu0 %v2267
  %2296 = vmatpush.msra.mxu0 %v2266
  %2297 = vmatpush.msra.mxu0 %v2265
  %2298 = vmatpush.msra.mxu0 %v2264
  %2299 = vmatpush.msra.mxu0 %v2263
  %2300 = vmatpush.msra.mxu0 %v2262
  %2301 = vmatpush.msra.mxu0 %v2261
  %2302 = vmatpush.msra.mxu0 %v2260
  %2303 = vmatpush.msra.mxu0 %v2259
  %2304 = vmatpush.msra.mxu0 %v2258
  %2305 = vmatpush.msra.mxu0 %v2257
  %2306 = vmatpush.msra.mxu0 %v2256
  %2307 = vmatpush.msra.mxu0 %v2255
  %2308 = vmatpush.msra.mxu0 %v2254
  %2309 = vmatmul.f32.gmra.mxu0 %v2270
  %v2310 = vpop.f32.mrf.mxu0
  %v2311 = vadd.f32 0.0, %v2310
  %2312 = vmatmul.f32.gmra.mxu0 %v2273
  %v2313 = vpop.f32.mrf.mxu0
  %v2314 = vadd.f32 0.0, %v2313
  %2315 = vmatmul.f32.gmra.mxu0 %v2276
  %v2316 = vpop.f32.mrf.mxu0
  %v2317 = vadd.f32 0.0, %v2316
  %2318 = vmatmul.f32.gmra.mxu0 %v2279
  %v2319 = vpop.f32.mrf.mxu0
  %v2320 = vadd.f32 0.0, %v2319
  %2321 = vmatmul.f32.gmra.mxu0 %v2282
  %v2322 = vpop.f32.mrf.mxu0
  %v2323 = vadd.f32 0.0, %v2322
  %2324 = vmatmul.f32.gmra.mxu0 %v2285
  %v2325 = vpop.f32.mrf.mxu0
  %v2326 = vadd.f32 0.0, %v2325
  %2327 = vmatmul.f32.gmra.mxu0 %v2288
  %v2328 = vpop.f32.mrf.mxu0
  %v2329 = vadd.f32 0.0, %v2328
  %2330 = vmatmul.f32.gmra.mxu0 %v2291
  %v2331 = vpop.f32.mrf.mxu0
  %v2332 = vadd.f32 0.0, %v2331
  %2333 = vdwg.mxu0
  %v2334 = vadd.f32 %v2172, %v2311
  %v2335 = vadd.f32 %v2173, %v2314
  %v2336 = vadd.f32 %v2174, %v2317
  %v2337 = vadd.f32 %v2175, %v2320
  %v2338 = vadd.f32 %v2176, %v2323
  %v2339 = vadd.f32 %v2177, %v2326
  %v2340 = vadd.f32 %v2178, %v2329
  %v2341 = vadd.f32 %v2179, %v2332
  %s2342 = scalar_lea.vmem %s5, 360
  %v2343 = vld [vmem:[%s2342] sm:$0xff]
  %v2344 = vld [vmem:[%s2342 + $0x8] sm:$0xff]
  %v2345 = vld [vmem:[%s2342 + $0x10] sm:$0xff]
  %v2346 = vld [vmem:[%s2342 + $0x18] sm:$0xff]
  %v2347 = vld [vmem:[%s2342 + $0x20] sm:$0xff]
  %v2348 = vld [vmem:[%s2342 + $0x28] sm:$0xff]
  %v2349 = vld [vmem:[%s2342 + $0x30] sm:$0xff]
  %v2350 = vld [vmem:[%s2342 + $0x38] sm:$0xff]
  %v2351 = vld [vmem:[%s2342 + $0x40] sm:$0xff]
  %v2352 = vld [vmem:[%s2342 + $0x48] sm:$0xff]
  %v2353 = vld [vmem:[%s2342 + $0x50] sm:$0xff]
  %v2354 = vld [vmem:[%s2342 + $0x58] sm:$0xff]
  %v2355 = vld [vmem:[%s2342 + $0x60] sm:$0xff]
  %v2356 = vld [vmem:[%s2342 + $0x68] sm:$0xff]
  %v2357 = vld [vmem:[%s2342 + $0x70] sm:$0xff]
  %2358 = vmatpush.msra.mxu0 0.0
  %2359 = vmatpush.msra.mxu0 %v2357
  %2360 = vmatpush.msra.mxu0 %v2356
  %2361 = vmatpush.msra.mxu0 %v2355
  %2362 = vmatpush.msra.mxu0 %v2354
  %2363 = vmatpush.msra.mxu0 %v2353
  %2364 = vmatpush.msra.mxu0 %v2352
  %2365 = vmatpush.msra.mxu0 %v2351
  %2366 = vmatpush.msra.mxu0 %v2350
  %2367 = vmatpush.msra.mxu0 %v2349
  %2368 = vmatpush.msra.mxu0 %v2348
  %2369 = vmatpush.msra.mxu0 %v2347
  %2370 = vmatpush.msra.mxu0 %v2346
  %2371 = vmatpush.msra.mxu0 %v2345
  %2372 = vmatpush.msra.mxu0 %v2344
  %2373 = vmatpush.msra.mxu0 %v2343
  %2374 = vmatmul.f32.gmra.mxu0 %v2270
  %v2375 = vpop.f32.mrf.mxu0
  %v2376 = vadd.f32 0.0, %v2375
  %2377 = vmatmul.f32.gmra.mxu0 %v2273
  %v2378 = vpop.f32.mrf.mxu0
  %v2379 = vadd.f32 0.0, %v2378
  %2380 = vmatmul.f32.gmra.mxu0 %v2276
  %v2381 = vpop.f32.mrf.mxu0
  %v2382 = vadd.f32 0.0, %v2381
  %2383 = vmatmul.f32.gmra.mxu0 %v2279
  %v2384 = vpop.f32.mrf.mxu0
  %v2385 = vadd.f32 0.0, %v2384
  %2386 = vmatmul.f32.gmra.mxu0 %v2282
  %v2387 = vpop.f32.mrf.mxu0
  %v2388 = vadd.f32 0.0, %v2387
  %2389 = vmatmul.f32.gmra.mxu0 %v2285
  %v2390 = vpop.f32.mrf.mxu0
  %v2391 = vadd.f32 0.0, %v2390
  %2392 = vmatmul.f32.gmra.mxu0 %v2288
  %v2393 = vpop.f32.mrf.mxu0
  %v2394 = vadd.f32 0.0, %v2393
  %2395 = vmatmul.f32.gmra.mxu0 %v2291
  %v2396 = vpop.f32.mrf.mxu0
  %v2397 = vadd.f32 0.0, %v2396
  %2398 = vdwg.mxu0
  %v2399 = vadd.f32 %v2237, %v2376
  %v2400 = vadd.f32 %v2238, %v2379
  %v2401 = vadd.f32 %v2239, %v2382
  %v2402 = vadd.f32 %v2240, %v2385
  %v2403 = vadd.f32 %v2241, %v2388
  %v2404 = vadd.f32 %v2242, %v2391
  %v2405 = vadd.f32 %v2243, %v2394
  %v2406 = vadd.f32 %v2244, %v2397
  %v2407 = vld [vmem:[#allocation3 + $0x4] sm:$0xff]
  %v2408 = vld [vmem:[#allocation3 + $0x14] sm:$0xff]
  %v2409 = vld [vmem:[#allocation3 + $0x24] sm:$0xff]
  %v2410 = vld [vmem:[#allocation3 + $0x34] sm:$0xff]
  %v2411 = vld [vmem:[#allocation3 + $0x44] sm:$0xff]
  %v2412 = vld [vmem:[#allocation3 + $0x54] sm:$0xff]
  %v2413 = vld [vmem:[#allocation3 + $0x64] sm:$0xff]
  %v2414 = vld [vmem:[#allocation3 + $0x74] sm:$0xff]
  %s2415 = scalar_lea.vmem %s4, 480
  %v2416 = vld [vmem:[%s2415] sm:$0xff]
  %v2417 = vld [vmem:[%s2415 + $0x8] sm:$0xff]
  %v2418 = vld [vmem:[%s2415 + $0x10] sm:$0xff]
  %v2419 = vld [vmem:[%s2415 + $0x18] sm:$0xff]
  %v2420 = vld [vmem:[%s2415 + $0x20] sm:$0xff]
  %v2421 = vld [vmem:[%s2415 + $0x28] sm:$0xff]
  %v2422 = vld [vmem:[%s2415 + $0x30] sm:$0xff]
  %v2423 = vld [vmem:[%s2415 + $0x38] sm:$0xff]
  %v2424 = vld [vmem:[%s2415 + $0x40] sm:$0xff]
  %v2425 = vld [vmem:[%s2415 + $0x48] sm:$0xff]
  %v2426 = vld [vmem:[%s2415 + $0x50] sm:$0xff]
  %v2427 = vld [vmem:[%s2415 + $0x58] sm:$0xff]
  %v2428 = vld [vmem:[%s2415 + $0x60] sm:$0xff]
  %v2429 = vld [vmem:[%s2415 + $0x68] sm:$0xff]
  %v2430 = vld [vmem:[%s2415 + $0x70] sm:$0xff]
  %v2432 = vsel %vm1656, %v2407, 0
  %v2435 = vsel %vm1656, %v2408, 0
  %v2438 = vsel %vm1656, %v2409, 0
  %v2441 = vsel %vm1656, %v2410, 0
  %v2444 = vsel %vm1656, %v2411, 0
  %v2447 = vsel %vm1656, %v2412, 0
  %v2450 = vsel %vm1656, %v2413, 0
  %v2453 = vsel %vm1656, %v2414, 0
  %2455 = vmatpush.msra.mxu0 0.0
  %2456 = vmatpush.msra.mxu0 %v2430
  %2457 = vmatpush.msra.mxu0 %v2429
  %2458 = vmatpush.msra.mxu0 %v2428
  %2459 = vmatpush.msra.mxu0 %v2427
  %2460 = vmatpush.msra.mxu0 %v2426
  %2461 = vmatpush.msra.mxu0 %v2425
  %2462 = vmatpush.msra.mxu0 %v2424
  %2463 = vmatpush.msra.mxu0 %v2423
  %2464 = vmatpush.msra.mxu0 %v2422
  %2465 = vmatpush.msra.mxu0 %v2421
  %2466 = vmatpush.msra.mxu0 %v2420
  %2467 = vmatpush.msra.mxu0 %v2419
  %2468 = vmatpush.msra.mxu0 %v2418
  %2469 = vmatpush.msra.mxu0 %v2417
  %2470 = vmatpush.msra.mxu0 %v2416
  %2471 = vmatmul.f32.gmra.mxu0 %v2432
  %v2472 = vpop.f32.mrf.mxu0
  %v2473 = vadd.f32 0.0, %v2472
  %2474 = vmatmul.f32.gmra.mxu0 %v2435
  %v2475 = vpop.f32.mrf.mxu0
  %v2476 = vadd.f32 0.0, %v2475
  %2477 = vmatmul.f32.gmra.mxu0 %v2438
  %v2478 = vpop.f32.mrf.mxu0
  %v2479 = vadd.f32 0.0, %v2478
  %2480 = vmatmul.f32.gmra.mxu0 %v2441
  %v2481 = vpop.f32.mrf.mxu0
  %v2482 = vadd.f32 0.0, %v2481
  %2483 = vmatmul.f32.gmra.mxu0 %v2444
  %v2484 = vpop.f32.mrf.mxu0
  %v2485 = vadd.f32 0.0, %v2484
  %2486 = vmatmul.f32.gmra.mxu0 %v2447
  %v2487 = vpop.f32.mrf.mxu0
  %v2488 = vadd.f32 0.0, %v2487
  %2489 = vmatmul.f32.gmra.mxu0 %v2450
  %v2490 = vpop.f32.mrf.mxu0
  %v2491 = vadd.f32 0.0, %v2490
  %2492 = vmatmul.f32.gmra.mxu0 %v2453
  %v2493 = vpop.f32.mrf.mxu0
  %v2494 = vadd.f32 0.0, %v2493
  %2495 = vdwg.mxu0
  %v2496 = vadd.f32 %v2334, %v2473
  %v2497 = vadd.f32 %v2335, %v2476
  %v2498 = vadd.f32 %v2336, %v2479
  %v2499 = vadd.f32 %v2337, %v2482
  %v2500 = vadd.f32 %v2338, %v2485
  %v2501 = vadd.f32 %v2339, %v2488
  %v2502 = vadd.f32 %v2340, %v2491
  %v2503 = vadd.f32 %v2341, %v2494
  %s2504 = scalar_lea.vmem %s5, 480
  %v2505 = vld [vmem:[%s2504] sm:$0xff]
  %v2506 = vld [vmem:[%s2504 + $0x8] sm:$0xff]
  %v2507 = vld [vmem:[%s2504 + $0x10] sm:$0xff]
  %v2508 = vld [vmem:[%s2504 + $0x18] sm:$0xff]
  %v2509 = vld [vmem:[%s2504 + $0x20] sm:$0xff]
  %v2510 = vld [vmem:[%s2504 + $0x28] sm:$0xff]
  %v2511 = vld [vmem:[%s2504 + $0x30] sm:$0xff]
  %v2512 = vld [vmem:[%s2504 + $0x38] sm:$0xff]
  %v2513 = vld [vmem:[%s2504 + $0x40] sm:$0xff]
  %v2514 = vld [vmem:[%s2504 + $0x48] sm:$0xff]
  %v2515 = vld [vmem:[%s2504 + $0x50] sm:$0xff]
  %v2516 = vld [vmem:[%s2504 + $0x58] sm:$0xff]
  %v2517 = vld [vmem:[%s2504 + $0x60] sm:$0xff]
  %v2518 = vld [vmem:[%s2504 + $0x68] sm:$0xff]
  %v2519 = vld [vmem:[%s2504 + $0x70] sm:$0xff]
  %2520 = vmatpush.msra.mxu0 0.0
  %2521 = vmatpush.msra.mxu0 %v2519
  %2522 = vmatpush.msra.mxu0 %v2518
  %2523 = vmatpush.msra.mxu0 %v2517
  %2524 = vmatpush.msra.mxu0 %v2516
  %2525 = vmatpush.msra.mxu0 %v2515
  %2526 = vmatpush.msra.mxu0 %v2514
  %2527 = vmatpush.msra.mxu0 %v2513
  %2528 = vmatpush.msra.mxu0 %v2512
  %2529 = vmatpush.msra.mxu0 %v2511
  %2530 = vmatpush.msra.mxu0 %v2510
  %2531 = vmatpush.msra.mxu0 %v2509
  %2532 = vmatpush.msra.mxu0 %v2508
  %2533 = vmatpush.msra.mxu0 %v2507
  %2534 = vmatpush.msra.mxu0 %v2506
  %2535 = vmatpush.msra.mxu0 %v2505
  %2536 = vmatmul.f32.gmra.mxu0 %v2432
  %v2537 = vpop.f32.mrf.mxu0
  %v2538 = vadd.f32 0.0, %v2537
  %2539 = vmatmul.f32.gmra.mxu0 %v2435
  %v2540 = vpop.f32.mrf.mxu0
  %v2541 = vadd.f32 0.0, %v2540
  %2542 = vmatmul.f32.gmra.mxu0 %v2438
  %v2543 = vpop.f32.mrf.mxu0
  %v2544 = vadd.f32 0.0, %v2543
  %2545 = vmatmul.f32.gmra.mxu0 %v2441
  %v2546 = vpop.f32.mrf.mxu0
  %v2547 = vadd.f32 0.0, %v2546
  %2548 = vmatmul.f32.gmra.mxu0 %v2444
  %v2549 = vpop.f32.mrf.mxu0
  %v2550 = vadd.f32 0.0, %v2549
  %2551 = vmatmul.f32.gmra.mxu0 %v2447
  %v2552 = vpop.f32.mrf.mxu0
  %v2553 = vadd.f32 0.0, %v2552
  %2554 = vmatmul.f32.gmra.mxu0 %v2450
  %v2555 = vpop.f32.mrf.mxu0
  %v2556 = vadd.f32 0.0, %v2555
  %2557 = vmatmul.f32.gmra.mxu0 %v2453
  %v2558 = vpop.f32.mrf.mxu0
  %v2559 = vadd.f32 0.0, %v2558
  %2560 = vdwg.mxu0
  %v2561 = vadd.f32 %v2399, %v2538
  %v2562 = vadd.f32 %v2400, %v2541
  %v2563 = vadd.f32 %v2401, %v2544
  %v2564 = vadd.f32 %v2402, %v2547
  %v2565 = vadd.f32 %v2403, %v2550
  %v2566 = vadd.f32 %v2404, %v2553
  %v2567 = vadd.f32 %v2405, %v2556
  %v2568 = vadd.f32 %v2406, %v2559
  %v2569 = vmax.f32 %v2496, %v2561
  %v2570 = vmax.f32 %v2497, %v2562
  %v2571 = vmax.f32 %v2498, %v2563
  %v2572 = vmax.f32 %v2499, %v2564
  %v2573 = vmax.f32 %v2500, %v2565
  %v2574 = vmax.f32 %v2501, %v2566
  %v2575 = vmax.f32 %v2502, %v2567
  %v2576 = vmax.f32 %v2503, %v2568
  %vm2577 = vcmask 654336
  %2578 = vst.msk [vmem:[#allocation4] sm:$0xff] %vm2577, %v2569
  %2579 = vst.msk [vmem:[#allocation4 + $0x8] sm:$0xff] %vm2577, %v2570
  %2580 = vst.msk [vmem:[#allocation4 + $0x10] sm:$0xff] %vm2577, %v2571
  %2581 = vst.msk [vmem:[#allocation4 + $0x18] sm:$0xff] %vm2577, %v2572
  %2582 = vst.msk [vmem:[#allocation4 + $0x20] sm:$0xff] %vm2577, %v2573
  %2583 = vst.msk [vmem:[#allocation4 + $0x28] sm:$0xff] %vm2577, %v2574
  %2584 = vst.msk [vmem:[#allocation4 + $0x30] sm:$0xff] %vm2577, %v2575
  %2585 = vst.msk [vmem:[#allocation4 + $0x38] sm:$0xff] %vm2577, %v2576
  %v2586 = vld [vmem:[#allocation4] ss:$2 sm:$0xff]
  %s2587 = scalar_lea.vmem [#allocation4], 16
  %v2588 = vld [vmem:[%s2587] ss:$2 sm:$0xff]
  %s2589 = scalar_lea.vmem [#allocation4], 32
  %v2590 = vld [vmem:[%s2589] ss:$2 sm:$0xff]
  %s2591 = scalar_lea.vmem [#allocation4], 48
  %v2592 = vld [vmem:[%s2591] ss:$2 sm:$0xff]
  %s2593 = scalar_lea.vmem [#allocation4], 1
  %v2594 = vld [vmem:[%s2593] ss:$2 sm:$0xff]
  %s2595 = scalar_lea.vmem [#allocation4], 17
  %v2596 = vld [vmem:[%s2595] ss:$2 sm:$0xff]
  %s2597 = scalar_lea.vmem [#allocation4], 33
  %v2598 = vld [vmem:[%s2597] ss:$2 sm:$0xff]
  %s2599 = scalar_lea.vmem [#allocation4], 49
  %v2600 = vld [vmem:[%s2599] ss:$2 sm:$0xff]
  %v2601 = vmax.f32 %v2586, %v2594
  %v2602 = vmax.f32 %v2588, %v2596
  %v2603 = vmax.f32 %v2590, %v2598
  %v2604 = vmax.f32 %v2592, %v2600
  %v2605 = vld [vmem:[%s6] sm:$0x1]
  %v2607 = vperm.slane %v2605, 0
  %v2609 = vadd.f32 %v2601, %v2607
  %v2610 = vadd.f32 %v2602, %v2607
  %v2611 = vadd.f32 %v2603, %v2607
  %v2612 = vadd.f32 %v2604, %v2607
  %v2613 = vmax.f32 %v2609, 0.0
  %v2614 = vmax.f32 %v2610, 0.0
  %v2615 = vmax.f32 %v2611, 0.0
  %v2616 = vmax.f32 %v2612, 0.0
  %2617 = vst.msk [vmem:[#allocation5] sm:$0xff] %vm2577, %v2613
  %2618 = vst.msk [vmem:[#allocation5 + $0x8] sm:$0xff] %vm2577, %v2614
  %2619 = vst.msk [vmem:[#allocation5 + $0x10] sm:$0xff] %vm2577, %v2615
  %2620 = vst.msk [vmem:[#allocation5 + $0x18] sm:$0xff] %vm2577, %v2616
  %v2621 = vld [vmem:[%s8] sm:$0x1]
  %v2623 = vperm.slane %v2621, 0
  %v2625 = vadd.f32 %v2623, 0.0
  %v2626 = vld [vmem:[#allocation5] ss:$4 sm:$0xff]
  %v2627 = vld [vmem:[%s7] sm:$0xff]
  %v2628 = vld [vmem:[%s7 + $0x8] sm:$0xff]
  %v2629 = vld [vmem:[%s7 + $0x10] sm:$0xff]
  %v2630 = vld [vmem:[%s7 + $0x18] sm:$0xff]
  %v2631 = vld [vmem:[%s7 + $0x20] sm:$0xff]
  %v2632 = vld [vmem:[%s7 + $0x28] sm:$0xff]
  %v2633 = vld [vmem:[%s7 + $0x30] sm:$0xff]
  %v2634 = vld [vmem:[%s7 + $0x38] sm:$0xff]
  %v2635 = vld [vmem:[%s7 + $0x40] sm:$0xff]
  %v2636 = vld [vmem:[%s7 + $0x48] sm:$0xff]
  %v2638 = vsel %vm2577, %v2626, 0
  %2640 = vmatpush.msra.mxu0 0.0
  %2641 = vmatpush.msra.mxu0 0.0
  %2642 = vmatpush.msra.mxu0 0.0
  %2643 = vmatpush.msra.mxu0 0.0
  %2644 = vmatpush.msra.mxu0 0.0
  %2645 = vmatpush.msra.mxu0 0.0
  %2646 = vmatpush.msra.mxu0 %v2636
  %2647 = vmatpush.msra.mxu0 %v2635
  %2648 = vmatpush.msra.mxu0 %v2634
  %2649 = vmatpush.msra.mxu0 %v2633
  %2650 = vmatpush.msra.mxu0 %v2632
  %2651 = vmatpush.msra.mxu0 %v2631
  %2652 = vmatpush.msra.mxu0 %v2630
  %2653 = vmatpush.msra.mxu0 %v2629
  %2654 = vmatpush.msra.mxu0 %v2628
  %2655 = vmatpush.msra.mxu0 %v2627
  %2656 = vmatmul.f32.gmra.mxu0 %v2638
  %v2657 = vpop.f32.mrf.mxu0
  %v2658 = vadd.f32 0.0, %v2657
  %2659 = vdwg.mxu0
  %v2660 = vadd.f32 %v2625, %v2658
  %s2661 = scalar_lea.vmem [#allocation5], 1
  %v2662 = vld [vmem:[%s2661] ss:$4 sm:$0xff]
  %s2663 = scalar_lea.vmem %s7, 80
  %v2664 = vld [vmem:[%s2663] sm:$0xff]
  %v2665 = vld [vmem:[%s2663 + $0x8] sm:$0xff]
  %v2666 = vld [vmem:[%s2663 + $0x10] sm:$0xff]
  %v2667 = vld [vmem:[%s2663 + $0x18] sm:$0xff]
  %v2668 = vld [vmem:[%s2663 + $0x20] sm:$0xff]
  %v2669 = vld [vmem:[%s2663 + $0x28] sm:$0xff]
  %v2670 = vld [vmem:[%s2663 + $0x30] sm:$0xff]
  %v2671 = vld [vmem:[%s2663 + $0x38] sm:$0xff]
  %v2672 = vld [vmem:[%s2663 + $0x40] sm:$0xff]
  %v2673 = vld [vmem:[%s2663 + $0x48] sm:$0xff]
  %v2675 = vsel %vm2577, %v2662, 0
  %2677 = vmatpush.msra.mxu0 0.0
  %2678 = vmatpush.msra.mxu0 0.0
  %2679 = vmatpush.msra.mxu0 0.0
  %2680 = vmatpush.msra.mxu0 0.0
  %2681 = vmatpush.msra.mxu0 0.0
  %2682 = vmatpush.msra.mxu0 0.0
  %2683 = vmatpush.msra.mxu0 %v2673
  %2684 = vmatpush.msra.mxu0 %v2672
  %2685 = vmatpush.msra.mxu0 %v2671
  %2686 = vmatpush.msra.mxu0 %v2670
  %2687 = vmatpush.msra.mxu0 %v2669
  %2688 = vmatpush.msra.mxu0 %v2668
  %2689 = vmatpush.msra.mxu0 %v2667
  %2690 = vmatpush.msra.mxu0 %v2666
  %2691 = vmatpush.msra.mxu0 %v2665
  %2692 = vmatpush.msra.mxu0 %v2664
  %2693 = vmatmul.f32.gmra.mxu0 %v2675
  %v2694 = vpop.f32.mrf.mxu0
  %v2695 = vadd.f32 0.0, %v2694
  %2696 = vdwg.mxu0
  %v2697 = vadd.f32 %v2660, %v2695
  %s2698 = scalar_lea.vmem [#allocation5], 2
  %v2699 = vld [vmem:[%s2698] ss:$4 sm:$0xff]
  %s2700 = scalar_lea.vmem %s7, 160
  %v2701 = vld [vmem:[%s2700] sm:$0xff]
  %v2702 = vld [vmem:[%s2700 + $0x8] sm:$0xff]
  %v2703 = vld [vmem:[%s2700 + $0x10] sm:$0xff]
  %v2704 = vld [vmem:[%s2700 + $0x18] sm:$0xff]
  %v2705 = vld [vmem:[%s2700 + $0x20] sm:$0xff]
  %v2706 = vld [vmem:[%s2700 + $0x28] sm:$0xff]
  %v2707 = vld [vmem:[%s2700 + $0x30] sm:$0xff]
  %v2708 = vld [vmem:[%s2700 + $0x38] sm:$0xff]
  %v2709 = vld [vmem:[%s2700 + $0x40] sm:$0xff]
  %v2710 = vld [vmem:[%s2700 + $0x48] sm:$0xff]
  %v2712 = vsel %vm2577, %v2699, 0
  %2714 = vmatpush.msra.mxu0 0.0
  %2715 = vmatpush.msra.mxu0 0.0
  %2716 = vmatpush.msra.mxu0 0.0
  %2717 = vmatpush.msra.mxu0 0.0
  %2718 = vmatpush.msra.mxu0 0.0
  %2719 = vmatpush.msra.mxu0 0.0
  %2720 = vmatpush.msra.mxu0 %v2710
  %2721 = vmatpush.msra.mxu0 %v2709
  %2722 = vmatpush.msra.mxu0 %v2708
  %2723 = vmatpush.msra.mxu0 %v2707
  %2724 = vmatpush.msra.mxu0 %v2706
  %2725 = vmatpush.msra.mxu0 %v2705
  %2726 = vmatpush.msra.mxu0 %v2704
  %2727 = vmatpush.msra.mxu0 %v2703
  %2728 = vmatpush.msra.mxu0 %v2702
  %2729 = vmatpush.msra.mxu0 %v2701
  %2730 = vmatmul.f32.gmra.mxu0 %v2712
  %v2731 = vpop.f32.mrf.mxu0
  %v2732 = vadd.f32 0.0, %v2731
  %2733 = vdwg.mxu0
  %v2734 = vadd.f32 %v2697, %v2732
  %s2735 = scalar_lea.vmem [#allocation5], 3
  %v2736 = vld [vmem:[%s2735] ss:$4 sm:$0xff]
  %s2737 = scalar_lea.vmem %s7, 240
  %v2738 = vld [vmem:[%s2737] sm:$0xff]
  %v2739 = vld [vmem:[%s2737 + $0x8] sm:$0xff]
  %v2740 = vld [vmem:[%s2737 + $0x10] sm:$0xff]
  %v2741 = vld [vmem:[%s2737 + $0x18] sm:$0xff]
  %v2742 = vld [vmem:[%s2737 + $0x20] sm:$0xff]
  %v2743 = vld [vmem:[%s2737 + $0x28] sm:$0xff]
  %v2744 = vld [vmem:[%s2737 + $0x30] sm:$0xff]
  %v2745 = vld [vmem:[%s2737 + $0x38] sm:$0xff]
  %v2746 = vld [vmem:[%s2737 + $0x40] sm:$0xff]
  %v2747 = vld [vmem:[%s2737 + $0x48] sm:$0xff]
  %v2749 = vsel %vm2577, %v2736, 0
  %2751 = vmatpush.msra.mxu0 0.0
  %2752 = vmatpush.msra.mxu0 0.0
  %2753 = vmatpush.msra.mxu0 0.0
  %2754 = vmatpush.msra.mxu0 0.0
  %2755 = vmatpush.msra.mxu0 0.0
  %2756 = vmatpush.msra.mxu0 0.0
  %2757 = vmatpush.msra.mxu0 %v2747
  %2758 = vmatpush.msra.mxu0 %v2746
  %2759 = vmatpush.msra.mxu0 %v2745
  %2760 = vmatpush.msra.mxu0 %v2744
  %2761 = vmatpush.msra.mxu0 %v2743
  %2762 = vmatpush.msra.mxu0 %v2742
  %2763 = vmatpush.msra.mxu0 %v2741
  %2764 = vmatpush.msra.mxu0 %v2740
  %2765 = vmatpush.msra.mxu0 %v2739
  %2766 = vmatpush.msra.mxu0 %v2738
  %2767 = vmatmul.f32.gmra.mxu0 %v2749
  %v2768 = vpop.f32.mrf.mxu0
  %v2769 = vadd.f32 0.0, %v2768
  %2770 = vdwg.mxu0
  %v2771 = vadd.f32 %v2734, %v2769
  %v2772 = vmax.f32 %v2771, 0.0
  %v2773 = vld [vmem:[%s9] sm:$0xff]
  %v2774 = vld [vmem:[%s9 + $0x8] sm:$0xff]
  %v2775 = vld [vmem:[%s9 + $0x10] sm:$0xff]
  %v2776 = vld [vmem:[%s9 + $0x18] sm:$0xff]
  %v2777 = vld [vmem:[%s9 + $0x20] sm:$0xff]
  %v2778 = vld [vmem:[%s9 + $0x28] sm:$0xff]
  %v2779 = vld [vmem:[%s9 + $0x30] sm:$0x3]
  %v2780 = vld [vmem:[%s10] sm:$0x1]
  %v2782 = vperm.slane %v2780, 0
  %vm2784 = vcmask 408576
  %v2786 = vsel %vm2784, %v2772, 0
  %vm2788 = vcmask 1041408
  %v2790 = vsel %vm2788, %v2779, 0
  %2792 = vmatpush.msra.mxu0 0.0
  %2793 = vmatpush.msra.mxu0 0.0
  %2794 = vmatpush.msra.mxu0 0.0
  %2795 = vmatpush.msra.mxu0 0.0
  %2796 = vmatpush.msra.mxu0 0.0
  %2797 = vmatpush.msra.mxu0 0.0
  %2798 = vmatpush.msra.mxu0 0.0
  %2799 = vmatpush.msra.mxu0 0.0
  %2800 = vmatpush.msra.mxu0 0.0
  %2801 = vmatpush.msra.mxu0 %v2790
  %2802 = vmatpush.msra.mxu0 %v2778
  %2803 = vmatpush.msra.mxu0 %v2777
  %2804 = vmatpush.msra.mxu0 %v2776
  %2805 = vmatpush.msra.mxu0 %v2775
  %2806 = vmatpush.msra.mxu0 %v2774
  %2807 = vmatpush.msra.mxu0 %v2773
  %2808 = vmatmul.f32.gmra.mxu0 %v2786
  %v2809 = vpop.f32.mrf.mxu0
  %v2810 = vadd.f32 %v2782, %v2809
  %2811 = vdwg.mxu0
  %vm2812 = vcmask 80896
  %2813 = vst.msk [vmem:[%s11] sm:$0xff] %vm2812, %v2810
  // Predicated region
  $region46: #{net_forward.1} parent=0 // pred_check
    _
  $region47: #{net_forward.1} parent=0 // pred_check_branch
    %2815 = sbr.rel (0) target = $region49
  $region48: #{net_forward.1} parent=0 // pred_region
    _
  $region49: #{net_forward.1} parent=0 // pred_fallthru
    _
  // Predicated region
  $region50: #{net_forward.1} parent=0 // pred_check
    _
  $region51: #{net_forward.1} parent=0 // pred_check_branch
    %2817 = sbr.rel (0) target = $region53
  $region52: #{net_forward.1} parent=0 // pred_region
    _
  $region53: #{net_forward.1} parent=0 // pred_fallthru
    _

</llo_original>
